<compile_context>
chip_gen: v6e
topology: v6e:2x2x1
jax: 0.10.0
libtpu: 0.0.40
codegen_flags: <defaults>
</compile_context>

<pallas_src>
import jax
import jax.numpy as jnp
from jax.experimental import pallas as pl
from jax.experimental.pallas import tpu as pltpu


# ----------------------------------------------------------------------------
# Pallas kernel: full 2-layer GRU over the sequence + final linear head.
# ----------------------------------------------------------------------------
def gru_kernel(
    x_ref,        # (S, I)        input sequence
    w_ih0_ref,    # (I, 3*Hp)     layer-0 input weights, gate-padded
    b0_ref,       # (1, 3*Hp)     b_ih0 (+ b_hh0 folded for r,z gates)
    bhh0n_ref,    # (1, Hp)       b_hh0 n-gate part (must stay inside r* term)
    wbig_ref,     # (2*Hp, 7*Hp)  fused: [r1 | z1 | gx_n1 | gh_n1 | gh0_r | gh0_z | gh0_n]
    bbig_ref,     # (1, 7*Hp)     matching fused biases (gh0 blocks zero)
    w_lin_ref,    # (Hp, O)       linear head weights (rows H..Hp-1 zero)
    b_lin_ref,    # (1, O)
    out_ref,      # (1, O)
):
    S = x_ref.shape[0]
    Hp = bhh0n_ref.shape[1]

    # Hoisted layer-0 input projection for the whole sequence (one matmul),
    # with b_ih0 and the r/z parts of b_hh0 already folded into b0.
    gx0_all = (
        jnp.dot(x_ref[...], w_ih0_ref[...], preferred_element_type=jnp.float32)
        + b0_ref[...]
    )  # (S, 3*Hp)

    bhh0n = bhh0n_ref[...]
    wbig = wbig_ref[...]
    bbig = bbig_ref[...]

    # Hidden states as zero-padded (1, Hp) rows; pad lanes stay zero through
    # the recurrence (padded weight/bias columns are zero).
    h0 = jnp.zeros((1, Hp), jnp.float32)
    h1 = jnp.zeros((1, Hp), jnp.float32)
    # gh0 = h0_init @ W_hh0 = 0 (h0 starts at zero).
    gh0 = jnp.zeros((1, 3 * Hp), jnp.float32)

    # Statically unrolled time loop (S is small and static).
    for t in range(S):
        # ---- layer 0: gx hoisted, gh0 carried from previous step's matmul --
        s0 = gx0_all[t:t + 1, :]                                  # (1, 3*Hp)
        r0 = jax.nn.sigmoid(s0[:, 0:Hp] + gh0[:, 0:Hp])
        z0 = jax.nn.sigmoid(s0[:, Hp:2 * Hp] + gh0[:, Hp:2 * Hp])
        n0 = jnp.tanh(s0[:, 2 * Hp:3 * Hp]
                      + r0 * (gh0[:, 2 * Hp:3 * Hp] + bhh0n))
        h0 = (1.0 - z0) * n0 + z0 * h0

        # ---- ONE fused matmul: layer-1 gates (step t) + layer-0 gh (step t+1)
        hcat = jnp.concatenate([h0, h1], axis=1)                  # (1, 2*Hp)
        big = jnp.dot(hcat, wbig, preferred_element_type=jnp.float32) + bbig
        r1 = jax.nn.sigmoid(big[:, 0:Hp])
        z1 = jax.nn.sigmoid(big[:, Hp:2 * Hp])
        n1 = jnp.tanh(big[:, 2 * Hp:3 * Hp] + r1 * big[:, 3 * Hp:4 * Hp])
        h1 = (1.0 - z1) * n1 + z1 * h1
        gh0 = big[:, 4 * Hp:7 * Hp]       # = h0_t @ W_hh0  (bias-free)

    out_ref[...] = (
        jnp.dot(h1, w_lin_ref[...], preferred_element_type=jnp.float32)
        + b_lin_ref[...]
    )


# ----------------------------------------------------------------------------
# Parameter preparation: gate-pad to 128 lanes, fold biases, build fused W.
# ----------------------------------------------------------------------------
def prepare_params(params, hidden_dim, padded_dim):
    H, Hp = hidden_dim, padded_dim

    def pad_gate_cols(w):  # (K, 3H) -> (K, 3*Hp)
        blocks = [jnp.pad(w[:, g * H:(g + 1) * H], ((0, 0), (0, Hp - H)))
                  for g in range(3)]
        return jnp.concatenate(blocks, axis=1)

    def pad_rows(w):       # (H, N) -> (Hp, N)
        return jnp.pad(w, ((0, Hp - H), (0, 0)))

    def pad_vec(b):        # (1, H) -> (1, Hp)
        return jnp.pad(b, ((0, 0), (0, Hp - H)))

    # ---- layer 0 -----------------------------------------------------------
    w_ih0 = pad_gate_cols(params["w_ih0"])                 # (I, 3*Hp)
    w_hh0 = pad_rows(pad_gate_cols(params["w_hh0"]))       # (Hp, 3*Hp)
    b_ih0, b_hh0 = params["b_ih0"], params["b_hh0"]
    b0 = jnp.concatenate([
        pad_vec(b_ih0[:, 0:H] + b_hh0[:, 0:H]),            # r: fold b_hh
        pad_vec(b_ih0[:, H:2 * H] + b_hh0[:, H:2 * H]),    # z: fold b_hh
        pad_vec(b_ih0[:, 2 * H:3 * H]),                    # n: b_ih only
    ], axis=1)                                             # (1, 3*Hp)
    bhh0n = pad_vec(b_hh0[:, 2 * H:3 * H])                 # (1, Hp)

    # ---- fused big matmul weights -----------------------------------------
    # rows:   [ h0_t (Hp) ; h1_{t-1} (Hp) ]
    # cols:   [ r1 | z1 | gx_n1 | gh_n1 | gh0_r | gh0_z | gh0_n ]
    w_ih1 = pad_rows(pad_gate_cols(params["w_ih1"]))       # (Hp, 3*Hp)
    w_hh1 = pad_rows(pad_gate_cols(params["w_hh1"]))       # (Hp, 3*Hp)
    zeros1 = jnp.zeros((Hp, Hp), jnp.float32)
    zeros3 = jnp.zeros((Hp, 3 * Hp), jnp.float32)
    top = jnp.concatenate(
        [w_ih1[:, 0:Hp], w_ih1[:, Hp:2 * Hp], w_ih1[:, 2 * Hp:3 * Hp],
         zeros1, w_hh0], axis=1)                           # h0 rows
    bot = jnp.concatenate(
        [w_hh1[:, 0:Hp], w_hh1[:, Hp:2 * Hp], zeros1,
         w_hh1[:, 2 * Hp:3 * Hp], zeros3], axis=1)         # h1_prev rows
    wbig = jnp.concatenate([top, bot], axis=0)             # (2*Hp, 7*Hp)

    b_ih1, b_hh1 = params["b_ih1"], params["b_hh1"]
    bbig = jnp.concatenate([
        pad_vec(b_ih1[:, 0:H] + b_hh1[:, 0:H]),            # r1
        pad_vec(b_ih1[:, H:2 * H] + b_hh1[:, H:2 * H]),    # z1
        pad_vec(b_ih1[:, 2 * H:3 * H]),                    # gx_n1 bias
        pad_vec(b_hh1[:, 2 * H:3 * H]),                    # gh_n1 bias
        jnp.zeros((1, 3 * Hp), jnp.float32),               # gh0 block: no bias
    ], axis=1)                                             # (1, 7*Hp)

    # ---- head --------------------------------------------------------------
    w_lin = pad_rows(params["w_lin"])                      # (Hp, O)

    return dict(w_ih0=w_ih0, b0=b0, bhh0n=bhh0n,
                wbig=wbig, bbig=bbig,
                w_lin=w_lin, b_lin=params["b_lin"])


# ----------------------------------------------------------------------------
# Wrapper
# ----------------------------------------------------------------------------
@jax.jit
def gru_forward(x, params):
    """x: (seq, input_dim) float32.  Returns (output_dim,) float32
    (matches PyTorch `out[-1]` with batch=1 and zero initial hidden)."""
    S, I = x.shape
    H = params["w_hh0"].shape[0]
    O = params["w_lin"].shape[1]
    Hp = ((H + 127) // 128) * 128  # 128-lane-aligned gate blocks

    ops = prepare_params(params, H, Hp)

    args = (
        x,
        ops["w_ih0"], ops["b0"], ops["bhh0n"],
        ops["wbig"], ops["bbig"],
        ops["w_lin"], ops["b_lin"],
    )

    vmem = pl.BlockSpec(memory_space=pltpu.MemorySpace.VMEM)
    out = pl.pallas_call(
        gru_kernel,
        out_shape=jax.ShapeDtypeStruct((1, O), jnp.float32),
        in_specs=[vmem] * len(args),
        out_specs=vmem,
    )(*args)
    return out[0]  # == out[-1] in the PyTorch module (single row)


# ----------------------------------------------------------------------------
# Pure-JAX reference (mirrors torch.nn.GRU semantics) for verification.
# ----------------------------------------------------------------------------
def gru_reference(x, params):
    H = params["w_hh0"].shape[0]

    def cell(x_t, h_prev, w_ih, w_hh, b_ih, b_hh):
        gx = x_t @ w_ih + b_ih
        gh = h_prev @ w_hh + b_hh
        r = jax.nn.sigmoid(gx[:, :H] + gh[:, :H])
        z = jax.nn.sigmoid(gx[:, H:2 * H] + gh[:, H:2 * H])
        n = jnp.tanh(gx[:, 2 * H:] + r * gh[:, 2 * H:])
        return (1.0 - z) * n + z * h_prev

    h0 = jnp.zeros((1, H), jnp.float32)
    h1 = jnp.zeros((1, H), jnp.float32)
    for t in range(x.shape[0]):
        x_t = x[t:t + 1, :]
        h0 = cell(x_t, h0, params["w_ih0"], params["w_hh0"],
                  params["b_ih0"], params["b_hh0"])
        h1 = cell(h0, h1, params["w_ih1"], params["w_hh1"],
                  params["b_ih1"], params["b_hh1"])
    out = h1 @ params["w_lin"] + params["b_lin"]
    return out[0]


# ----------------------------------------------------------------------------
# Deterministic parameter init (PyTorch-style uniform(-1/sqrt(H), 1/sqrt(H))).
# ----------------------------------------------------------------------------
def init_params(key, input_dim, hidden_dim, output_dim):
    H, I, O = hidden_dim, input_dim, output_dim
    bound = 1.0 / jnp.sqrt(jnp.float32(H))
    names_shapes = [
        ("w_ih0", (I, 3 * H)), ("w_hh0", (H, 3 * H)),
        ("b_ih0", (1, 3 * H)), ("b_hh0", (1, 3 * H)),
        ("w_ih1", (H, 3 * H)), ("w_hh1", (H, 3 * H)),
        ("b_ih1", (1, 3 * H)), ("b_hh1", (1, 3 * H)),
        ("w_lin", (H, O)), ("b_lin", (1, O)),
    ]
    params = {}
    for name, shape in names_shapes:
        key, sub = jax.random.split(key)
        params[name] = jax.random.uniform(
            sub, shape, jnp.float32, minval=-bound, maxval=bound)
    return params


if __name__ == "__main__":
    # Module defaults: input_dim=1, hidden_dim=64, output_dim=1, n_layers=2.
    input_dim, hidden_dim, output_dim, seq_len = 1, 64, 1, 8

    key = jax.random.PRNGKey(0)
    key_x, key_p = jax.random.split(key)
    x = jax.random.normal(key_x, (seq_len, input_dim), jnp.float32)
    params = init_params(key_p, input_dim, hidden_dim, output_dim)

    out = gru_forward(x, params)
    jax.block_until_ready(out)

    ref = gru_reference(x, params)
    assert out.shape == (output_dim,)
    assert jnp.allclose(out, ref, atol=1e-4, rtol=1e-4), (out, ref)

    print("KERNEL_OK")
</pallas_src>

<mosaic_0001>
module attributes {stable_mosaic.version = 11 : i64} {
  func.func @gru_kernel(%arg0: memref<8x1xf32, #tpu.memory_space<vmem>>, %arg1: memref<1x384xf32, #tpu.memory_space<vmem>>, %arg2: memref<1x384xf32, #tpu.memory_space<vmem>>, %arg3: memref<1x128xf32, #tpu.memory_space<vmem>>, %arg4: memref<256x896xf32, #tpu.memory_space<vmem>>, %arg5: memref<1x896xf32, #tpu.memory_space<vmem>>, %arg6: memref<128x1xf32, #tpu.memory_space<vmem>>, %arg7: memref<1x1xf32, #tpu.memory_space<vmem>>, %arg8: memref<1x1xf32, #tpu.memory_space<vmem>>) attributes {dimension_semantics = [], scalar_prefetch = 0 : i64, scratch_operands = 0 : i64, tpu.core_type = #tpu.core_type<tc>} {
    %c0 = arith.constant 0 : index
    %c0_0 = arith.constant 0 : index
    %0 = vector.load %arg0[%c0, %c0_0] : memref<8x1xf32, #tpu.memory_space<vmem>>, vector<8x1xf32>
    %c0_1 = arith.constant 0 : index
    %c0_2 = arith.constant 0 : index
    %1 = vector.load %arg1[%c0_1, %c0_2] : memref<1x384xf32, #tpu.memory_space<vmem>>, vector<1x384xf32>
    %cst = arith.constant dense<0.000000e+00> : vector<8x384xf32>
    %2 = tpu.matmul %0, %1, %cst {dimension_numbers = #tpu.dot_dimension_numbers<[1], [0], [0], [1], [0, 0, 1, 1], [], []>} : vector<8x1xf32>, vector<1x384xf32>, vector<8x384xf32> -> vector<8x384xf32>
    %c0_3 = arith.constant 0 : index
    %c0_4 = arith.constant 0 : index
    %3 = vector.load %arg2[%c0_3, %c0_4] : memref<1x384xf32, #tpu.memory_space<vmem>>, vector<1x384xf32>
    %4 = vector.broadcast %3 : vector<1x384xf32> to vector<8x384xf32>
    %5 = arith.addf %2, %4 : vector<8x384xf32>
    %c0_5 = arith.constant 0 : index
    %c0_6 = arith.constant 0 : index
    %6 = vector.load %arg3[%c0_5, %c0_6] : memref<1x128xf32, #tpu.memory_space<vmem>>, vector<1x128xf32>
    %c0_7 = arith.constant 0 : index
    %c0_8 = arith.constant 0 : index
    %7 = vector.load %arg4[%c0_7, %c0_8] : memref<256x896xf32, #tpu.memory_space<vmem>>, vector<256x896xf32>
    %c0_9 = arith.constant 0 : index
    %c0_10 = arith.constant 0 : index
    %8 = vector.load %arg5[%c0_9, %c0_10] : memref<1x896xf32, #tpu.memory_space<vmem>>, vector<1x896xf32>
    %cst_11 = arith.constant 0.000000e+00 : f32
    %9 = vector.broadcast %cst_11 : f32 to vector<1x128xf32>
    %cst_12 = arith.constant 0.000000e+00 : f32
    %10 = vector.broadcast %cst_12 : f32 to vector<1x128xf32>
    %cst_13 = arith.constant 0.000000e+00 : f32
    %11 = vector.broadcast %cst_13 : f32 to vector<1x384xf32>
    %12 = vector.extract_strided_slice %5 {offsets = [0, 0], sizes = [1, 384], strides = [1, 1]} : vector<8x384xf32> to vector<1x384xf32>
    %13 = vector.extract_strided_slice %12 {offsets = [0, 0], sizes = [1, 128], strides = [1, 1]} : vector<1x384xf32> to vector<1x128xf32>
    %14 = vector.extract_strided_slice %11 {offsets = [0, 0], sizes = [1, 128], strides = [1, 1]} : vector<1x384xf32> to vector<1x128xf32>
    %15 = arith.addf %13, %14 : vector<1x128xf32>
    %16 = arith.negf %15 : vector<1x128xf32>
    %17 = math.exp %16 : vector<1x128xf32>
    %cst_14 = arith.constant 1.000000e+00 : f32
    %18 = vector.broadcast %cst_14 : f32 to vector<1x128xf32>
    %19 = arith.addf %18, %17 : vector<1x128xf32>
    %20 = arith.divf %18, %19 : vector<1x128xf32>
    %21 = vector.extract_strided_slice %12 {offsets = [0, 128], sizes = [1, 128], strides = [1, 1]} : vector<1x384xf32> to vector<1x128xf32>
    %22 = vector.extract_strided_slice %11 {offsets = [0, 128], sizes = [1, 128], strides = [1, 1]} : vector<1x384xf32> to vector<1x128xf32>
    %23 = arith.addf %21, %22 : vector<1x128xf32>
    %24 = arith.negf %23 : vector<1x128xf32>
    %25 = math.exp %24 : vector<1x128xf32>
    %cst_15 = arith.constant 1.000000e+00 : f32
    %26 = vector.broadcast %cst_15 : f32 to vector<1x128xf32>
    %27 = arith.addf %26, %25 : vector<1x128xf32>
    %28 = arith.divf %26, %27 : vector<1x128xf32>
    %29 = vector.extract_strided_slice %12 {offsets = [0, 256], sizes = [1, 128], strides = [1, 1]} : vector<1x384xf32> to vector<1x128xf32>
    %30 = vector.extract_strided_slice %11 {offsets = [0, 256], sizes = [1, 128], strides = [1, 1]} : vector<1x384xf32> to vector<1x128xf32>
    %31 = arith.addf %30, %6 : vector<1x128xf32>
    %32 = arith.mulf %20, %31 : vector<1x128xf32>
    %33 = arith.addf %29, %32 : vector<1x128xf32>
    %34 = math.tanh %33 : vector<1x128xf32>
    %cst_16 = arith.constant 1.000000e+00 : f32
    %35 = vector.broadcast %cst_16 : f32 to vector<1x128xf32>
    %36 = arith.subf %35, %28 : vector<1x128xf32>
    %37 = arith.mulf %36, %34 : vector<1x128xf32>
    %38 = arith.mulf %28, %9 : vector<1x128xf32>
    %39 = arith.addf %37, %38 : vector<1x128xf32>
    %40 = tpu.concatenate %39, %10 in 1 : vector<1x128xf32>, vector<1x128xf32> -> vector<1x256xf32>
    %cst_17 = arith.constant dense<0.000000e+00> : vector<1x896xf32>
    %41 = tpu.matmul %40, %7, %cst_17 {dimension_numbers = #tpu.dot_dimension_numbers<[1], [0], [0], [1], [0, 0, 1, 1], [], []>} : vector<1x256xf32>, vector<256x896xf32>, vector<1x896xf32> -> vector<1x896xf32>
    %42 = arith.addf %41, %8 : vector<1x896xf32>
    %43 = vector.extract_strided_slice %42 {offsets = [0, 0], sizes = [1, 128], strides = [1, 1]} : vector<1x896xf32> to vector<1x128xf32>
    %44 = arith.negf %43 : vector<1x128xf32>
    %45 = math.exp %44 : vector<1x128xf32>
    %cst_18 = arith.constant 1.000000e+00 : f32
    %46 = vector.broadcast %cst_18 : f32 to vector<1x128xf32>
    %47 = arith.addf %46, %45 : vector<1x128xf32>
    %48 = arith.divf %46, %47 : vector<1x128xf32>
    %49 = vector.extract_strided_slice %42 {offsets = [0, 128], sizes = [1, 128], strides = [1, 1]} : vector<1x896xf32> to vector<1x128xf32>
    %50 = arith.negf %49 : vector<1x128xf32>
    %51 = math.exp %50 : vector<1x128xf32>
    %cst_19 = arith.constant 1.000000e+00 : f32
    %52 = vector.broadcast %cst_19 : f32 to vector<1x128xf32>
    %53 = arith.addf %52, %51 : vector<1x128xf32>
    %54 = arith.divf %52, %53 : vector<1x128xf32>
    %55 = vector.extract_strided_slice %42 {offsets = [0, 256], sizes = [1, 128], strides = [1, 1]} : vector<1x896xf32> to vector<1x128xf32>
    %56 = vector.extract_strided_slice %42 {offsets = [0, 384], sizes = [1, 128], strides = [1, 1]} : vector<1x896xf32> to vector<1x128xf32>
    %57 = arith.mulf %48, %56 : vector<1x128xf32>
    %58 = arith.addf %55, %57 : vector<1x128xf32>
    %59 = math.tanh %58 : vector<1x128xf32>
    %cst_20 = arith.constant 1.000000e+00 : f32
    %60 = vector.broadcast %cst_20 : f32 to vector<1x128xf32>
    %61 = arith.subf %60, %54 : vector<1x128xf32>
    %62 = arith.mulf %61, %59 : vector<1x128xf32>
    %63 = arith.mulf %54, %10 : vector<1x128xf32>
    %64 = arith.addf %62, %63 : vector<1x128xf32>
    %65 = vector.extract_strided_slice %42 {offsets = [0, 512], sizes = [1, 384], strides = [1, 1]} : vector<1x896xf32> to vector<1x384xf32>
    %66 = vector.extract_strided_slice %5 {offsets = [1, 0], sizes = [1, 384], strides = [1, 1]} : vector<8x384xf32> to vector<1x384xf32>
    %67 = vector.extract_strided_slice %66 {offsets = [0, 0], sizes = [1, 128], strides = [1, 1]} : vector<1x384xf32> to vector<1x128xf32>
    %68 = vector.extract_strided_slice %65 {offsets = [0, 0], sizes = [1, 128], strides = [1, 1]} : vector<1x384xf32> to vector<1x128xf32>
    %69 = arith.addf %67, %68 : vector<1x128xf32>
    %70 = arith.negf %69 : vector<1x128xf32>
    %71 = math.exp %70 : vector<1x128xf32>
    %cst_21 = arith.constant 1.000000e+00 : f32
    %72 = vector.broadcast %cst_21 : f32 to vector<1x128xf32>
    %73 = arith.addf %72, %71 : vector<1x128xf32>
    %74 = arith.divf %72, %73 : vector<1x128xf32>
    %75 = vector.extract_strided_slice %66 {offsets = [0, 128], sizes = [1, 128], strides = [1, 1]} : vector<1x384xf32> to vector<1x128xf32>
    %76 = vector.extract_strided_slice %65 {offsets = [0, 128], sizes = [1, 128], strides = [1, 1]} : vector<1x384xf32> to vector<1x128xf32>
    %77 = arith.addf %75, %76 : vector<1x128xf32>
    %78 = arith.negf %77 : vector<1x128xf32>
    %79 = math.exp %78 : vector<1x128xf32>
    %cst_22 = arith.constant 1.000000e+00 : f32
    %80 = vector.broadcast %cst_22 : f32 to vector<1x128xf32>
    %81 = arith.addf %80, %79 : vector<1x128xf32>
    %82 = arith.divf %80, %81 : vector<1x128xf32>
    %83 = vector.extract_strided_slice %66 {offsets = [0, 256], sizes = [1, 128], strides = [1, 1]} : vector<1x384xf32> to vector<1x128xf32>
    %84 = vector.extract_strided_slice %65 {offsets = [0, 256], sizes = [1, 128], strides = [1, 1]} : vector<1x384xf32> to vector<1x128xf32>
    %85 = arith.addf %84, %6 : vector<1x128xf32>
    %86 = arith.mulf %74, %85 : vector<1x128xf32>
    %87 = arith.addf %83, %86 : vector<1x128xf32>
    %88 = math.tanh %87 : vector<1x128xf32>
    %cst_23 = arith.constant 1.000000e+00 : f32
    %89 = vector.broadcast %cst_23 : f32 to vector<1x128xf32>
    %90 = arith.subf %89, %82 : vector<1x128xf32>
    %91 = arith.mulf %90, %88 : vector<1x128xf32>
    %92 = arith.mulf %82, %39 : vector<1x128xf32>
    %93 = arith.addf %91, %92 : vector<1x128xf32>
    %94 = tpu.concatenate %93, %64 in 1 : vector<1x128xf32>, vector<1x128xf32> -> vector<1x256xf32>
    %cst_24 = arith.constant dense<0.000000e+00> : vector<1x896xf32>
    %95 = tpu.matmul %94, %7, %cst_24 {dimension_numbers = #tpu.dot_dimension_numbers<[1], [0], [0], [1], [0, 0, 1, 1], [], []>} : vector<1x256xf32>, vector<256x896xf32>, vector<1x896xf32> -> vector<1x896xf32>
    %96 = arith.addf %95, %8 : vector<1x896xf32>
    %97 = vector.extract_strided_slice %96 {offsets = [0, 0], sizes = [1, 128], strides = [1, 1]} : vector<1x896xf32> to vector<1x128xf32>
    %98 = arith.negf %97 : vector<1x128xf32>
    %99 = math.exp %98 : vector<1x128xf32>
    %cst_25 = arith.constant 1.000000e+00 : f32
    %100 = vector.broadcast %cst_25 : f32 to vector<1x128xf32>
    %101 = arith.addf %100, %99 : vector<1x128xf32>
    %102 = arith.divf %100, %101 : vector<1x128xf32>
    %103 = vector.extract_strided_slice %96 {offsets = [0, 128], sizes = [1, 128], strides = [1, 1]} : vector<1x896xf32> to vector<1x128xf32>
    %104 = arith.negf %103 : vector<1x128xf32>
    %105 = math.exp %104 : vector<1x128xf32>
    %cst_26 = arith.constant 1.000000e+00 : f32
    %106 = vector.broadcast %cst_26 : f32 to vector<1x128xf32>
    %107 = arith.addf %106, %105 : vector<1x128xf32>
    %108 = arith.divf %106, %107 : vector<1x128xf32>
    %109 = vector.extract_strided_slice %96 {offsets = [0, 256], sizes = [1, 128], strides = [1, 1]} : vector<1x896xf32> to vector<1x128xf32>
    %110 = vector.extract_strided_slice %96 {offsets = [0, 384], sizes = [1, 128], strides = [1, 1]} : vector<1x896xf32> to vector<1x128xf32>
    %111 = arith.mulf %102, %110 : vector<1x128xf32>
    %112 = arith.addf %109, %111 : vector<1x128xf32>
    %113 = math.tanh %112 : vector<1x128xf32>
    %cst_27 = arith.constant 1.000000e+00 : f32
    %114 = vector.broadcast %cst_27 : f32 to vector<1x128xf32>
    %115 = arith.subf %114, %108 : vector<1x128xf32>
    %116 = arith.mulf %115, %113 : vector<1x128xf32>
    %117 = arith.mulf %108, %64 : vector<1x128xf32>
    %118 = arith.addf %116, %117 : vector<1x128xf32>
    %119 = vector.extract_strided_slice %96 {offsets = [0, 512], sizes = [1, 384], strides = [1, 1]} : vector<1x896xf32> to vector<1x384xf32>
    %120 = vector.extract_strided_slice %5 {offsets = [2, 0], sizes = [1, 384], strides = [1, 1]} : vector<8x384xf32> to vector<1x384xf32>
    %121 = vector.extract_strided_slice %120 {offsets = [0, 0], sizes = [1, 128], strides = [1, 1]} : vector<1x384xf32> to vector<1x128xf32>
    %122 = vector.extract_strided_slice %119 {offsets = [0, 0], sizes = [1, 128], strides = [1, 1]} : vector<1x384xf32> to vector<1x128xf32>
    %123 = arith.addf %121, %122 : vector<1x128xf32>
    %124 = arith.negf %123 : vector<1x128xf32>
    %125 = math.exp %124 : vector<1x128xf32>
    %cst_28 = arith.constant 1.000000e+00 : f32
    %126 = vector.broadcast %cst_28 : f32 to vector<1x128xf32>
    %127 = arith.addf %126, %125 : vector<1x128xf32>
    %128 = arith.divf %126, %127 : vector<1x128xf32>
    %129 = vector.extract_strided_slice %120 {offsets = [0, 128], sizes = [1, 128], strides = [1, 1]} : vector<1x384xf32> to vector<1x128xf32>
    %130 = vector.extract_strided_slice %119 {offsets = [0, 128], sizes = [1, 128], strides = [1, 1]} : vector<1x384xf32> to vector<1x128xf32>
    %131 = arith.addf %129, %130 : vector<1x128xf32>
    %132 = arith.negf %131 : vector<1x128xf32>
    %133 = math.exp %132 : vector<1x128xf32>
    %cst_29 = arith.constant 1.000000e+00 : f32
    %134 = vector.broadcast %cst_29 : f32 to vector<1x128xf32>
    %135 = arith.addf %134, %133 : vector<1x128xf32>
    %136 = arith.divf %134, %135 : vector<1x128xf32>
    %137 = vector.extract_strided_slice %120 {offsets = [0, 256], sizes = [1, 128], strides = [1, 1]} : vector<1x384xf32> to vector<1x128xf32>
    %138 = vector.extract_strided_slice %119 {offsets = [0, 256], sizes = [1, 128], strides = [1, 1]} : vector<1x384xf32> to vector<1x128xf32>
    %139 = arith.addf %138, %6 : vector<1x128xf32>
    %140 = arith.mulf %128, %139 : vector<1x128xf32>
    %141 = arith.addf %137, %140 : vector<1x128xf32>
    %142 = math.tanh %141 : vector<1x128xf32>
    %cst_30 = arith.constant 1.000000e+00 : f32
    %143 = vector.broadcast %cst_30 : f32 to vector<1x128xf32>
    %144 = arith.subf %143, %136 : vector<1x128xf32>
    %145 = arith.mulf %144, %142 : vector<1x128xf32>
    %146 = arith.mulf %136, %93 : vector<1x128xf32>
    %147 = arith.addf %145, %146 : vector<1x128xf32>
    %148 = tpu.concatenate %147, %118 in 1 : vector<1x128xf32>, vector<1x128xf32> -> vector<1x256xf32>
    %cst_31 = arith.constant dense<0.000000e+00> : vector<1x896xf32>
    %149 = tpu.matmul %148, %7, %cst_31 {dimension_numbers = #tpu.dot_dimension_numbers<[1], [0], [0], [1], [0, 0, 1, 1], [], []>} : vector<1x256xf32>, vector<256x896xf32>, vector<1x896xf32> -> vector<1x896xf32>
    %150 = arith.addf %149, %8 : vector<1x896xf32>
    %151 = vector.extract_strided_slice %150 {offsets = [0, 0], sizes = [1, 128], strides = [1, 1]} : vector<1x896xf32> to vector<1x128xf32>
    %152 = arith.negf %151 : vector<1x128xf32>
    %153 = math.exp %152 : vector<1x128xf32>
    %cst_32 = arith.constant 1.000000e+00 : f32
    %154 = vector.broadcast %cst_32 : f32 to vector<1x128xf32>
    %155 = arith.addf %154, %153 : vector<1x128xf32>
    %156 = arith.divf %154, %155 : vector<1x128xf32>
    %157 = vector.extract_strided_slice %150 {offsets = [0, 128], sizes = [1, 128], strides = [1, 1]} : vector<1x896xf32> to vector<1x128xf32>
    %158 = arith.negf %157 : vector<1x128xf32>
    %159 = math.exp %158 : vector<1x128xf32>
    %cst_33 = arith.constant 1.000000e+00 : f32
    %160 = vector.broadcast %cst_33 : f32 to vector<1x128xf32>
    %161 = arith.addf %160, %159 : vector<1x128xf32>
    %162 = arith.divf %160, %161 : vector<1x128xf32>
    %163 = vector.extract_strided_slice %150 {offsets = [0, 256], sizes = [1, 128], strides = [1, 1]} : vector<1x896xf32> to vector<1x128xf32>
    %164 = vector.extract_strided_slice %150 {offsets = [0, 384], sizes = [1, 128], strides = [1, 1]} : vector<1x896xf32> to vector<1x128xf32>
    %165 = arith.mulf %156, %164 : vector<1x128xf32>
    %166 = arith.addf %163, %165 : vector<1x128xf32>
    %167 = math.tanh %166 : vector<1x128xf32>
    %cst_34 = arith.constant 1.000000e+00 : f32
    %168 = vector.broadcast %cst_34 : f32 to vector<1x128xf32>
    %169 = arith.subf %168, %162 : vector<1x128xf32>
    %170 = arith.mulf %169, %167 : vector<1x128xf32>
    %171 = arith.mulf %162, %118 : vector<1x128xf32>
    %172 = arith.addf %170, %171 : vector<1x128xf32>
    %173 = vector.extract_strided_slice %150 {offsets = [0, 512], sizes = [1, 384], strides = [1, 1]} : vector<1x896xf32> to vector<1x384xf32>
    %174 = vector.extract_strided_slice %5 {offsets = [3, 0], sizes = [1, 384], strides = [1, 1]} : vector<8x384xf32> to vector<1x384xf32>
    %175 = vector.extract_strided_slice %174 {offsets = [0, 0], sizes = [1, 128], strides = [1, 1]} : vector<1x384xf32> to vector<1x128xf32>
    %176 = vector.extract_strided_slice %173 {offsets = [0, 0], sizes = [1, 128], strides = [1, 1]} : vector<1x384xf32> to vector<1x128xf32>
    %177 = arith.addf %175, %176 : vector<1x128xf32>
    %178 = arith.negf %177 : vector<1x128xf32>
    %179 = math.exp %178 : vector<1x128xf32>
    %cst_35 = arith.constant 1.000000e+00 : f32
    %180 = vector.broadcast %cst_35 : f32 to vector<1x128xf32>
    %181 = arith.addf %180, %179 : vector<1x128xf32>
    %182 = arith.divf %180, %181 : vector<1x128xf32>
    %183 = vector.extract_strided_slice %174 {offsets = [0, 128], sizes = [1, 128], strides = [1, 1]} : vector<1x384xf32> to vector<1x128xf32>
    %184 = vector.extract_strided_slice %173 {offsets = [0, 128], sizes = [1, 128], strides = [1, 1]} : vector<1x384xf32> to vector<1x128xf32>
    %185 = arith.addf %183, %184 : vector<1x128xf32>
    %186 = arith.negf %185 : vector<1x128xf32>
    %187 = math.exp %186 : vector<1x128xf32>
    %cst_36 = arith.constant 1.000000e+00 : f32
    %188 = vector.broadcast %cst_36 : f32 to vector<1x128xf32>
    %189 = arith.addf %188, %187 : vector<1x128xf32>
    %190 = arith.divf %188, %189 : vector<1x128xf32>
    %191 = vector.extract_strided_slice %174 {offsets = [0, 256], sizes = [1, 128], strides = [1, 1]} : vector<1x384xf32> to vector<1x128xf32>
    %192 = vector.extract_strided_slice %173 {offsets = [0, 256], sizes = [1, 128], strides = [1, 1]} : vector<1x384xf32> to vector<1x128xf32>
    %193 = arith.addf %192, %6 : vector<1x128xf32>
    %194 = arith.mulf %182, %193 : vector<1x128xf32>
    %195 = arith.addf %191, %194 : vector<1x128xf32>
    %196 = math.tanh %195 : vector<1x128xf32>
    %cst_37 = arith.constant 1.000000e+00 : f32
    %197 = vector.broadcast %cst_37 : f32 to vector<1x128xf32>
    %198 = arith.subf %197, %190 : vector<1x128xf32>
    %199 = arith.mulf %198, %196 : vector<1x128xf32>
    %200 = arith.mulf %190, %147 : vector<1x128xf32>
    %201 = arith.addf %199, %200 : vector<1x128xf32>
    %202 = tpu.concatenate %201, %172 in 1 : vector<1x128xf32>, vector<1x128xf32> -> vector<1x256xf32>
    %cst_38 = arith.constant dense<0.000000e+00> : vector<1x896xf32>
    %203 = tpu.matmul %202, %7, %cst_38 {dimension_numbers = #tpu.dot_dimension_numbers<[1], [0], [0], [1], [0, 0, 1, 1], [], []>} : vector<1x256xf32>, vector<256x896xf32>, vector<1x896xf32> -> vector<1x896xf32>
    %204 = arith.addf %203, %8 : vector<1x896xf32>
    %205 = vector.extract_strided_slice %204 {offsets = [0, 0], sizes = [1, 128], strides = [1, 1]} : vector<1x896xf32> to vector<1x128xf32>
    %206 = arith.negf %205 : vector<1x128xf32>
    %207 = math.exp %206 : vector<1x128xf32>
    %cst_39 = arith.constant 1.000000e+00 : f32
    %208 = vector.broadcast %cst_39 : f32 to vector<1x128xf32>
    %209 = arith.addf %208, %207 : vector<1x128xf32>
    %210 = arith.divf %208, %209 : vector<1x128xf32>
    %211 = vector.extract_strided_slice %204 {offsets = [0, 128], sizes = [1, 128], strides = [1, 1]} : vector<1x896xf32> to vector<1x128xf32>
    %212 = arith.negf %211 : vector<1x128xf32>
    %213 = math.exp %212 : vector<1x128xf32>
    %cst_40 = arith.constant 1.000000e+00 : f32
    %214 = vector.broadcast %cst_40 : f32 to vector<1x128xf32>
    %215 = arith.addf %214, %213 : vector<1x128xf32>
    %216 = arith.divf %214, %215 : vector<1x128xf32>
    %217 = vector.extract_strided_slice %204 {offsets = [0, 256], sizes = [1, 128], strides = [1, 1]} : vector<1x896xf32> to vector<1x128xf32>
    %218 = vector.extract_strided_slice %204 {offsets = [0, 384], sizes = [1, 128], strides = [1, 1]} : vector<1x896xf32> to vector<1x128xf32>
    %219 = arith.mulf %210, %218 : vector<1x128xf32>
    %220 = arith.addf %217, %219 : vector<1x128xf32>
    %221 = math.tanh %220 : vector<1x128xf32>
    %cst_41 = arith.constant 1.000000e+00 : f32
    %222 = vector.broadcast %cst_41 : f32 to vector<1x128xf32>
    %223 = arith.subf %222, %216 : vector<1x128xf32>
    %224 = arith.mulf %223, %221 : vector<1x128xf32>
    %225 = arith.mulf %216, %172 : vector<1x128xf32>
    %226 = arith.addf %224, %225 : vector<1x128xf32>
    %227 = vector.extract_strided_slice %204 {offsets = [0, 512], sizes = [1, 384], strides = [1, 1]} : vector<1x896xf32> to vector<1x384xf32>
    %228 = vector.extract_strided_slice %5 {offsets = [4, 0], sizes = [1, 384], strides = [1, 1]} : vector<8x384xf32> to vector<1x384xf32>
    %229 = vector.extract_strided_slice %228 {offsets = [0, 0], sizes = [1, 128], strides = [1, 1]} : vector<1x384xf32> to vector<1x128xf32>
    %230 = vector.extract_strided_slice %227 {offsets = [0, 0], sizes = [1, 128], strides = [1, 1]} : vector<1x384xf32> to vector<1x128xf32>
    %231 = arith.addf %229, %230 : vector<1x128xf32>
    %232 = arith.negf %231 : vector<1x128xf32>
    %233 = math.exp %232 : vector<1x128xf32>
    %cst_42 = arith.constant 1.000000e+00 : f32
    %234 = vector.broadcast %cst_42 : f32 to vector<1x128xf32>
    %235 = arith.addf %234, %233 : vector<1x128xf32>
    %236 = arith.divf %234, %235 : vector<1x128xf32>
    %237 = vector.extract_strided_slice %228 {offsets = [0, 128], sizes = [1, 128], strides = [1, 1]} : vector<1x384xf32> to vector<1x128xf32>
    %238 = vector.extract_strided_slice %227 {offsets = [0, 128], sizes = [1, 128], strides = [1, 1]} : vector<1x384xf32> to vector<1x128xf32>
    %239 = arith.addf %237, %238 : vector<1x128xf32>
    %240 = arith.negf %239 : vector<1x128xf32>
    %241 = math.exp %240 : vector<1x128xf32>
    %cst_43 = arith.constant 1.000000e+00 : f32
    %242 = vector.broadcast %cst_43 : f32 to vector<1x128xf32>
    %243 = arith.addf %242, %241 : vector<1x128xf32>
    %244 = arith.divf %242, %243 : vector<1x128xf32>
    %245 = vector.extract_strided_slice %228 {offsets = [0, 256], sizes = [1, 128], strides = [1, 1]} : vector<1x384xf32> to vector<1x128xf32>
    %246 = vector.extract_strided_slice %227 {offsets = [0, 256], sizes = [1, 128], strides = [1, 1]} : vector<1x384xf32> to vector<1x128xf32>
    %247 = arith.addf %246, %6 : vector<1x128xf32>
    %248 = arith.mulf %236, %247 : vector<1x128xf32>
    %249 = arith.addf %245, %248 : vector<1x128xf32>
    %250 = math.tanh %249 : vector<1x128xf32>
    %cst_44 = arith.constant 1.000000e+00 : f32
    %251 = vector.broadcast %cst_44 : f32 to vector<1x128xf32>
    %252 = arith.subf %251, %244 : vector<1x128xf32>
    %253 = arith.mulf %252, %250 : vector<1x128xf32>
    %254 = arith.mulf %244, %201 : vector<1x128xf32>
    %255 = arith.addf %253, %254 : vector<1x128xf32>
    %256 = tpu.concatenate %255, %226 in 1 : vector<1x128xf32>, vector<1x128xf32> -> vector<1x256xf32>
    %cst_45 = arith.constant dense<0.000000e+00> : vector<1x896xf32>
    %257 = tpu.matmul %256, %7, %cst_45 {dimension_numbers = #tpu.dot_dimension_numbers<[1], [0], [0], [1], [0, 0, 1, 1], [], []>} : vector<1x256xf32>, vector<256x896xf32>, vector<1x896xf32> -> vector<1x896xf32>
    %258 = arith.addf %257, %8 : vector<1x896xf32>
    %259 = vector.extract_strided_slice %258 {offsets = [0, 0], sizes = [1, 128], strides = [1, 1]} : vector<1x896xf32> to vector<1x128xf32>
    %260 = arith.negf %259 : vector<1x128xf32>
    %261 = math.exp %260 : vector<1x128xf32>
    %cst_46 = arith.constant 1.000000e+00 : f32
    %262 = vector.broadcast %cst_46 : f32 to vector<1x128xf32>
    %263 = arith.addf %262, %261 : vector<1x128xf32>
    %264 = arith.divf %262, %263 : vector<1x128xf32>
    %265 = vector.extract_strided_slice %258 {offsets = [0, 128], sizes = [1, 128], strides = [1, 1]} : vector<1x896xf32> to vector<1x128xf32>
    %266 = arith.negf %265 : vector<1x128xf32>
    %267 = math.exp %266 : vector<1x128xf32>
    %cst_47 = arith.constant 1.000000e+00 : f32
    %268 = vector.broadcast %cst_47 : f32 to vector<1x128xf32>
    %269 = arith.addf %268, %267 : vector<1x128xf32>
    %270 = arith.divf %268, %269 : vector<1x128xf32>
    %271 = vector.extract_strided_slice %258 {offsets = [0, 256], sizes = [1, 128], strides = [1, 1]} : vector<1x896xf32> to vector<1x128xf32>
    %272 = vector.extract_strided_slice %258 {offsets = [0, 384], sizes = [1, 128], strides = [1, 1]} : vector<1x896xf32> to vector<1x128xf32>
    %273 = arith.mulf %264, %272 : vector<1x128xf32>
    %274 = arith.addf %271, %273 : vector<1x128xf32>
    %275 = math.tanh %274 : vector<1x128xf32>
    %cst_48 = arith.constant 1.000000e+00 : f32
    %276 = vector.broadcast %cst_48 : f32 to vector<1x128xf32>
    %277 = arith.subf %276, %270 : vector<1x128xf32>
    %278 = arith.mulf %277, %275 : vector<1x128xf32>
    %279 = arith.mulf %270, %226 : vector<1x128xf32>
    %280 = arith.addf %278, %279 : vector<1x128xf32>
    %281 = vector.extract_strided_slice %258 {offsets = [0, 512], sizes = [1, 384], strides = [1, 1]} : vector<1x896xf32> to vector<1x384xf32>
    %282 = vector.extract_strided_slice %5 {offsets = [5, 0], sizes = [1, 384], strides = [1, 1]} : vector<8x384xf32> to vector<1x384xf32>
    %283 = vector.extract_strided_slice %282 {offsets = [0, 0], sizes = [1, 128], strides = [1, 1]} : vector<1x384xf32> to vector<1x128xf32>
    %284 = vector.extract_strided_slice %281 {offsets = [0, 0], sizes = [1, 128], strides = [1, 1]} : vector<1x384xf32> to vector<1x128xf32>
    %285 = arith.addf %283, %284 : vector<1x128xf32>
    %286 = arith.negf %285 : vector<1x128xf32>
    %287 = math.exp %286 : vector<1x128xf32>
    %cst_49 = arith.constant 1.000000e+00 : f32
    %288 = vector.broadcast %cst_49 : f32 to vector<1x128xf32>
    %289 = arith.addf %288, %287 : vector<1x128xf32>
    %290 = arith.divf %288, %289 : vector<1x128xf32>
    %291 = vector.extract_strided_slice %282 {offsets = [0, 128], sizes = [1, 128], strides = [1, 1]} : vector<1x384xf32> to vector<1x128xf32>
    %292 = vector.extract_strided_slice %281 {offsets = [0, 128], sizes = [1, 128], strides = [1, 1]} : vector<1x384xf32> to vector<1x128xf32>
    %293 = arith.addf %291, %292 : vector<1x128xf32>
    %294 = arith.negf %293 : vector<1x128xf32>
    %295 = math.exp %294 : vector<1x128xf32>
    %cst_50 = arith.constant 1.000000e+00 : f32
    %296 = vector.broadcast %cst_50 : f32 to vector<1x128xf32>
    %297 = arith.addf %296, %295 : vector<1x128xf32>
    %298 = arith.divf %296, %297 : vector<1x128xf32>
    %299 = vector.extract_strided_slice %282 {offsets = [0, 256], sizes = [1, 128], strides = [1, 1]} : vector<1x384xf32> to vector<1x128xf32>
    %300 = vector.extract_strided_slice %281 {offsets = [0, 256], sizes = [1, 128], strides = [1, 1]} : vector<1x384xf32> to vector<1x128xf32>
    %301 = arith.addf %300, %6 : vector<1x128xf32>
    %302 = arith.mulf %290, %301 : vector<1x128xf32>
    %303 = arith.addf %299, %302 : vector<1x128xf32>
    %304 = math.tanh %303 : vector<1x128xf32>
    %cst_51 = arith.constant 1.000000e+00 : f32
    %305 = vector.broadcast %cst_51 : f32 to vector<1x128xf32>
    %306 = arith.subf %305, %298 : vector<1x128xf32>
    %307 = arith.mulf %306, %304 : vector<1x128xf32>
    %308 = arith.mulf %298, %255 : vector<1x128xf32>
    %309 = arith.addf %307, %308 : vector<1x128xf32>
    %310 = tpu.concatenate %309, %280 in 1 : vector<1x128xf32>, vector<1x128xf32> -> vector<1x256xf32>
    %cst_52 = arith.constant dense<0.000000e+00> : vector<1x896xf32>
    %311 = tpu.matmul %310, %7, %cst_52 {dimension_numbers = #tpu.dot_dimension_numbers<[1], [0], [0], [1], [0, 0, 1, 1], [], []>} : vector<1x256xf32>, vector<256x896xf32>, vector<1x896xf32> -> vector<1x896xf32>
    %312 = arith.addf %311, %8 : vector<1x896xf32>
    %313 = vector.extract_strided_slice %312 {offsets = [0, 0], sizes = [1, 128], strides = [1, 1]} : vector<1x896xf32> to vector<1x128xf32>
    %314 = arith.negf %313 : vector<1x128xf32>
    %315 = math.exp %314 : vector<1x128xf32>
    %cst_53 = arith.constant 1.000000e+00 : f32
    %316 = vector.broadcast %cst_53 : f32 to vector<1x128xf32>
    %317 = arith.addf %316, %315 : vector<1x128xf32>
    %318 = arith.divf %316, %317 : vector<1x128xf32>
    %319 = vector.extract_strided_slice %312 {offsets = [0, 128], sizes = [1, 128], strides = [1, 1]} : vector<1x896xf32> to vector<1x128xf32>
    %320 = arith.negf %319 : vector<1x128xf32>
    %321 = math.exp %320 : vector<1x128xf32>
    %cst_54 = arith.constant 1.000000e+00 : f32
    %322 = vector.broadcast %cst_54 : f32 to vector<1x128xf32>
    %323 = arith.addf %322, %321 : vector<1x128xf32>
    %324 = arith.divf %322, %323 : vector<1x128xf32>
    %325 = vector.extract_strided_slice %312 {offsets = [0, 256], sizes = [1, 128], strides = [1, 1]} : vector<1x896xf32> to vector<1x128xf32>
    %326 = vector.extract_strided_slice %312 {offsets = [0, 384], sizes = [1, 128], strides = [1, 1]} : vector<1x896xf32> to vector<1x128xf32>
    %327 = arith.mulf %318, %326 : vector<1x128xf32>
    %328 = arith.addf %325, %327 : vector<1x128xf32>
    %329 = math.tanh %328 : vector<1x128xf32>
    %cst_55 = arith.constant 1.000000e+00 : f32
    %330 = vector.broadcast %cst_55 : f32 to vector<1x128xf32>
    %331 = arith.subf %330, %324 : vector<1x128xf32>
    %332 = arith.mulf %331, %329 : vector<1x128xf32>
    %333 = arith.mulf %324, %280 : vector<1x128xf32>
    %334 = arith.addf %332, %333 : vector<1x128xf32>
    %335 = vector.extract_strided_slice %312 {offsets = [0, 512], sizes = [1, 384], strides = [1, 1]} : vector<1x896xf32> to vector<1x384xf32>
    %336 = vector.extract_strided_slice %5 {offsets = [6, 0], sizes = [1, 384], strides = [1, 1]} : vector<8x384xf32> to vector<1x384xf32>
    %337 = vector.extract_strided_slice %336 {offsets = [0, 0], sizes = [1, 128], strides = [1, 1]} : vector<1x384xf32> to vector<1x128xf32>
    %338 = vector.extract_strided_slice %335 {offsets = [0, 0], sizes = [1, 128], strides = [1, 1]} : vector<1x384xf32> to vector<1x128xf32>
    %339 = arith.addf %337, %338 : vector<1x128xf32>
    %340 = arith.negf %339 : vector<1x128xf32>
    %341 = math.exp %340 : vector<1x128xf32>
    %cst_56 = arith.constant 1.000000e+00 : f32
    %342 = vector.broadcast %cst_56 : f32 to vector<1x128xf32>
    %343 = arith.addf %342, %341 : vector<1x128xf32>
    %344 = arith.divf %342, %343 : vector<1x128xf32>
    %345 = vector.extract_strided_slice %336 {offsets = [0, 128], sizes = [1, 128], strides = [1, 1]} : vector<1x384xf32> to vector<1x128xf32>
    %346 = vector.extract_strided_slice %335 {offsets = [0, 128], sizes = [1, 128], strides = [1, 1]} : vector<1x384xf32> to vector<1x128xf32>
    %347 = arith.addf %345, %346 : vector<1x128xf32>
    %348 = arith.negf %347 : vector<1x128xf32>
    %349 = math.exp %348 : vector<1x128xf32>
    %cst_57 = arith.constant 1.000000e+00 : f32
    %350 = vector.broadcast %cst_57 : f32 to vector<1x128xf32>
    %351 = arith.addf %350, %349 : vector<1x128xf32>
    %352 = arith.divf %350, %351 : vector<1x128xf32>
    %353 = vector.extract_strided_slice %336 {offsets = [0, 256], sizes = [1, 128], strides = [1, 1]} : vector<1x384xf32> to vector<1x128xf32>
    %354 = vector.extract_strided_slice %335 {offsets = [0, 256], sizes = [1, 128], strides = [1, 1]} : vector<1x384xf32> to vector<1x128xf32>
    %355 = arith.addf %354, %6 : vector<1x128xf32>
    %356 = arith.mulf %344, %355 : vector<1x128xf32>
    %357 = arith.addf %353, %356 : vector<1x128xf32>
    %358 = math.tanh %357 : vector<1x128xf32>
    %cst_58 = arith.constant 1.000000e+00 : f32
    %359 = vector.broadcast %cst_58 : f32 to vector<1x128xf32>
    %360 = arith.subf %359, %352 : vector<1x128xf32>
    %361 = arith.mulf %360, %358 : vector<1x128xf32>
    %362 = arith.mulf %352, %309 : vector<1x128xf32>
    %363 = arith.addf %361, %362 : vector<1x128xf32>
    %364 = tpu.concatenate %363, %334 in 1 : vector<1x128xf32>, vector<1x128xf32> -> vector<1x256xf32>
    %cst_59 = arith.constant dense<0.000000e+00> : vector<1x896xf32>
    %365 = tpu.matmul %364, %7, %cst_59 {dimension_numbers = #tpu.dot_dimension_numbers<[1], [0], [0], [1], [0, 0, 1, 1], [], []>} : vector<1x256xf32>, vector<256x896xf32>, vector<1x896xf32> -> vector<1x896xf32>
    %366 = arith.addf %365, %8 : vector<1x896xf32>
    %367 = vector.extract_strided_slice %366 {offsets = [0, 0], sizes = [1, 128], strides = [1, 1]} : vector<1x896xf32> to vector<1x128xf32>
    %368 = arith.negf %367 : vector<1x128xf32>
    %369 = math.exp %368 : vector<1x128xf32>
    %cst_60 = arith.constant 1.000000e+00 : f32
    %370 = vector.broadcast %cst_60 : f32 to vector<1x128xf32>
    %371 = arith.addf %370, %369 : vector<1x128xf32>
    %372 = arith.divf %370, %371 : vector<1x128xf32>
    %373 = vector.extract_strided_slice %366 {offsets = [0, 128], sizes = [1, 128], strides = [1, 1]} : vector<1x896xf32> to vector<1x128xf32>
    %374 = arith.negf %373 : vector<1x128xf32>
    %375 = math.exp %374 : vector<1x128xf32>
    %cst_61 = arith.constant 1.000000e+00 : f32
    %376 = vector.broadcast %cst_61 : f32 to vector<1x128xf32>
    %377 = arith.addf %376, %375 : vector<1x128xf32>
    %378 = arith.divf %376, %377 : vector<1x128xf32>
    %379 = vector.extract_strided_slice %366 {offsets = [0, 256], sizes = [1, 128], strides = [1, 1]} : vector<1x896xf32> to vector<1x128xf32>
    %380 = vector.extract_strided_slice %366 {offsets = [0, 384], sizes = [1, 128], strides = [1, 1]} : vector<1x896xf32> to vector<1x128xf32>
    %381 = arith.mulf %372, %380 : vector<1x128xf32>
    %382 = arith.addf %379, %381 : vector<1x128xf32>
    %383 = math.tanh %382 : vector<1x128xf32>
    %cst_62 = arith.constant 1.000000e+00 : f32
    %384 = vector.broadcast %cst_62 : f32 to vector<1x128xf32>
    %385 = arith.subf %384, %378 : vector<1x128xf32>
    %386 = arith.mulf %385, %383 : vector<1x128xf32>
    %387 = arith.mulf %378, %334 : vector<1x128xf32>
    %388 = arith.addf %386, %387 : vector<1x128xf32>
    %389 = vector.extract_strided_slice %366 {offsets = [0, 512], sizes = [1, 384], strides = [1, 1]} : vector<1x896xf32> to vector<1x384xf32>
    %390 = vector.extract_strided_slice %5 {offsets = [7, 0], sizes = [1, 384], strides = [1, 1]} : vector<8x384xf32> to vector<1x384xf32>
    %391 = vector.extract_strided_slice %390 {offsets = [0, 0], sizes = [1, 128], strides = [1, 1]} : vector<1x384xf32> to vector<1x128xf32>
    %392 = vector.extract_strided_slice %389 {offsets = [0, 0], sizes = [1, 128], strides = [1, 1]} : vector<1x384xf32> to vector<1x128xf32>
    %393 = arith.addf %391, %392 : vector<1x128xf32>
    %394 = arith.negf %393 : vector<1x128xf32>
    %395 = math.exp %394 : vector<1x128xf32>
    %cst_63 = arith.constant 1.000000e+00 : f32
    %396 = vector.broadcast %cst_63 : f32 to vector<1x128xf32>
    %397 = arith.addf %396, %395 : vector<1x128xf32>
    %398 = arith.divf %396, %397 : vector<1x128xf32>
    %399 = vector.extract_strided_slice %390 {offsets = [0, 128], sizes = [1, 128], strides = [1, 1]} : vector<1x384xf32> to vector<1x128xf32>
    %400 = vector.extract_strided_slice %389 {offsets = [0, 128], sizes = [1, 128], strides = [1, 1]} : vector<1x384xf32> to vector<1x128xf32>
    %401 = arith.addf %399, %400 : vector<1x128xf32>
    %402 = arith.negf %401 : vector<1x128xf32>
    %403 = math.exp %402 : vector<1x128xf32>
    %cst_64 = arith.constant 1.000000e+00 : f32
    %404 = vector.broadcast %cst_64 : f32 to vector<1x128xf32>
    %405 = arith.addf %404, %403 : vector<1x128xf32>
    %406 = arith.divf %404, %405 : vector<1x128xf32>
    %407 = vector.extract_strided_slice %390 {offsets = [0, 256], sizes = [1, 128], strides = [1, 1]} : vector<1x384xf32> to vector<1x128xf32>
    %408 = vector.extract_strided_slice %389 {offsets = [0, 256], sizes = [1, 128], strides = [1, 1]} : vector<1x384xf32> to vector<1x128xf32>
    %409 = arith.addf %408, %6 : vector<1x128xf32>
    %410 = arith.mulf %398, %409 : vector<1x128xf32>
    %411 = arith.addf %407, %410 : vector<1x128xf32>
    %412 = math.tanh %411 : vector<1x128xf32>
    %cst_65 = arith.constant 1.000000e+00 : f32
    %413 = vector.broadcast %cst_65 : f32 to vector<1x128xf32>
    %414 = arith.subf %413, %406 : vector<1x128xf32>
    %415 = arith.mulf %414, %412 : vector<1x128xf32>
    %416 = arith.mulf %406, %363 : vector<1x128xf32>
    %417 = arith.addf %415, %416 : vector<1x128xf32>
    %418 = tpu.concatenate %417, %388 in 1 : vector<1x128xf32>, vector<1x128xf32> -> vector<1x256xf32>
    %cst_66 = arith.constant dense<0.000000e+00> : vector<1x896xf32>
    %419 = tpu.matmul %418, %7, %cst_66 {dimension_numbers = #tpu.dot_dimension_numbers<[1], [0], [0], [1], [0, 0, 1, 1], [], []>} : vector<1x256xf32>, vector<256x896xf32>, vector<1x896xf32> -> vector<1x896xf32>
    %420 = arith.addf %419, %8 : vector<1x896xf32>
    %421 = vector.extract_strided_slice %420 {offsets = [0, 0], sizes = [1, 128], strides = [1, 1]} : vector<1x896xf32> to vector<1x128xf32>
    %422 = arith.negf %421 : vector<1x128xf32>
    %423 = math.exp %422 : vector<1x128xf32>
    %cst_67 = arith.constant 1.000000e+00 : f32
    %424 = vector.broadcast %cst_67 : f32 to vector<1x128xf32>
    %425 = arith.addf %424, %423 : vector<1x128xf32>
    %426 = arith.divf %424, %425 : vector<1x128xf32>
    %427 = vector.extract_strided_slice %420 {offsets = [0, 128], sizes = [1, 128], strides = [1, 1]} : vector<1x896xf32> to vector<1x128xf32>
    %428 = arith.negf %427 : vector<1x128xf32>
    %429 = math.exp %428 : vector<1x128xf32>
    %cst_68 = arith.constant 1.000000e+00 : f32
    %430 = vector.broadcast %cst_68 : f32 to vector<1x128xf32>
    %431 = arith.addf %430, %429 : vector<1x128xf32>
    %432 = arith.divf %430, %431 : vector<1x128xf32>
    %433 = vector.extract_strided_slice %420 {offsets = [0, 256], sizes = [1, 128], strides = [1, 1]} : vector<1x896xf32> to vector<1x128xf32>
    %434 = vector.extract_strided_slice %420 {offsets = [0, 384], sizes = [1, 128], strides = [1, 1]} : vector<1x896xf32> to vector<1x128xf32>
    %435 = arith.mulf %426, %434 : vector<1x128xf32>
    %436 = arith.addf %433, %435 : vector<1x128xf32>
    %437 = math.tanh %436 : vector<1x128xf32>
    %cst_69 = arith.constant 1.000000e+00 : f32
    %438 = vector.broadcast %cst_69 : f32 to vector<1x128xf32>
    %439 = arith.subf %438, %432 : vector<1x128xf32>
    %440 = arith.mulf %439, %437 : vector<1x128xf32>
    %441 = arith.mulf %432, %388 : vector<1x128xf32>
    %442 = arith.addf %440, %441 : vector<1x128xf32>
    %c0_70 = arith.constant 0 : index
    %c0_71 = arith.constant 0 : index
    %443 = vector.load %arg6[%c0_70, %c0_71] : memref<128x1xf32, #tpu.memory_space<vmem>>, vector<128x1xf32>
    %cst_72 = arith.constant dense<0.000000e+00> : vector<1x1xf32>
    %444 = tpu.matmul %442, %443, %cst_72 {dimension_numbers = #tpu.dot_dimension_numbers<[1], [0], [0], [1], [0, 0, 1, 1], [], []>} : vector<1x128xf32>, vector<128x1xf32>, vector<1x1xf32> -> vector<1x1xf32>
    %c0_73 = arith.constant 0 : index
    %c0_74 = arith.constant 0 : index
    %445 = vector.load %arg7[%c0_73, %c0_74] : memref<1x1xf32, #tpu.memory_space<vmem>>, vector<1x1xf32>
    %446 = arith.addf %444, %445 : vector<1x1xf32>
    %c0_75 = arith.constant 0 : index
    %c0_76 = arith.constant 0 : index
    %447 = vector.load %arg8[%c0_75, %c0_76] : memref<1x1xf32, #tpu.memory_space<vmem>>, vector<1x1xf32>
    tpu.vector_store %arg8[%c0_75, %c0_76], %446 {strides = array<i32>} : memref<1x1xf32, #tpu.memory_space<vmem>>, vector<1x1xf32>,
    return
  }
}

</mosaic_0001>

<llo_original>
// kernel: gru_forward.1
$region0: #{gru_forward.1}
  #allocation0 [shape = 'u32[]', space=smem, size = 0x4, offset = 0x4, fixed_abs, tag = 'smem constant byte address 0x4 - core index']
  #allocation1 [shape = 'u32[144,128]{1,0:T(1,128)}', space=vmem, size = 0x12000, scoped, tag = 'internal scratch']
  #allocation2 [shape = 'f32[1,1]{1,0:T(1,128)S(1)}', space=vmem, size = 0x200, scoped, tag = 'scoped memory for gru_forward.1']
  %s0 = inlined_call_operand.vmem [shape: f32[8,1], index: 0, kind: input, shape index: {}]
  %s1 = inlined_call_operand.vmem [shape: f32[1,384], index: 1, kind: input, shape index: {}]
  %s2 = inlined_call_operand.vmem [shape: f32[1,384], index: 2, kind: input, shape index: {}]
  %s3 = inlined_call_operand.vmem [shape: f32[1,128], index: 3, kind: input, shape index: {}]
  %s4 = inlined_call_operand.vmem [shape: f32[256,896], index: 4, kind: input, shape index: {}]
  %s5 = inlined_call_operand.vmem [shape: f32[1,896], index: 5, kind: input, shape index: {}]
  %s6 = inlined_call_operand.vmem [shape: f32[128,1], index: 6, kind: input, shape index: {}]
  %s7 = inlined_call_operand.<no memory space> [shape: f32[1,1], index: 7, kind: input, shape index: {}]
  %s8 = inlined_call_operand.hbm [shape: f32[1,1], index: 8, kind: output, shape index: {}]
  %s9 = sld [smem:[#allocation0]]
  $region42: #{gru_forward.1} parent=0
    _
  %s11 = ssub.s32 1, %s9
  %s12 = scalar_select 0, %s11, %s9
  %v13 = vstv %s7
  %14 = vst [vmem:[#allocation2] sm:$0x1] %v13
  $region1: #{gru_forward.1} parent=0
    #allocation3 [shape = 'u8[512]{0}', space=vmem, size = 0x400, scoped, tag = 'output window, operand 0, single buffered']
    #allocation4 [shape = 's32[1]{0}', space=sflag, size = 0x4, scoped, tag = 'scoped memory for gru_forward.1']
    %15 = vsyncpa [#allocation4], 0
    // Predicated region
    $region2: #{gru_forward.1} parent=1 // pred_check
      _
    $region3: #{gru_forward.1} parent=1 // pred_check_branch
      %17 = sbr.rel (0) target = $region5
    $region4: #{gru_forward.1} parent=1 // pred_region
      _
    $region5: #{gru_forward.1} parent=1 // pred_fallthru
      _
    // Predicated region
    $region6: #{gru_forward.1} parent=1 // pred_check
      _
    $region7: #{gru_forward.1} parent=1 // pred_check_branch
      %19 = sbr.rel (0) target = $region9
    $region8: #{gru_forward.1} parent=1 // pred_region
      _
    $region9: #{gru_forward.1} parent=1 // pred_fallthru
      _
    // Predicated region
    $region10: #{gru_forward.1} parent=1 // pred_check
      _
    $region11: #{gru_forward.1} parent=1 // pred_check_branch
      %21 = sbr.rel (0) target = $region13
    $region12: #{gru_forward.1} parent=1 // pred_region
      _
    $region13: #{gru_forward.1} parent=1 // pred_fallthru
      _
    // Predicated region
    $region14: #{gru_forward.1} parent=1 // pred_check
      _
    $region15: #{gru_forward.1} parent=1 // pred_check_branch
      %23 = sbr.rel (0) target = $region17
    $region16: #{gru_forward.1} parent=1 // pred_region
      _
    $region17: #{gru_forward.1} parent=1 // pred_fallthru
      _
    // Predicated region
    $region18: #{gru_forward.1} parent=1 // pred_check
      _
    $region19: #{gru_forward.1} parent=1 // pred_check_branch
      %25 = sbr.rel (0) target = $region21
    $region20: #{gru_forward.1} parent=1 // pred_region
      _
    $region21: #{gru_forward.1} parent=1 // pred_fallthru
      _
    // Predicated region
    $region22: #{gru_forward.1} parent=1 // pred_check
      _
    $region23: #{gru_forward.1} parent=1 // pred_check_branch
      %27 = sbr.rel (0) target = $region25
    $region24: #{gru_forward.1} parent=1 // pred_region
      _
    $region25: #{gru_forward.1} parent=1 // pred_fallthru
      _
    // Predicated region
    $region26: #{gru_forward.1} parent=1 // pred_check
      _
    $region27: #{gru_forward.1} parent=1 // pred_check_branch
      %29 = sbr.rel (0) target = $region29
    $region28: #{gru_forward.1} parent=1 // pred_region
      _
    $region29: #{gru_forward.1} parent=1 // pred_fallthru
      _
    // Predicated region
    $region30: #{gru_forward.1} parent=1 // pred_check
      _
    $region31: #{gru_forward.1} parent=1 // pred_check_branch
      %31 = sbr.rel (0) target = $region33
    $region32: #{gru_forward.1} parent=1 // pred_region
      _
    $region33: #{gru_forward.1} parent=1 // pred_fallthru
      _
    %v32 = vld [vmem:[%s0] sm:$0xff]
    %v33 = vld [vmem:[%s1] sm:$0x7]
    %v34 = vld [vmem:[%s2] sm:$0x7]
    %v36 = vlaneseq
    %v37 = vshrl.u32 %v36, 7
    %v38 = vsub.s32 0, %v37
    %v39 = vrot.slane %v34, %v38
    %v40 = vlaneseq
    %v41 = vshrl.u32 %v40, 7
    %v42 = vsub.s32 1, %v41
    %v43 = vrot.slane %v34, %v42
    %v44 = vlaneseq
    %v45 = vshrl.u32 %v44, 7
    %v46 = vsub.s32 2, %v45
    %v47 = vrot.slane %v34, %v46
    %v52 = vlaneseq
    %v53 = vshrl.u32 %v52, 7
    %v54 = vsub.s32 0, %v53
    %v55 = vrot.slane %v33, %v54
    %v56 = vlaneseq
    %v57 = vshrl.u32 %v56, 7
    %v58 = vsub.s32 1, %v57
    %v59 = vrot.slane %v33, %v58
    %v60 = vlaneseq
    %v61 = vshrl.u32 %v60, 7
    %v62 = vsub.s32 2, %v61
    %v63 = vrot.slane %v33, %v62
    %vm64 = vcmask 7168
    %v66 = vsel %vm64, %v32, 0
    %vm68 = vcmask 1040384
    %v69 = vsel %vm68, %v55, 0
    %v71 = vsel %vm68, %v59, 0
    %v73 = vsel %vm68, %v63, 0
    %75 = vmatprep.subr.mxu0 0.0
    %76 = vmatpush1.msra.mxu0 0.0
    %77 = vmatprep.subr.mxu0 0.0
    %78 = vmatpush1.msra.mxu0 0.0
    %79 = vmatprep.subr.mxu0 0.0
    %80 = vmatpush1.msra.mxu0 0.0
    %81 = vmatprep.subr.mxu0 0.0
    %82 = vmatpush1.msra.mxu0 0.0
    %83 = vmatprep.subr.mxu0 0.0
    %84 = vmatpush1.msra.mxu0 0.0
    %85 = vmatprep.subr.mxu0 0.0
    %86 = vmatpush1.msra.mxu0 0.0
    %87 = vmatprep.subr.mxu0 0.0
    %88 = vmatpush1.msra.mxu0 0.0
    %89 = vmatprep.subr.mxu0 0.0
    %90 = vmatpush1.msra.mxu0 0.0
    %91 = vmatprep.subr.mxu0 0.0
    %92 = vmatpush1.msra.mxu0 0.0
    %93 = vmatprep.subr.mxu0 0.0
    %94 = vmatpush1.msra.mxu0 0.0
    %95 = vmatprep.subr.mxu0 0.0
    %96 = vmatpush1.msra.mxu0 0.0
    %97 = vmatprep.subr.mxu0 0.0
    %98 = vmatpush1.msra.mxu0 0.0
    %99 = vmatprep.subr.mxu0 0.0
    %100 = vmatpush1.msra.mxu0 0.0
    %101 = vmatprep.subr.mxu0 0.0
    %102 = vmatpush1.msra.mxu0 0.0
    %103 = vmatprep.subr.mxu0 0.0
    %104 = vmatpush1.msra.mxu0 0.0
    %105 = vmatprep.subr.mxu0 %v71
    %106 = vmatpush1.msra.mxu0 %v69
    %107 = vmatprep.subr.mxu0 0.0
    %108 = vmatpush2.msra.mxu0 0.0
    %109 = vmatprep.subr.mxu0 0.0
    %110 = vmatpush2.msra.mxu0 0.0
    %111 = vmatprep.subr.mxu0 0.0
    %112 = vmatpush2.msra.mxu0 0.0
    %113 = vmatprep.subr.mxu0 0.0
    %114 = vmatpush2.msra.mxu0 0.0
    %115 = vmatprep.subr.mxu0 0.0
    %116 = vmatpush2.msra.mxu0 0.0
    %117 = vmatprep.subr.mxu0 0.0
    %118 = vmatpush2.msra.mxu0 0.0
    %119 = vmatprep.subr.mxu0 0.0
    %120 = vmatpush2.msra.mxu0 0.0
    %121 = vmatprep.subr.mxu0 0.0
    %122 = vmatpush2.msra.mxu0 0.0
    %123 = vmatprep.subr.mxu0 0.0
    %124 = vmatpush2.msra.mxu0 0.0
    %125 = vmatprep.subr.mxu0 0.0
    %126 = vmatpush2.msra.mxu0 0.0
    %127 = vmatprep.subr.mxu0 0.0
    %128 = vmatpush2.msra.mxu0 0.0
    %129 = vmatprep.subr.mxu0 0.0
    %130 = vmatpush2.msra.mxu0 0.0
    %131 = vmatprep.subr.mxu0 0.0
    %132 = vmatpush2.msra.mxu0 0.0
    %133 = vmatprep.subr.mxu0 0.0
    %134 = vmatpush2.msra.mxu0 0.0
    %135 = vmatprep.subr.mxu0 0.0
    %136 = vmatpush2.msra.mxu0 0.0
    %137 = vmatprep.subr.mxu0 0.0
    %138 = vmatpush2.msra.mxu0 0.0
    %139 = vmatprep.mubr.f32.mxu0 0.0
    %140 = vmatmul.mubr.f32.gmra.mxu0 %v66
    %v141 = vpop.f32.mrf.mxu0
    %v142 = vadd.f32 %v39, %v141
    %v143 = vpop.f32.mrf.mxu0
    %v144 = vadd.f32 %v43, %v143
    %145 = vdwg.mxu0
    %146 = vmatprep.subr.mxu0 0.0
    %147 = vmatpush1.msra.mxu0 0.0
    %148 = vmatprep.subr.mxu0 0.0
    %149 = vmatpush1.msra.mxu0 0.0
    %150 = vmatprep.subr.mxu0 0.0
    %151 = vmatpush1.msra.mxu0 0.0
    %152 = vmatprep.subr.mxu0 0.0
    %153 = vmatpush1.msra.mxu0 0.0
    %154 = vmatprep.subr.mxu0 0.0
    %155 = vmatpush1.msra.mxu0 0.0
    %156 = vmatprep.subr.mxu0 0.0
    %157 = vmatpush1.msra.mxu0 0.0
    %158 = vmatprep.subr.mxu0 0.0
    %159 = vmatpush1.msra.mxu0 0.0
    %160 = vmatprep.subr.mxu0 0.0
    %161 = vmatpush1.msra.mxu0 0.0
    %162 = vmatprep.subr.mxu0 0.0
    %163 = vmatpush1.msra.mxu0 0.0
    %164 = vmatprep.subr.mxu0 0.0
    %165 = vmatpush1.msra.mxu0 0.0
    %166 = vmatprep.subr.mxu0 0.0
    %167 = vmatpush1.msra.mxu0 0.0
    %168 = vmatprep.subr.mxu0 0.0
    %169 = vmatpush1.msra.mxu0 0.0
    %170 = vmatprep.subr.mxu0 0.0
    %171 = vmatpush1.msra.mxu0 0.0
    %172 = vmatprep.subr.mxu0 0.0
    %173 = vmatpush1.msra.mxu0 0.0
    %174 = vmatprep.subr.mxu0 0.0
    %175 = vmatpush1.msra.mxu0 0.0
    %176 = vmatprep.subr.mxu0 0.0
    %177 = vmatpush1.msra.mxu0 %v73
    %178 = vmatprep.subr.mxu0 0.0
    %179 = vmatpush2.msra.mxu0 0.0
    %180 = vmatprep.subr.mxu0 0.0
    %181 = vmatpush2.msra.mxu0 0.0
    %182 = vmatprep.subr.mxu0 0.0
    %183 = vmatpush2.msra.mxu0 0.0
    %184 = vmatprep.subr.mxu0 0.0
    %185 = vmatpush2.msra.mxu0 0.0
    %186 = vmatprep.subr.mxu0 0.0
    %187 = vmatpush2.msra.mxu0 0.0
    %188 = vmatprep.subr.mxu0 0.0
    %189 = vmatpush2.msra.mxu0 0.0
    %190 = vmatprep.subr.mxu0 0.0
    %191 = vmatpush2.msra.mxu0 0.0
    %192 = vmatprep.subr.mxu0 0.0
    %193 = vmatpush2.msra.mxu0 0.0
    %194 = vmatprep.subr.mxu0 0.0
    %195 = vmatpush2.msra.mxu0 0.0
    %196 = vmatprep.subr.mxu0 0.0
    %197 = vmatpush2.msra.mxu0 0.0
    %198 = vmatprep.subr.mxu0 0.0
    %199 = vmatpush2.msra.mxu0 0.0
    %200 = vmatprep.subr.mxu0 0.0
    %201 = vmatpush2.msra.mxu0 0.0
    %202 = vmatprep.subr.mxu0 0.0
    %203 = vmatpush2.msra.mxu0 0.0
    %204 = vmatprep.subr.mxu0 0.0
    %205 = vmatpush2.msra.mxu0 0.0
    %206 = vmatprep.subr.mxu0 0.0
    %207 = vmatpush2.msra.mxu0 0.0
    %208 = vmatprep.subr.mxu0 0.0
    %209 = vmatpush2.msra.mxu0 0.0
    %210 = vmatprep.mubr.f32.mxu0 0.0
    %211 = vmatmul.mubr.f32.gmra.mxu0 %v66
    %v212 = vpop.f32.mrf.mxu0
    %v213 = vadd.f32 %v47, %v212
    %v214 = vpop.f32.mrf.mxu0
    %215 = vdwg.mxu0
    %v216 = vld [vmem:[%s3] sm:$0x1]
    %v217 = vld [vmem:[%s4] sm:$0xff]
    %v218 = vld [vmem:[%s4 + $0x8] sm:$0xff]
    %v219 = vld [vmem:[%s4 + $0x10] sm:$0xff]
    %v220 = vld [vmem:[%s4 + $0x18] sm:$0xff]
    %v221 = vld [vmem:[%s4 + $0x20] sm:$0xff]
    %v222 = vld [vmem:[%s4 + $0x28] sm:$0xff]
    %v223 = vld [vmem:[%s4 + $0x30] sm:$0xff]
    %v224 = vld [vmem:[%s4 + $0x38] sm:$0xff]
    %v225 = vld [vmem:[%s4 + $0x40] sm:$0xff]
    %v226 = vld [vmem:[%s4 + $0x48] sm:$0xff]
    %v227 = vld [vmem:[%s4 + $0x50] sm:$0xff]
    %v228 = vld [vmem:[%s4 + $0x58] sm:$0xff]
    %v229 = vld [vmem:[%s4 + $0x60] sm:$0xff]
    %v230 = vld [vmem:[%s4 + $0x68] sm:$0xff]
    %v231 = vld [vmem:[%s4 + $0x70] sm:$0xff]
    %v232 = vld [vmem:[%s4 + $0x78] sm:$0xff]
    %v233 = vld [vmem:[%s4 + $0x80] sm:$0xff]
    %v234 = vld [vmem:[%s4 + $0x88] sm:$0xff]
    %v235 = vld [vmem:[%s4 + $0x90] sm:$0xff]
    %v236 = vld [vmem:[%s4 + $0x98] sm:$0xff]
    %v237 = vld [vmem:[%s4 + $0xa0] sm:$0xff]
    %v238 = vld [vmem:[%s4 + $0xa8] sm:$0xff]
    %v239 = vld [vmem:[%s4 + $0xb0] sm:$0xff]
    %v240 = vld [vmem:[%s4 + $0xb8] sm:$0xff]
    %v241 = vld [vmem:[%s4 + $0xc0] sm:$0xff]
    %v242 = vld [vmem:[%s4 + $0xc8] sm:$0xff]
    %v243 = vld [vmem:[%s4 + $0xd0] sm:$0xff]
    %v244 = vld [vmem:[%s4 + $0xd8] sm:$0xff]
    %v245 = vld [vmem:[%s4 + $0xe0] sm:$0xff]
    %v246 = vld [vmem:[%s4 + $0xe8] sm:$0xff]
    %v247 = vld [vmem:[%s4 + $0xf0] sm:$0xff]
    %v248 = vld [vmem:[%s4 + $0xf8] sm:$0xff]
    %v249 = vld [vmem:[%s4 + $0x100] sm:$0xff]
    %v250 = vld [vmem:[%s4 + $0x108] sm:$0xff]
    %v251 = vld [vmem:[%s4 + $0x110] sm:$0xff]
    %v252 = vld [vmem:[%s4 + $0x118] sm:$0xff]
    %v253 = vld [vmem:[%s4 + $0x120] sm:$0xff]
    %v254 = vld [vmem:[%s4 + $0x128] sm:$0xff]
    %v255 = vld [vmem:[%s4 + $0x130] sm:$0xff]
    %v256 = vld [vmem:[%s4 + $0x138] sm:$0xff]
    %v257 = vld [vmem:[%s4 + $0x140] sm:$0xff]
    %v258 = vld [vmem:[%s4 + $0x148] sm:$0xff]
    %v259 = vld [vmem:[%s4 + $0x150] sm:$0xff]
    %v260 = vld [vmem:[%s4 + $0x158] sm:$0xff]
    %v261 = vld [vmem:[%s4 + $0x160] sm:$0xff]
    %v262 = vld [vmem:[%s4 + $0x168] sm:$0xff]
    %v263 = vld [vmem:[%s4 + $0x170] sm:$0xff]
    %v264 = vld [vmem:[%s4 + $0x178] sm:$0xff]
    %v265 = vld [vmem:[%s4 + $0x180] sm:$0xff]
    %v266 = vld [vmem:[%s4 + $0x188] sm:$0xff]
    %v267 = vld [vmem:[%s4 + $0x190] sm:$0xff]
    %v268 = vld [vmem:[%s4 + $0x198] sm:$0xff]
    %v269 = vld [vmem:[%s4 + $0x1a0] sm:$0xff]
    %v270 = vld [vmem:[%s4 + $0x1a8] sm:$0xff]
    %v271 = vld [vmem:[%s4 + $0x1b0] sm:$0xff]
    %v272 = vld [vmem:[%s4 + $0x1b8] sm:$0xff]
    %v273 = vld [vmem:[%s4 + $0x1c0] sm:$0xff]
    %v274 = vld [vmem:[%s4 + $0x1c8] sm:$0xff]
    %v275 = vld [vmem:[%s4 + $0x1d0] sm:$0xff]
    %v276 = vld [vmem:[%s4 + $0x1d8] sm:$0xff]
    %v277 = vld [vmem:[%s4 + $0x1e0] sm:$0xff]
    %v278 = vld [vmem:[%s4 + $0x1e8] sm:$0xff]
    %v279 = vld [vmem:[%s4 + $0x1f0] sm:$0xff]
    %v280 = vld [vmem:[%s4 + $0x1f8] sm:$0xff]
    %v281 = vld [vmem:[%s4 + $0x200] sm:$0xff]
    %v282 = vld [vmem:[%s4 + $0x208] sm:$0xff]
    %v283 = vld [vmem:[%s4 + $0x210] sm:$0xff]
    %v284 = vld [vmem:[%s4 + $0x218] sm:$0xff]
    %v285 = vld [vmem:[%s4 + $0x220] sm:$0xff]
    %v286 = vld [vmem:[%s4 + $0x228] sm:$0xff]
    %v287 = vld [vmem:[%s4 + $0x230] sm:$0xff]
    %v288 = vld [vmem:[%s4 + $0x238] sm:$0xff]
    %v289 = vld [vmem:[%s4 + $0x240] sm:$0xff]
    %v290 = vld [vmem:[%s4 + $0x248] sm:$0xff]
    %v291 = vld [vmem:[%s4 + $0x250] sm:$0xff]
    %v292 = vld [vmem:[%s4 + $0x258] sm:$0xff]
    %v293 = vld [vmem:[%s4 + $0x260] sm:$0xff]
    %v294 = vld [vmem:[%s4 + $0x268] sm:$0xff]
    %v295 = vld [vmem:[%s4 + $0x270] sm:$0xff]
    %v296 = vld [vmem:[%s4 + $0x278] sm:$0xff]
    %v297 = vld [vmem:[%s4 + $0x280] sm:$0xff]
    %v298 = vld [vmem:[%s4 + $0x288] sm:$0xff]
    %v299 = vld [vmem:[%s4 + $0x290] sm:$0xff]
    %v300 = vld [vmem:[%s4 + $0x298] sm:$0xff]
    %v301 = vld [vmem:[%s4 + $0x2a0] sm:$0xff]
    %v302 = vld [vmem:[%s4 + $0x2a8] sm:$0xff]
    %v303 = vld [vmem:[%s4 + $0x2b0] sm:$0xff]
    %v304 = vld [vmem:[%s4 + $0x2b8] sm:$0xff]
    %v305 = vld [vmem:[%s4 + $0x2c0] sm:$0xff]
    %v306 = vld [vmem:[%s4 + $0x2c8] sm:$0xff]
    %v307 = vld [vmem:[%s4 + $0x2d0] sm:$0xff]
    %v308 = vld [vmem:[%s4 + $0x2d8] sm:$0xff]
    %v309 = vld [vmem:[%s4 + $0x2e0] sm:$0xff]
    %v310 = vld [vmem:[%s4 + $0x2e8] sm:$0xff]
    %v311 = vld [vmem:[%s4 + $0x2f0] sm:$0xff]
    %v312 = vld [vmem:[%s4 + $0x2f8] sm:$0xff]
    %v313 = vld [vmem:[%s4 + $0x300] sm:$0xff]
    %v314 = vld [vmem:[%s4 + $0x308] sm:$0xff]
    %v315 = vld [vmem:[%s4 + $0x310] sm:$0xff]
    %v316 = vld [vmem:[%s4 + $0x318] sm:$0xff]
    %v317 = vld [vmem:[%s4 + $0x320] sm:$0xff]
    %v318 = vld [vmem:[%s4 + $0x328] sm:$0xff]
    %v319 = vld [vmem:[%s4 + $0x330] sm:$0xff]
    %v320 = vld [vmem:[%s4 + $0x338] sm:$0xff]
    %v321 = vld [vmem:[%s4 + $0x340] sm:$0xff]
    %v322 = vld [vmem:[%s4 + $0x348] sm:$0xff]
    %v323 = vld [vmem:[%s4 + $0x350] sm:$0xff]
    %v324 = vld [vmem:[%s4 + $0x358] sm:$0xff]
    %v325 = vld [vmem:[%s4 + $0x360] sm:$0xff]
    %v326 = vld [vmem:[%s4 + $0x368] sm:$0xff]
    %v327 = vld [vmem:[%s4 + $0x370] sm:$0xff]
    %v328 = vld [vmem:[%s4 + $0x378] sm:$0xff]
    %v329 = vld [vmem:[%s4 + $0x380] sm:$0xff]
    %v330 = vld [vmem:[%s4 + $0x388] sm:$0xff]
    %v331 = vld [vmem:[%s4 + $0x390] sm:$0xff]
    %v332 = vld [vmem:[%s4 + $0x398] sm:$0xff]
    %v333 = vld [vmem:[%s4 + $0x3a0] sm:$0xff]
    %v334 = vld [vmem:[%s4 + $0x3a8] sm:$0xff]
    %v335 = vld [vmem:[%s4 + $0x3b0] sm:$0xff]
    %v336 = vld [vmem:[%s4 + $0x3b8] sm:$0xff]
    %v337 = vld [vmem:[%s4 + $0x3c0] sm:$0xff]
    %v338 = vld [vmem:[%s4 + $0x3c8] sm:$0xff]
    %v339 = vld [vmem:[%s4 + $0x3d0] sm:$0xff]
    %v340 = vld [vmem:[%s4 + $0x3d8] sm:$0xff]
    %v341 = vld [vmem:[%s4 + $0x3e0] sm:$0xff]
    %v342 = vld [vmem:[%s4 + $0x3e8] sm:$0xff]
    %v343 = vld [vmem:[%s4 + $0x3f0] sm:$0xff]
    %v344 = vld [vmem:[%s4 + $0x3f8] sm:$0xff]
    %v345 = vld [vmem:[%s4 + $0x400] sm:$0xff]
    %v346 = vld [vmem:[%s4 + $0x408] sm:$0xff]
    %v347 = vld [vmem:[%s4 + $0x410] sm:$0xff]
    %v348 = vld [vmem:[%s4 + $0x418] sm:$0xff]
    %v349 = vld [vmem:[%s4 + $0x420] sm:$0xff]
    %v350 = vld [vmem:[%s4 + $0x428] sm:$0xff]
    %v351 = vld [vmem:[%s4 + $0x430] sm:$0xff]
    %v352 = vld [vmem:[%s4 + $0x438] sm:$0xff]
    %v353 = vld [vmem:[%s4 + $0x440] sm:$0xff]
    %v354 = vld [vmem:[%s4 + $0x448] sm:$0xff]
    %v355 = vld [vmem:[%s4 + $0x450] sm:$0xff]
    %v356 = vld [vmem:[%s4 + $0x458] sm:$0xff]
    %v357 = vld [vmem:[%s4 + $0x460] sm:$0xff]
    %v358 = vld [vmem:[%s4 + $0x468] sm:$0xff]
    %v359 = vld [vmem:[%s4 + $0x470] sm:$0xff]
    %v360 = vld [vmem:[%s4 + $0x478] sm:$0xff]
    %v361 = vld [vmem:[%s4 + $0x480] sm:$0xff]
    %v362 = vld [vmem:[%s4 + $0x488] sm:$0xff]
    %v363 = vld [vmem:[%s4 + $0x490] sm:$0xff]
    %v364 = vld [vmem:[%s4 + $0x498] sm:$0xff]
    %v365 = vld [vmem:[%s4 + $0x4a0] sm:$0xff]
    %v366 = vld [vmem:[%s4 + $0x4a8] sm:$0xff]
    %v367 = vld [vmem:[%s4 + $0x4b0] sm:$0xff]
    %v368 = vld [vmem:[%s4 + $0x4b8] sm:$0xff]
    %v369 = vld [vmem:[%s4 + $0x4c0] sm:$0xff]
    %v370 = vld [vmem:[%s4 + $0x4c8] sm:$0xff]
    %v371 = vld [vmem:[%s4 + $0x4d0] sm:$0xff]
    %v372 = vld [vmem:[%s4 + $0x4d8] sm:$0xff]
    %v373 = vld [vmem:[%s4 + $0x4e0] sm:$0xff]
    %v374 = vld [vmem:[%s4 + $0x4e8] sm:$0xff]
    %v375 = vld [vmem:[%s4 + $0x4f0] sm:$0xff]
    %v376 = vld [vmem:[%s4 + $0x4f8] sm:$0xff]
    %v377 = vld [vmem:[%s4 + $0x500] sm:$0xff]
    %v378 = vld [vmem:[%s4 + $0x508] sm:$0xff]
    %v379 = vld [vmem:[%s4 + $0x510] sm:$0xff]
    %v380 = vld [vmem:[%s4 + $0x518] sm:$0xff]
    %v381 = vld [vmem:[%s4 + $0x520] sm:$0xff]
    %v382 = vld [vmem:[%s4 + $0x528] sm:$0xff]
    %v383 = vld [vmem:[%s4 + $0x530] sm:$0xff]
    %v384 = vld [vmem:[%s4 + $0x538] sm:$0xff]
    %v385 = vld [vmem:[%s4 + $0x540] sm:$0xff]
    %v386 = vld [vmem:[%s4 + $0x548] sm:$0xff]
    %v387 = vld [vmem:[%s4 + $0x550] sm:$0xff]
    %v388 = vld [vmem:[%s4 + $0x558] sm:$0xff]
    %v389 = vld [vmem:[%s4 + $0x560] sm:$0xff]
    %v390 = vld [vmem:[%s4 + $0x568] sm:$0xff]
    %v391 = vld [vmem:[%s4 + $0x570] sm:$0xff]
    %v392 = vld [vmem:[%s4 + $0x578] sm:$0xff]
    %v393 = vld [vmem:[%s4 + $0x580] sm:$0xff]
    %v394 = vld [vmem:[%s4 + $0x588] sm:$0xff]
    %v395 = vld [vmem:[%s4 + $0x590] sm:$0xff]
    %v396 = vld [vmem:[%s4 + $0x598] sm:$0xff]
    %v397 = vld [vmem:[%s4 + $0x5a0] sm:$0xff]
    %v398 = vld [vmem:[%s4 + $0x5a8] sm:$0xff]
    %v399 = vld [vmem:[%s4 + $0x5b0] sm:$0xff]
    %v400 = vld [vmem:[%s4 + $0x5b8] sm:$0xff]
    %v401 = vld [vmem:[%s4 + $0x5c0] sm:$0xff]
    %v402 = vld [vmem:[%s4 + $0x5c8] sm:$0xff]
    %v403 = vld [vmem:[%s4 + $0x5d0] sm:$0xff]
    %v404 = vld [vmem:[%s4 + $0x5d8] sm:$0xff]
    %v405 = vld [vmem:[%s4 + $0x5e0] sm:$0xff]
    %v406 = vld [vmem:[%s4 + $0x5e8] sm:$0xff]
    %v407 = vld [vmem:[%s4 + $0x5f0] sm:$0xff]
    %v408 = vld [vmem:[%s4 + $0x5f8] sm:$0xff]
    %v409 = vld [vmem:[%s4 + $0x600] sm:$0xff]
    %v410 = vld [vmem:[%s4 + $0x608] sm:$0xff]
    %v411 = vld [vmem:[%s4 + $0x610] sm:$0xff]
    %v412 = vld [vmem:[%s4 + $0x618] sm:$0xff]
    %v413 = vld [vmem:[%s4 + $0x620] sm:$0xff]
    %v414 = vld [vmem:[%s4 + $0x628] sm:$0xff]
    %v415 = vld [vmem:[%s4 + $0x630] sm:$0xff]
    %v416 = vld [vmem:[%s4 + $0x638] sm:$0xff]
    %v417 = vld [vmem:[%s4 + $0x640] sm:$0xff]
    %v418 = vld [vmem:[%s4 + $0x648] sm:$0xff]
    %v419 = vld [vmem:[%s4 + $0x650] sm:$0xff]
    %v420 = vld [vmem:[%s4 + $0x658] sm:$0xff]
    %v421 = vld [vmem:[%s4 + $0x660] sm:$0xff]
    %v422 = vld [vmem:[%s4 + $0x668] sm:$0xff]
    %v423 = vld [vmem:[%s4 + $0x670] sm:$0xff]
    %v424 = vld [vmem:[%s4 + $0x678] sm:$0xff]
    %v425 = vld [vmem:[%s4 + $0x680] sm:$0xff]
    %v426 = vld [vmem:[%s4 + $0x688] sm:$0xff]
    %v427 = vld [vmem:[%s4 + $0x690] sm:$0xff]
    %v428 = vld [vmem:[%s4 + $0x698] sm:$0xff]
    %v429 = vld [vmem:[%s4 + $0x6a0] sm:$0xff]
    %v430 = vld [vmem:[%s4 + $0x6a8] sm:$0xff]
    %v431 = vld [vmem:[%s4 + $0x6b0] sm:$0xff]
    %v432 = vld [vmem:[%s4 + $0x6b8] sm:$0xff]
    %v433 = vld [vmem:[%s4 + $0x6c0] sm:$0xff]
    %v434 = vld [vmem:[%s4 + $0x6c8] sm:$0xff]
    %v435 = vld [vmem:[%s4 + $0x6d0] sm:$0xff]
    %v436 = vld [vmem:[%s4 + $0x6d8] sm:$0xff]
    %v437 = vld [vmem:[%s4 + $0x6e0] sm:$0xff]
    %v438 = vld [vmem:[%s4 + $0x6e8] sm:$0xff]
    %v439 = vld [vmem:[%s4 + $0x6f0] sm:$0xff]
    %v440 = vld [vmem:[%s4 + $0x6f8] sm:$0xff]
    %v441 = vld [vmem:[%s5] sm:$0xff]
    %v442 = vadd.f32 %v142, 0.0
    %v443 = vxor.u32 %v442, 2147483648
    %v444 = vmul.f32 %v443, 1.442695
    %v445 = vpow.pop %v444
    %v446 = vadd.f32 %v445, 1.0
    %v447 = vrcp.pop %v446
    %v448 = vmul.f32 1.0, %v447
    %v449 = vadd.f32 %v144, 0.0
    %v450 = vxor.u32 %v449, 2147483648
    %v451 = vmul.f32 %v450, 1.442695
    %v452 = vpow.pop %v451
    %v453 = vadd.f32 %v452, 1.0
    %v454 = vrcp.pop %v453
    %v455 = vmul.f32 1.0, %v454
    %v456 = vadd.f32 %v216, 0.0
    %v457 = vmul.f32 %v448, %v456
    %v458 = vadd.f32 %v213, %v457
    %v459 = vtanh.pop %v458
    %v460 = vsub.f32 1.0, %v455
    %v461 = vmul.f32 %v460, %v459
    %v462 = vmul.f32 %v455, 0.0
    %v463 = vadd.f32 %v461, %v462
    %v465 = vlaneseq
    %v466 = vshrl.u32 %v465, 7
    %v467 = vsub.s32 0, %v466
    %v468 = vrot.slane %v441, %v467
    %v469 = vlaneseq
    %v470 = vshrl.u32 %v469, 7
    %v471 = vsub.s32 1, %v470
    %v472 = vrot.slane %v441, %v471
    %v473 = vlaneseq
    %v474 = vshrl.u32 %v473, 7
    %v475 = vsub.s32 2, %v474
    %v476 = vrot.slane %v441, %v475
    %v477 = vlaneseq
    %v478 = vshrl.u32 %v477, 7
    %v479 = vsub.s32 3, %v478
    %v480 = vrot.slane %v441, %v479
    %v481 = vlaneseq
    %v482 = vshrl.u32 %v481, 7
    %v483 = vsub.s32 4, %v482
    %v484 = vrot.slane %v441, %v483
    %v485 = vlaneseq
    %v486 = vshrl.u32 %v485, 7
    %v487 = vsub.s32 5, %v486
    %v488 = vrot.slane %v441, %v487
    %v489 = vlaneseq
    %v490 = vshrl.u32 %v489, 7
    %v491 = vsub.s32 6, %v490
    %v492 = vrot.slane %v441, %v491
    %500 = vmatprep.subr.mxu0 %v323
    %501 = vmatpush1.msra.mxu0 %v322
    %502 = vmatprep.subr.mxu0 %v316
    %503 = vmatpush1.msra.mxu0 %v315
    %504 = vmatprep.subr.mxu0 %v309
    %505 = vmatpush1.msra.mxu0 %v308
    %506 = vmatprep.subr.mxu0 %v302
    %507 = vmatpush1.msra.mxu0 %v301
    %508 = vmatprep.subr.mxu0 %v295
    %509 = vmatpush1.msra.mxu0 %v294
    %510 = vmatprep.subr.mxu0 %v288
    %511 = vmatpush1.msra.mxu0 %v287
    %512 = vmatprep.subr.mxu0 %v281
    %513 = vmatpush1.msra.mxu0 %v280
    %514 = vmatprep.subr.mxu0 %v274
    %515 = vmatpush1.msra.mxu0 %v273
    %516 = vmatprep.subr.mxu0 %v267
    %517 = vmatpush1.msra.mxu0 %v266
    %518 = vmatprep.subr.mxu0 %v260
    %519 = vmatpush1.msra.mxu0 %v259
    %520 = vmatprep.subr.mxu0 %v253
    %521 = vmatpush1.msra.mxu0 %v252
    %522 = vmatprep.subr.mxu0 %v246
    %523 = vmatpush1.msra.mxu0 %v245
    %524 = vmatprep.subr.mxu0 %v239
    %525 = vmatpush1.msra.mxu0 %v238
    %526 = vmatprep.subr.mxu0 %v232
    %527 = vmatpush1.msra.mxu0 %v231
    %528 = vmatprep.subr.mxu0 %v225
    %529 = vmatpush1.msra.mxu0 %v224
    %530 = vmatprep.subr.mxu0 %v218
    %531 = vmatpush1.msra.mxu0 %v217
    %532 = vmatprep.subr.mxu0 %v435
    %533 = vmatpush2.msra.mxu0 %v434
    %534 = vmatprep.subr.mxu0 %v428
    %535 = vmatpush2.msra.mxu0 %v427
    %536 = vmatprep.subr.mxu0 %v421
    %537 = vmatpush2.msra.mxu0 %v420
    %538 = vmatprep.subr.mxu0 %v414
    %539 = vmatpush2.msra.mxu0 %v413
    %540 = vmatprep.subr.mxu0 %v407
    %541 = vmatpush2.msra.mxu0 %v406
    %542 = vmatprep.subr.mxu0 %v400
    %543 = vmatpush2.msra.mxu0 %v399
    %544 = vmatprep.subr.mxu0 %v393
    %545 = vmatpush2.msra.mxu0 %v392
    %546 = vmatprep.subr.mxu0 %v386
    %547 = vmatpush2.msra.mxu0 %v385
    %548 = vmatprep.subr.mxu0 %v379
    %549 = vmatpush2.msra.mxu0 %v378
    %550 = vmatprep.subr.mxu0 %v372
    %551 = vmatpush2.msra.mxu0 %v371
    %552 = vmatprep.subr.mxu0 %v365
    %553 = vmatpush2.msra.mxu0 %v364
    %554 = vmatprep.subr.mxu0 %v358
    %555 = vmatpush2.msra.mxu0 %v357
    %556 = vmatprep.subr.mxu0 %v351
    %557 = vmatpush2.msra.mxu0 %v350
    %558 = vmatprep.subr.mxu0 %v344
    %559 = vmatpush2.msra.mxu0 %v343
    %560 = vmatprep.subr.mxu0 %v337
    %561 = vmatpush2.msra.mxu0 %v336
    %562 = vmatprep.subr.mxu0 %v330
    %563 = vmatpush2.msra.mxu0 %v329
    %564 = vmatprep.mubr.f32.mxu0 0.0
    %565 = vmatmul.mubr.f32.gmra.mxu0 %v463
    %v566 = vpop.f32.mrf.mxu0
    %v567 = vadd.f32 %v468, %v566
    %v568 = vpop.f32.mrf.mxu0
    %v569 = vadd.f32 %v472, %v568
    %570 = vdwg.mxu0
    %571 = vmatprep.subr.mxu0 %v325
    %572 = vmatpush1.msra.mxu0 %v324
    %573 = vmatprep.subr.mxu0 %v318
    %574 = vmatpush1.msra.mxu0 %v317
    %575 = vmatprep.subr.mxu0 %v311
    %576 = vmatpush1.msra.mxu0 %v310
    %577 = vmatprep.subr.mxu0 %v304
    %578 = vmatpush1.msra.mxu0 %v303
    %579 = vmatprep.subr.mxu0 %v297
    %580 = vmatpush1.msra.mxu0 %v296
    %581 = vmatprep.subr.mxu0 %v290
    %582 = vmatpush1.msra.mxu0 %v289
    %583 = vmatprep.subr.mxu0 %v283
    %584 = vmatpush1.msra.mxu0 %v282
    %585 = vmatprep.subr.mxu0 %v276
    %586 = vmatpush1.msra.mxu0 %v275
    %587 = vmatprep.subr.mxu0 %v269
    %588 = vmatpush1.msra.mxu0 %v268
    %589 = vmatprep.subr.mxu0 %v262
    %590 = vmatpush1.msra.mxu0 %v261
    %591 = vmatprep.subr.mxu0 %v255
    %592 = vmatpush1.msra.mxu0 %v254
    %593 = vmatprep.subr.mxu0 %v248
    %594 = vmatpush1.msra.mxu0 %v247
    %595 = vmatprep.subr.mxu0 %v241
    %596 = vmatpush1.msra.mxu0 %v240
    %597 = vmatprep.subr.mxu0 %v234
    %598 = vmatpush1.msra.mxu0 %v233
    %599 = vmatprep.subr.mxu0 %v227
    %600 = vmatpush1.msra.mxu0 %v226
    %601 = vmatprep.subr.mxu0 %v220
    %602 = vmatpush1.msra.mxu0 %v219
    %603 = vmatprep.subr.mxu0 %v437
    %604 = vmatpush2.msra.mxu0 %v436
    %605 = vmatprep.subr.mxu0 %v430
    %606 = vmatpush2.msra.mxu0 %v429
    %607 = vmatprep.subr.mxu0 %v423
    %608 = vmatpush2.msra.mxu0 %v422
    %609 = vmatprep.subr.mxu0 %v416
    %610 = vmatpush2.msra.mxu0 %v415
    %611 = vmatprep.subr.mxu0 %v409
    %612 = vmatpush2.msra.mxu0 %v408
    %613 = vmatprep.subr.mxu0 %v402
    %614 = vmatpush2.msra.mxu0 %v401
    %615 = vmatprep.subr.mxu0 %v395
    %616 = vmatpush2.msra.mxu0 %v394
    %617 = vmatprep.subr.mxu0 %v388
    %618 = vmatpush2.msra.mxu0 %v387
    %619 = vmatprep.subr.mxu0 %v381
    %620 = vmatpush2.msra.mxu0 %v380
    %621 = vmatprep.subr.mxu0 %v374
    %622 = vmatpush2.msra.mxu0 %v373
    %623 = vmatprep.subr.mxu0 %v367
    %624 = vmatpush2.msra.mxu0 %v366
    %625 = vmatprep.subr.mxu0 %v360
    %626 = vmatpush2.msra.mxu0 %v359
    %627 = vmatprep.subr.mxu0 %v353
    %628 = vmatpush2.msra.mxu0 %v352
    %629 = vmatprep.subr.mxu0 %v346
    %630 = vmatpush2.msra.mxu0 %v345
    %631 = vmatprep.subr.mxu0 %v339
    %632 = vmatpush2.msra.mxu0 %v338
    %633 = vmatprep.subr.mxu0 %v332
    %634 = vmatpush2.msra.mxu0 %v331
    %635 = vmatprep.mubr.f32.mxu0 0.0
    %636 = vmatmul.mubr.f32.gmra.mxu0 %v463
    %v637 = vpop.f32.mrf.mxu0
    %v638 = vadd.f32 %v476, %v637
    %v639 = vpop.f32.mrf.mxu0
    %v640 = vadd.f32 %v480, %v639
    %641 = vdwg.mxu0
    %642 = vmatprep.subr.mxu0 %v327
    %643 = vmatpush1.msra.mxu0 %v326
    %644 = vmatprep.subr.mxu0 %v320
    %645 = vmatpush1.msra.mxu0 %v319
    %646 = vmatprep.subr.mxu0 %v313
    %647 = vmatpush1.msra.mxu0 %v312
    %648 = vmatprep.subr.mxu0 %v306
    %649 = vmatpush1.msra.mxu0 %v305
    %650 = vmatprep.subr.mxu0 %v299
    %651 = vmatpush1.msra.mxu0 %v298
    %652 = vmatprep.subr.mxu0 %v292
    %653 = vmatpush1.msra.mxu0 %v291
    %654 = vmatprep.subr.mxu0 %v285
    %655 = vmatpush1.msra.mxu0 %v284
    %656 = vmatprep.subr.mxu0 %v278
    %657 = vmatpush1.msra.mxu0 %v277
    %658 = vmatprep.subr.mxu0 %v271
    %659 = vmatpush1.msra.mxu0 %v270
    %660 = vmatprep.subr.mxu0 %v264
    %661 = vmatpush1.msra.mxu0 %v263
    %662 = vmatprep.subr.mxu0 %v257
    %663 = vmatpush1.msra.mxu0 %v256
    %664 = vmatprep.subr.mxu0 %v250
    %665 = vmatpush1.msra.mxu0 %v249
    %666 = vmatprep.subr.mxu0 %v243
    %667 = vmatpush1.msra.mxu0 %v242
    %668 = vmatprep.subr.mxu0 %v236
    %669 = vmatpush1.msra.mxu0 %v235
    %670 = vmatprep.subr.mxu0 %v229
    %671 = vmatpush1.msra.mxu0 %v228
    %672 = vmatprep.subr.mxu0 %v222
    %673 = vmatpush1.msra.mxu0 %v221
    %674 = vmatprep.subr.mxu0 %v439
    %675 = vmatpush2.msra.mxu0 %v438
    %676 = vmatprep.subr.mxu0 %v432
    %677 = vmatpush2.msra.mxu0 %v431
    %678 = vmatprep.subr.mxu0 %v425
    %679 = vmatpush2.msra.mxu0 %v424
    %680 = vmatprep.subr.mxu0 %v418
    %681 = vmatpush2.msra.mxu0 %v417
    %682 = vmatprep.subr.mxu0 %v411
    %683 = vmatpush2.msra.mxu0 %v410
    %684 = vmatprep.subr.mxu0 %v404
    %685 = vmatpush2.msra.mxu0 %v403
    %686 = vmatprep.subr.mxu0 %v397
    %687 = vmatpush2.msra.mxu0 %v396
    %688 = vmatprep.subr.mxu0 %v390
    %689 = vmatpush2.msra.mxu0 %v389
    %690 = vmatprep.subr.mxu0 %v383
    %691 = vmatpush2.msra.mxu0 %v382
    %692 = vmatprep.subr.mxu0 %v376
    %693 = vmatpush2.msra.mxu0 %v375
    %694 = vmatprep.subr.mxu0 %v369
    %695 = vmatpush2.msra.mxu0 %v368
    %696 = vmatprep.subr.mxu0 %v362
    %697 = vmatpush2.msra.mxu0 %v361
    %698 = vmatprep.subr.mxu0 %v355
    %699 = vmatpush2.msra.mxu0 %v354
    %700 = vmatprep.subr.mxu0 %v348
    %701 = vmatpush2.msra.mxu0 %v347
    %702 = vmatprep.subr.mxu0 %v341
    %703 = vmatpush2.msra.mxu0 %v340
    %704 = vmatprep.subr.mxu0 %v334
    %705 = vmatpush2.msra.mxu0 %v333
    %706 = vmatprep.mubr.f32.mxu0 0.0
    %707 = vmatmul.mubr.f32.gmra.mxu0 %v463
    %v708 = vpop.f32.mrf.mxu0
    %v709 = vadd.f32 %v484, %v708
    %v710 = vpop.f32.mrf.mxu0
    %v711 = vadd.f32 %v488, %v710
    %712 = vdwg.mxu0
    %713 = vmatprep.subr.mxu0 0.0
    %714 = vmatpush1.msra.mxu0 %v328
    %715 = vmatprep.subr.mxu0 0.0
    %716 = vmatpush1.msra.mxu0 %v321
    %717 = vmatprep.subr.mxu0 0.0
    %718 = vmatpush1.msra.mxu0 %v314
    %719 = vmatprep.subr.mxu0 0.0
    %720 = vmatpush1.msra.mxu0 %v307
    %721 = vmatprep.subr.mxu0 0.0
    %722 = vmatpush1.msra.mxu0 %v300
    %723 = vmatprep.subr.mxu0 0.0
    %724 = vmatpush1.msra.mxu0 %v293
    %725 = vmatprep.subr.mxu0 0.0
    %726 = vmatpush1.msra.mxu0 %v286
    %727 = vmatprep.subr.mxu0 0.0
    %728 = vmatpush1.msra.mxu0 %v279
    %729 = vmatprep.subr.mxu0 0.0
    %730 = vmatpush1.msra.mxu0 %v272
    %731 = vmatprep.subr.mxu0 0.0
    %732 = vmatpush1.msra.mxu0 %v265
    %733 = vmatprep.subr.mxu0 0.0
    %734 = vmatpush1.msra.mxu0 %v258
    %735 = vmatprep.subr.mxu0 0.0
    %736 = vmatpush1.msra.mxu0 %v251
    %737 = vmatprep.subr.mxu0 0.0
    %738 = vmatpush1.msra.mxu0 %v244
    %739 = vmatprep.subr.mxu0 0.0
    %740 = vmatpush1.msra.mxu0 %v237
    %741 = vmatprep.subr.mxu0 0.0
    %742 = vmatpush1.msra.mxu0 %v230
    %743 = vmatprep.subr.mxu0 0.0
    %744 = vmatpush1.msra.mxu0 %v223
    %745 = vmatprep.subr.mxu0 0.0
    %746 = vmatpush2.msra.mxu0 %v440
    %747 = vmatprep.subr.mxu0 0.0
    %748 = vmatpush2.msra.mxu0 %v433
    %749 = vmatprep.subr.mxu0 0.0
    %750 = vmatpush2.msra.mxu0 %v426
    %751 = vmatprep.subr.mxu0 0.0
    %752 = vmatpush2.msra.mxu0 %v419
    %753 = vmatprep.subr.mxu0 0.0
    %754 = vmatpush2.msra.mxu0 %v412
    %755 = vmatprep.subr.mxu0 0.0
    %756 = vmatpush2.msra.mxu0 %v405
    %757 = vmatprep.subr.mxu0 0.0
    %758 = vmatpush2.msra.mxu0 %v398
    %759 = vmatprep.subr.mxu0 0.0
    %760 = vmatpush2.msra.mxu0 %v391
    %761 = vmatprep.subr.mxu0 0.0
    %762 = vmatpush2.msra.mxu0 %v384
    %763 = vmatprep.subr.mxu0 0.0
    %764 = vmatpush2.msra.mxu0 %v377
    %765 = vmatprep.subr.mxu0 0.0
    %766 = vmatpush2.msra.mxu0 %v370
    %767 = vmatprep.subr.mxu0 0.0
    %768 = vmatpush2.msra.mxu0 %v363
    %769 = vmatprep.subr.mxu0 0.0
    %770 = vmatpush2.msra.mxu0 %v356
    %771 = vmatprep.subr.mxu0 0.0
    %772 = vmatpush2.msra.mxu0 %v349
    %773 = vmatprep.subr.mxu0 0.0
    %774 = vmatpush2.msra.mxu0 %v342
    %775 = vmatprep.subr.mxu0 0.0
    %776 = vmatpush2.msra.mxu0 %v335
    %777 = vmatprep.mubr.f32.mxu0 0.0
    %778 = vmatmul.mubr.f32.gmra.mxu0 %v463
    %v779 = vpop.f32.mrf.mxu0
    %v780 = vadd.f32 %v492, %v779
    %v781 = vpop.f32.mrf.mxu0
    %782 = vdwg.mxu0
    %v783 = vxor.u32 %v567, 2147483648
    %v784 = vmul.f32 %v783, 1.442695
    %v785 = vpow.pop %v784
    %v786 = vadd.f32 %v785, 1.0
    %v787 = vrcp.pop %v786
    %v788 = vmul.f32 1.0, %v787
    %v789 = vxor.u32 %v569, 2147483648
    %v790 = vmul.f32 %v789, 1.442695
    %v791 = vpow.pop %v790
    %v792 = vadd.f32 %v791, 1.0
    %v793 = vrcp.pop %v792
    %v794 = vmul.f32 1.0, %v793
    %v795 = vmul.f32 %v788, %v640
    %v796 = vadd.f32 %v638, %v795
    %v797 = vtanh.pop %v796
    %v798 = vsub.f32 1.0, %v794
    %v799 = vmul.f32 %v798, %v797
    %v800 = vmul.f32 %v794, 0.0
    %v801 = vadd.f32 %v799, %v800
    %v803 = vrot.slane %v709, 7
    %v805 = vadd.f32 %v142, %v803
    %v806 = vxor.u32 %v805, 2147483648
    %v807 = vmul.f32 %v806, 1.442695
    %v808 = vpow.pop %v807
    %v809 = vadd.f32 %v808, 1.0
    %v810 = vrcp.pop %v809
    %v811 = vmul.f32 1.0, %v810
    %v813 = vrot.slane %v711, 7
    %v815 = vadd.f32 %v144, %v813
    %v816 = vxor.u32 %v815, 2147483648
    %v817 = vmul.f32 %v816, 1.442695
    %v818 = vpow.pop %v817
    %v819 = vadd.f32 %v818, 1.0
    %v820 = vrcp.pop %v819
    %v821 = vmul.f32 1.0, %v820
    %v822 = vadd.f32 %v780, %v216
    %v824 = vrot.slane %v822, 7
    %v826 = vmul.f32 %v811, %v824
    %v827 = vadd.f32 %v213, %v826
    %v828 = vtanh.pop %v827
    %v829 = vsub.f32 1.0, %v821
    %v830 = vmul.f32 %v829, %v828
    %v832 = vrot.slane %v463, 7
    %v834 = vmul.f32 %v821, %v832
    %v835 = vadd.f32 %v830, %v834
    %v837 = vrot.slane %v801, 7
    %v839 = vrot.slane %v835, 1
    %v840 = vrot.slane %v837, 1
    %843 = vmatprep.subr.mxu0 %v323
    %844 = vmatpush1.msra.mxu0 %v322
    %845 = vmatprep.subr.mxu0 %v316
    %846 = vmatpush1.msra.mxu0 %v315
    %847 = vmatprep.subr.mxu0 %v309
    %848 = vmatpush1.msra.mxu0 %v308
    %849 = vmatprep.subr.mxu0 %v302
    %850 = vmatpush1.msra.mxu0 %v301
    %851 = vmatprep.subr.mxu0 %v295
    %852 = vmatpush1.msra.mxu0 %v294
    %853 = vmatprep.subr.mxu0 %v288
    %854 = vmatpush1.msra.mxu0 %v287
    %855 = vmatprep.subr.mxu0 %v281
    %856 = vmatpush1.msra.mxu0 %v280
    %857 = vmatprep.subr.mxu0 %v274
    %858 = vmatpush1.msra.mxu0 %v273
    %859 = vmatprep.subr.mxu0 %v267
    %860 = vmatpush1.msra.mxu0 %v266
    %861 = vmatprep.subr.mxu0 %v260
    %862 = vmatpush1.msra.mxu0 %v259
    %863 = vmatprep.subr.mxu0 %v253
    %864 = vmatpush1.msra.mxu0 %v252
    %865 = vmatprep.subr.mxu0 %v246
    %866 = vmatpush1.msra.mxu0 %v245
    %867 = vmatprep.subr.mxu0 %v239
    %868 = vmatpush1.msra.mxu0 %v238
    %869 = vmatprep.subr.mxu0 %v232
    %870 = vmatpush1.msra.mxu0 %v231
    %871 = vmatprep.subr.mxu0 %v225
    %872 = vmatpush1.msra.mxu0 %v224
    %873 = vmatprep.subr.mxu0 %v218
    %874 = vmatpush1.msra.mxu0 %v217
    %875 = vmatprep.subr.mxu0 %v435
    %876 = vmatpush2.msra.mxu0 %v434
    %877 = vmatprep.subr.mxu0 %v428
    %878 = vmatpush2.msra.mxu0 %v427
    %879 = vmatprep.subr.mxu0 %v421
    %880 = vmatpush2.msra.mxu0 %v420
    %881 = vmatprep.subr.mxu0 %v414
    %882 = vmatpush2.msra.mxu0 %v413
    %883 = vmatprep.subr.mxu0 %v407
    %884 = vmatpush2.msra.mxu0 %v406
    %885 = vmatprep.subr.mxu0 %v400
    %886 = vmatpush2.msra.mxu0 %v399
    %887 = vmatprep.subr.mxu0 %v393
    %888 = vmatpush2.msra.mxu0 %v392
    %889 = vmatprep.subr.mxu0 %v386
    %890 = vmatpush2.msra.mxu0 %v385
    %891 = vmatprep.subr.mxu0 %v379
    %892 = vmatpush2.msra.mxu0 %v378
    %893 = vmatprep.subr.mxu0 %v372
    %894 = vmatpush2.msra.mxu0 %v371
    %895 = vmatprep.subr.mxu0 %v365
    %896 = vmatpush2.msra.mxu0 %v364
    %897 = vmatprep.subr.mxu0 %v358
    %898 = vmatpush2.msra.mxu0 %v357
    %899 = vmatprep.subr.mxu0 %v351
    %900 = vmatpush2.msra.mxu0 %v350
    %901 = vmatprep.subr.mxu0 %v344
    %902 = vmatpush2.msra.mxu0 %v343
    %903 = vmatprep.subr.mxu0 %v337
    %904 = vmatpush2.msra.mxu0 %v336
    %905 = vmatprep.subr.mxu0 %v330
    %906 = vmatpush2.msra.mxu0 %v329
    %907 = vmatprep.mubr.f32.mxu0 %v840
    %908 = vmatmul.mubr.f32.gmra.mxu0 %v839
    %v909 = vpop.f32.mrf.mxu0
    %v910 = vadd.f32 %v468, %v909
    %v911 = vpop.f32.mrf.mxu0
    %v912 = vadd.f32 %v472, %v911
    %913 = vdwg.mxu0
    %914 = vmatprep.subr.mxu0 %v325
    %915 = vmatpush1.msra.mxu0 %v324
    %916 = vmatprep.subr.mxu0 %v318
    %917 = vmatpush1.msra.mxu0 %v317
    %918 = vmatprep.subr.mxu0 %v311
    %919 = vmatpush1.msra.mxu0 %v310
    %920 = vmatprep.subr.mxu0 %v304
    %921 = vmatpush1.msra.mxu0 %v303
    %922 = vmatprep.subr.mxu0 %v297
    %923 = vmatpush1.msra.mxu0 %v296
    %924 = vmatprep.subr.mxu0 %v290
    %925 = vmatpush1.msra.mxu0 %v289
    %926 = vmatprep.subr.mxu0 %v283
    %927 = vmatpush1.msra.mxu0 %v282
    %928 = vmatprep.subr.mxu0 %v276
    %929 = vmatpush1.msra.mxu0 %v275
    %930 = vmatprep.subr.mxu0 %v269
    %931 = vmatpush1.msra.mxu0 %v268
    %932 = vmatprep.subr.mxu0 %v262
    %933 = vmatpush1.msra.mxu0 %v261
    %934 = vmatprep.subr.mxu0 %v255
    %935 = vmatpush1.msra.mxu0 %v254
    %936 = vmatprep.subr.mxu0 %v248
    %937 = vmatpush1.msra.mxu0 %v247
    %938 = vmatprep.subr.mxu0 %v241
    %939 = vmatpush1.msra.mxu0 %v240
    %940 = vmatprep.subr.mxu0 %v234
    %941 = vmatpush1.msra.mxu0 %v233
    %942 = vmatprep.subr.mxu0 %v227
    %943 = vmatpush1.msra.mxu0 %v226
    %944 = vmatprep.subr.mxu0 %v220
    %945 = vmatpush1.msra.mxu0 %v219
    %946 = vmatprep.subr.mxu0 %v437
    %947 = vmatpush2.msra.mxu0 %v436
    %948 = vmatprep.subr.mxu0 %v430
    %949 = vmatpush2.msra.mxu0 %v429
    %950 = vmatprep.subr.mxu0 %v423
    %951 = vmatpush2.msra.mxu0 %v422
    %952 = vmatprep.subr.mxu0 %v416
    %953 = vmatpush2.msra.mxu0 %v415
    %954 = vmatprep.subr.mxu0 %v409
    %955 = vmatpush2.msra.mxu0 %v408
    %956 = vmatprep.subr.mxu0 %v402
    %957 = vmatpush2.msra.mxu0 %v401
    %958 = vmatprep.subr.mxu0 %v395
    %959 = vmatpush2.msra.mxu0 %v394
    %960 = vmatprep.subr.mxu0 %v388
    %961 = vmatpush2.msra.mxu0 %v387
    %962 = vmatprep.subr.mxu0 %v381
    %963 = vmatpush2.msra.mxu0 %v380
    %964 = vmatprep.subr.mxu0 %v374
    %965 = vmatpush2.msra.mxu0 %v373
    %966 = vmatprep.subr.mxu0 %v367
    %967 = vmatpush2.msra.mxu0 %v366
    %968 = vmatprep.subr.mxu0 %v360
    %969 = vmatpush2.msra.mxu0 %v359
    %970 = vmatprep.subr.mxu0 %v353
    %971 = vmatpush2.msra.mxu0 %v352
    %972 = vmatprep.subr.mxu0 %v346
    %973 = vmatpush2.msra.mxu0 %v345
    %974 = vmatprep.subr.mxu0 %v339
    %975 = vmatpush2.msra.mxu0 %v338
    %976 = vmatprep.subr.mxu0 %v332
    %977 = vmatpush2.msra.mxu0 %v331
    %978 = vmatprep.mubr.f32.mxu0 %v840
    %979 = vmatmul.mubr.f32.gmra.mxu0 %v839
    %v980 = vpop.f32.mrf.mxu0
    %v981 = vadd.f32 %v476, %v980
    %v982 = vpop.f32.mrf.mxu0
    %v983 = vadd.f32 %v480, %v982
    %984 = vdwg.mxu0
    %985 = vmatprep.subr.mxu0 %v327
    %986 = vmatpush1.msra.mxu0 %v326
    %987 = vmatprep.subr.mxu0 %v320
    %988 = vmatpush1.msra.mxu0 %v319
    %989 = vmatprep.subr.mxu0 %v313
    %990 = vmatpush1.msra.mxu0 %v312
    %991 = vmatprep.subr.mxu0 %v306
    %992 = vmatpush1.msra.mxu0 %v305
    %993 = vmatprep.subr.mxu0 %v299
    %994 = vmatpush1.msra.mxu0 %v298
    %995 = vmatprep.subr.mxu0 %v292
    %996 = vmatpush1.msra.mxu0 %v291
    %997 = vmatprep.subr.mxu0 %v285
    %998 = vmatpush1.msra.mxu0 %v284
    %999 = vmatprep.subr.mxu0 %v278
    %1000 = vmatpush1.msra.mxu0 %v277
    %1001 = vmatprep.subr.mxu0 %v271
    %1002 = vmatpush1.msra.mxu0 %v270
    %1003 = vmatprep.subr.mxu0 %v264
    %1004 = vmatpush1.msra.mxu0 %v263
    %1005 = vmatprep.subr.mxu0 %v257
    %1006 = vmatpush1.msra.mxu0 %v256
    %1007 = vmatprep.subr.mxu0 %v250
    %1008 = vmatpush1.msra.mxu0 %v249
    %1009 = vmatprep.subr.mxu0 %v243
    %1010 = vmatpush1.msra.mxu0 %v242
    %1011 = vmatprep.subr.mxu0 %v236
    %1012 = vmatpush1.msra.mxu0 %v235
    %1013 = vmatprep.subr.mxu0 %v229
    %1014 = vmatpush1.msra.mxu0 %v228
    %1015 = vmatprep.subr.mxu0 %v222
    %1016 = vmatpush1.msra.mxu0 %v221
    %1017 = vmatprep.subr.mxu0 %v439
    %1018 = vmatpush2.msra.mxu0 %v438
    %1019 = vmatprep.subr.mxu0 %v432
    %1020 = vmatpush2.msra.mxu0 %v431
    %1021 = vmatprep.subr.mxu0 %v425
    %1022 = vmatpush2.msra.mxu0 %v424
    %1023 = vmatprep.subr.mxu0 %v418
    %1024 = vmatpush2.msra.mxu0 %v417
    %1025 = vmatprep.subr.mxu0 %v411
    %1026 = vmatpush2.msra.mxu0 %v410
    %1027 = vmatprep.subr.mxu0 %v404
    %1028 = vmatpush2.msra.mxu0 %v403
    %1029 = vmatprep.subr.mxu0 %v397
    %1030 = vmatpush2.msra.mxu0 %v396
    %1031 = vmatprep.subr.mxu0 %v390
    %1032 = vmatpush2.msra.mxu0 %v389
    %1033 = vmatprep.subr.mxu0 %v383
    %1034 = vmatpush2.msra.mxu0 %v382
    %1035 = vmatprep.subr.mxu0 %v376
    %1036 = vmatpush2.msra.mxu0 %v375
    %1037 = vmatprep.subr.mxu0 %v369
    %1038 = vmatpush2.msra.mxu0 %v368
    %1039 = vmatprep.subr.mxu0 %v362
    %1040 = vmatpush2.msra.mxu0 %v361
    %1041 = vmatprep.subr.mxu0 %v355
    %1042 = vmatpush2.msra.mxu0 %v354
    %1043 = vmatprep.subr.mxu0 %v348
    %1044 = vmatpush2.msra.mxu0 %v347
    %1045 = vmatprep.subr.mxu0 %v341
    %1046 = vmatpush2.msra.mxu0 %v340
    %1047 = vmatprep.subr.mxu0 %v334
    %1048 = vmatpush2.msra.mxu0 %v333
    %1049 = vmatprep.mubr.f32.mxu0 %v840
    %1050 = vmatmul.mubr.f32.gmra.mxu0 %v839
    %v1051 = vpop.f32.mrf.mxu0
    %v1052 = vadd.f32 %v484, %v1051
    %v1053 = vpop.f32.mrf.mxu0
    %v1054 = vadd.f32 %v488, %v1053
    %1055 = vdwg.mxu0
    %1056 = vmatprep.subr.mxu0 0.0
    %1057 = vmatpush1.msra.mxu0 %v328
    %1058 = vmatprep.subr.mxu0 0.0
    %1059 = vmatpush1.msra.mxu0 %v321
    %1060 = vmatprep.subr.mxu0 0.0
    %1061 = vmatpush1.msra.mxu0 %v314
    %1062 = vmatprep.subr.mxu0 0.0
    %1063 = vmatpush1.msra.mxu0 %v307
    %1064 = vmatprep.subr.mxu0 0.0
    %1065 = vmatpush1.msra.mxu0 %v300
    %1066 = vmatprep.subr.mxu0 0.0
    %1067 = vmatpush1.msra.mxu0 %v293
    %1068 = vmatprep.subr.mxu0 0.0
    %1069 = vmatpush1.msra.mxu0 %v286
    %1070 = vmatprep.subr.mxu0 0.0
    %1071 = vmatpush1.msra.mxu0 %v279
    %1072 = vmatprep.subr.mxu0 0.0
    %1073 = vmatpush1.msra.mxu0 %v272
    %1074 = vmatprep.subr.mxu0 0.0
    %1075 = vmatpush1.msra.mxu0 %v265
    %1076 = vmatprep.subr.mxu0 0.0
    %1077 = vmatpush1.msra.mxu0 %v258
    %1078 = vmatprep.subr.mxu0 0.0
    %1079 = vmatpush1.msra.mxu0 %v251
    %1080 = vmatprep.subr.mxu0 0.0
    %1081 = vmatpush1.msra.mxu0 %v244
    %1082 = vmatprep.subr.mxu0 0.0
    %1083 = vmatpush1.msra.mxu0 %v237
    %1084 = vmatprep.subr.mxu0 0.0
    %1085 = vmatpush1.msra.mxu0 %v230
    %1086 = vmatprep.subr.mxu0 0.0
    %1087 = vmatpush1.msra.mxu0 %v223
    %1088 = vmatprep.subr.mxu0 0.0
    %1089 = vmatpush2.msra.mxu0 %v440
    %1090 = vmatprep.subr.mxu0 0.0
    %1091 = vmatpush2.msra.mxu0 %v433
    %1092 = vmatprep.subr.mxu0 0.0
    %1093 = vmatpush2.msra.mxu0 %v426
    %1094 = vmatprep.subr.mxu0 0.0
    %1095 = vmatpush2.msra.mxu0 %v419
    %1096 = vmatprep.subr.mxu0 0.0
    %1097 = vmatpush2.msra.mxu0 %v412
    %1098 = vmatprep.subr.mxu0 0.0
    %1099 = vmatpush2.msra.mxu0 %v405
    %1100 = vmatprep.subr.mxu0 0.0
    %1101 = vmatpush2.msra.mxu0 %v398
    %1102 = vmatprep.subr.mxu0 0.0
    %1103 = vmatpush2.msra.mxu0 %v391
    %1104 = vmatprep.subr.mxu0 0.0
    %1105 = vmatpush2.msra.mxu0 %v384
    %1106 = vmatprep.subr.mxu0 0.0
    %1107 = vmatpush2.msra.mxu0 %v377
    %1108 = vmatprep.subr.mxu0 0.0
    %1109 = vmatpush2.msra.mxu0 %v370
    %1110 = vmatprep.subr.mxu0 0.0
    %1111 = vmatpush2.msra.mxu0 %v363
    %1112 = vmatprep.subr.mxu0 0.0
    %1113 = vmatpush2.msra.mxu0 %v356
    %1114 = vmatprep.subr.mxu0 0.0
    %1115 = vmatpush2.msra.mxu0 %v349
    %1116 = vmatprep.subr.mxu0 0.0
    %1117 = vmatpush2.msra.mxu0 %v342
    %1118 = vmatprep.subr.mxu0 0.0
    %1119 = vmatpush2.msra.mxu0 %v335
    %1120 = vmatprep.mubr.f32.mxu0 %v840
    %1121 = vmatmul.mubr.f32.gmra.mxu0 %v839
    %v1122 = vpop.f32.mrf.mxu0
    %v1123 = vadd.f32 %v492, %v1122
    %v1124 = vpop.f32.mrf.mxu0
    %1125 = vdwg.mxu0
    %v1126 = vxor.u32 %v910, 2147483648
    %v1127 = vmul.f32 %v1126, 1.442695
    %v1128 = vpow.pop %v1127
    %v1129 = vadd.f32 %v1128, 1.0
    %v1130 = vrcp.pop %v1129
    %v1131 = vmul.f32 1.0, %v1130
    %v1132 = vxor.u32 %v912, 2147483648
    %v1133 = vmul.f32 %v1132, 1.442695
    %v1134 = vpow.pop %v1133
    %v1135 = vadd.f32 %v1134, 1.0
    %v1136 = vrcp.pop %v1135
    %v1137 = vmul.f32 1.0, %v1136
    %v1138 = vmul.f32 %v1131, %v983
    %v1139 = vadd.f32 %v981, %v1138
    %v1140 = vtanh.pop %v1139
    %v1141 = vsub.f32 1.0, %v1137
    %v1142 = vmul.f32 %v1141, %v1140
    %v1143 = vmul.f32 %v1137, %v801
    %v1144 = vadd.f32 %v1142, %v1143
    %v1146 = vrot.slane %v1052, 6
    %v1148 = vadd.f32 %v142, %v1146
    %v1149 = vxor.u32 %v1148, 2147483648
    %v1150 = vmul.f32 %v1149, 1.442695
    %v1151 = vpow.pop %v1150
    %v1152 = vadd.f32 %v1151, 1.0
    %v1153 = vrcp.pop %v1152
    %v1154 = vmul.f32 1.0, %v1153
    %v1156 = vrot.slane %v1054, 6
    %v1158 = vadd.f32 %v144, %v1156
    %v1159 = vxor.u32 %v1158, 2147483648
    %v1160 = vmul.f32 %v1159, 1.442695
    %v1161 = vpow.pop %v1160
    %v1162 = vadd.f32 %v1161, 1.0
    %v1163 = vrcp.pop %v1162
    %v1164 = vmul.f32 1.0, %v1163
    %v1165 = vadd.f32 %v1123, %v216
    %v1167 = vrot.slane %v1165, 6
    %v1169 = vmul.f32 %v1154, %v1167
    %v1170 = vadd.f32 %v213, %v1169
    %v1171 = vtanh.pop %v1170
    %v1172 = vsub.f32 1.0, %v1164
    %v1173 = vmul.f32 %v1172, %v1171
    %v1174 = vrot.slane %v835, 7
    %v1176 = vmul.f32 %v1164, %v1174
    %v1177 = vadd.f32 %v1173, %v1176
    %v1179 = vrot.slane %v1144, 6
    %v1181 = vrot.slane %v1177, 2
    %v1182 = vrot.slane %v1179, 2
    %1185 = vmatprep.subr.mxu0 %v323
    %1186 = vmatpush1.msra.mxu0 %v322
    %1187 = vmatprep.subr.mxu0 %v316
    %1188 = vmatpush1.msra.mxu0 %v315
    %1189 = vmatprep.subr.mxu0 %v309
    %1190 = vmatpush1.msra.mxu0 %v308
    %1191 = vmatprep.subr.mxu0 %v302
    %1192 = vmatpush1.msra.mxu0 %v301
    %1193 = vmatprep.subr.mxu0 %v295
    %1194 = vmatpush1.msra.mxu0 %v294
    %1195 = vmatprep.subr.mxu0 %v288
    %1196 = vmatpush1.msra.mxu0 %v287
    %1197 = vmatprep.subr.mxu0 %v281
    %1198 = vmatpush1.msra.mxu0 %v280
    %1199 = vmatprep.subr.mxu0 %v274
    %1200 = vmatpush1.msra.mxu0 %v273
    %1201 = vmatprep.subr.mxu0 %v267
    %1202 = vmatpush1.msra.mxu0 %v266
    %1203 = vmatprep.subr.mxu0 %v260
    %1204 = vmatpush1.msra.mxu0 %v259
    %1205 = vmatprep.subr.mxu0 %v253
    %1206 = vmatpush1.msra.mxu0 %v252
    %1207 = vmatprep.subr.mxu0 %v246
    %1208 = vmatpush1.msra.mxu0 %v245
    %1209 = vmatprep.subr.mxu0 %v239
    %1210 = vmatpush1.msra.mxu0 %v238
    %1211 = vmatprep.subr.mxu0 %v232
    %1212 = vmatpush1.msra.mxu0 %v231
    %1213 = vmatprep.subr.mxu0 %v225
    %1214 = vmatpush1.msra.mxu0 %v224
    %1215 = vmatprep.subr.mxu0 %v218
    %1216 = vmatpush1.msra.mxu0 %v217
    %1217 = vmatprep.subr.mxu0 %v435
    %1218 = vmatpush2.msra.mxu0 %v434
    %1219 = vmatprep.subr.mxu0 %v428
    %1220 = vmatpush2.msra.mxu0 %v427
    %1221 = vmatprep.subr.mxu0 %v421
    %1222 = vmatpush2.msra.mxu0 %v420
    %1223 = vmatprep.subr.mxu0 %v414
    %1224 = vmatpush2.msra.mxu0 %v413
    %1225 = vmatprep.subr.mxu0 %v407
    %1226 = vmatpush2.msra.mxu0 %v406
    %1227 = vmatprep.subr.mxu0 %v400
    %1228 = vmatpush2.msra.mxu0 %v399
    %1229 = vmatprep.subr.mxu0 %v393
    %1230 = vmatpush2.msra.mxu0 %v392
    %1231 = vmatprep.subr.mxu0 %v386
    %1232 = vmatpush2.msra.mxu0 %v385
    %1233 = vmatprep.subr.mxu0 %v379
    %1234 = vmatpush2.msra.mxu0 %v378
    %1235 = vmatprep.subr.mxu0 %v372
    %1236 = vmatpush2.msra.mxu0 %v371
    %1237 = vmatprep.subr.mxu0 %v365
    %1238 = vmatpush2.msra.mxu0 %v364
    %1239 = vmatprep.subr.mxu0 %v358
    %1240 = vmatpush2.msra.mxu0 %v357
    %1241 = vmatprep.subr.mxu0 %v351
    %1242 = vmatpush2.msra.mxu0 %v350
    %1243 = vmatprep.subr.mxu0 %v344
    %1244 = vmatpush2.msra.mxu0 %v343
    %1245 = vmatprep.subr.mxu0 %v337
    %1246 = vmatpush2.msra.mxu0 %v336
    %1247 = vmatprep.subr.mxu0 %v330
    %1248 = vmatpush2.msra.mxu0 %v329
    %1249 = vmatprep.mubr.f32.mxu0 %v1182
    %1250 = vmatmul.mubr.f32.gmra.mxu0 %v1181
    %v1251 = vpop.f32.mrf.mxu0
    %v1252 = vadd.f32 %v468, %v1251
    %v1253 = vpop.f32.mrf.mxu0
    %v1254 = vadd.f32 %v472, %v1253
    %1255 = vdwg.mxu0
    %1256 = vmatprep.subr.mxu0 %v325
    %1257 = vmatpush1.msra.mxu0 %v324
    %1258 = vmatprep.subr.mxu0 %v318
    %1259 = vmatpush1.msra.mxu0 %v317
    %1260 = vmatprep.subr.mxu0 %v311
    %1261 = vmatpush1.msra.mxu0 %v310
    %1262 = vmatprep.subr.mxu0 %v304
    %1263 = vmatpush1.msra.mxu0 %v303
    %1264 = vmatprep.subr.mxu0 %v297
    %1265 = vmatpush1.msra.mxu0 %v296
    %1266 = vmatprep.subr.mxu0 %v290
    %1267 = vmatpush1.msra.mxu0 %v289
    %1268 = vmatprep.subr.mxu0 %v283
    %1269 = vmatpush1.msra.mxu0 %v282
    %1270 = vmatprep.subr.mxu0 %v276
    %1271 = vmatpush1.msra.mxu0 %v275
    %1272 = vmatprep.subr.mxu0 %v269
    %1273 = vmatpush1.msra.mxu0 %v268
    %1274 = vmatprep.subr.mxu0 %v262
    %1275 = vmatpush1.msra.mxu0 %v261
    %1276 = vmatprep.subr.mxu0 %v255
    %1277 = vmatpush1.msra.mxu0 %v254
    %1278 = vmatprep.subr.mxu0 %v248
    %1279 = vmatpush1.msra.mxu0 %v247
    %1280 = vmatprep.subr.mxu0 %v241
    %1281 = vmatpush1.msra.mxu0 %v240
    %1282 = vmatprep.subr.mxu0 %v234
    %1283 = vmatpush1.msra.mxu0 %v233
    %1284 = vmatprep.subr.mxu0 %v227
    %1285 = vmatpush1.msra.mxu0 %v226
    %1286 = vmatprep.subr.mxu0 %v220
    %1287 = vmatpush1.msra.mxu0 %v219
    %1288 = vmatprep.subr.mxu0 %v437
    %1289 = vmatpush2.msra.mxu0 %v436
    %1290 = vmatprep.subr.mxu0 %v430
    %1291 = vmatpush2.msra.mxu0 %v429
    %1292 = vmatprep.subr.mxu0 %v423
    %1293 = vmatpush2.msra.mxu0 %v422
    %1294 = vmatprep.subr.mxu0 %v416
    %1295 = vmatpush2.msra.mxu0 %v415
    %1296 = vmatprep.subr.mxu0 %v409
    %1297 = vmatpush2.msra.mxu0 %v408
    %1298 = vmatprep.subr.mxu0 %v402
    %1299 = vmatpush2.msra.mxu0 %v401
    %1300 = vmatprep.subr.mxu0 %v395
    %1301 = vmatpush2.msra.mxu0 %v394
    %1302 = vmatprep.subr.mxu0 %v388
    %1303 = vmatpush2.msra.mxu0 %v387
    %1304 = vmatprep.subr.mxu0 %v381
    %1305 = vmatpush2.msra.mxu0 %v380
    %1306 = vmatprep.subr.mxu0 %v374
    %1307 = vmatpush2.msra.mxu0 %v373
    %1308 = vmatprep.subr.mxu0 %v367
    %1309 = vmatpush2.msra.mxu0 %v366
    %1310 = vmatprep.subr.mxu0 %v360
    %1311 = vmatpush2.msra.mxu0 %v359
    %1312 = vmatprep.subr.mxu0 %v353
    %1313 = vmatpush2.msra.mxu0 %v352
    %1314 = vmatprep.subr.mxu0 %v346
    %1315 = vmatpush2.msra.mxu0 %v345
    %1316 = vmatprep.subr.mxu0 %v339
    %1317 = vmatpush2.msra.mxu0 %v338
    %1318 = vmatprep.subr.mxu0 %v332
    %1319 = vmatpush2.msra.mxu0 %v331
    %1320 = vmatprep.mubr.f32.mxu0 %v1182
    %1321 = vmatmul.mubr.f32.gmra.mxu0 %v1181
    %v1322 = vpop.f32.mrf.mxu0
    %v1323 = vadd.f32 %v476, %v1322
    %v1324 = vpop.f32.mrf.mxu0
    %v1325 = vadd.f32 %v480, %v1324
    %1326 = vdwg.mxu0
    %1327 = vmatprep.subr.mxu0 %v327
    %1328 = vmatpush1.msra.mxu0 %v326
    %1329 = vmatprep.subr.mxu0 %v320
    %1330 = vmatpush1.msra.mxu0 %v319
    %1331 = vmatprep.subr.mxu0 %v313
    %1332 = vmatpush1.msra.mxu0 %v312
    %1333 = vmatprep.subr.mxu0 %v306
    %1334 = vmatpush1.msra.mxu0 %v305
    %1335 = vmatprep.subr.mxu0 %v299
    %1336 = vmatpush1.msra.mxu0 %v298
    %1337 = vmatprep.subr.mxu0 %v292
    %1338 = vmatpush1.msra.mxu0 %v291
    %1339 = vmatprep.subr.mxu0 %v285
    %1340 = vmatpush1.msra.mxu0 %v284
    %1341 = vmatprep.subr.mxu0 %v278
    %1342 = vmatpush1.msra.mxu0 %v277
    %1343 = vmatprep.subr.mxu0 %v271
    %1344 = vmatpush1.msra.mxu0 %v270
    %1345 = vmatprep.subr.mxu0 %v264
    %1346 = vmatpush1.msra.mxu0 %v263
    %1347 = vmatprep.subr.mxu0 %v257
    %1348 = vmatpush1.msra.mxu0 %v256
    %1349 = vmatprep.subr.mxu0 %v250
    %1350 = vmatpush1.msra.mxu0 %v249
    %1351 = vmatprep.subr.mxu0 %v243
    %1352 = vmatpush1.msra.mxu0 %v242
    %1353 = vmatprep.subr.mxu0 %v236
    %1354 = vmatpush1.msra.mxu0 %v235
    %1355 = vmatprep.subr.mxu0 %v229
    %1356 = vmatpush1.msra.mxu0 %v228
    %1357 = vmatprep.subr.mxu0 %v222
    %1358 = vmatpush1.msra.mxu0 %v221
    %1359 = vmatprep.subr.mxu0 %v439
    %1360 = vmatpush2.msra.mxu0 %v438
    %1361 = vmatprep.subr.mxu0 %v432
    %1362 = vmatpush2.msra.mxu0 %v431
    %1363 = vmatprep.subr.mxu0 %v425
    %1364 = vmatpush2.msra.mxu0 %v424
    %1365 = vmatprep.subr.mxu0 %v418
    %1366 = vmatpush2.msra.mxu0 %v417
    %1367 = vmatprep.subr.mxu0 %v411
    %1368 = vmatpush2.msra.mxu0 %v410
    %1369 = vmatprep.subr.mxu0 %v404
    %1370 = vmatpush2.msra.mxu0 %v403
    %1371 = vmatprep.subr.mxu0 %v397
    %1372 = vmatpush2.msra.mxu0 %v396
    %1373 = vmatprep.subr.mxu0 %v390
    %1374 = vmatpush2.msra.mxu0 %v389
    %1375 = vmatprep.subr.mxu0 %v383
    %1376 = vmatpush2.msra.mxu0 %v382
    %1377 = vmatprep.subr.mxu0 %v376
    %1378 = vmatpush2.msra.mxu0 %v375
    %1379 = vmatprep.subr.mxu0 %v369
    %1380 = vmatpush2.msra.mxu0 %v368
    %1381 = vmatprep.subr.mxu0 %v362
    %1382 = vmatpush2.msra.mxu0 %v361
    %1383 = vmatprep.subr.mxu0 %v355
    %1384 = vmatpush2.msra.mxu0 %v354
    %1385 = vmatprep.subr.mxu0 %v348
    %1386 = vmatpush2.msra.mxu0 %v347
    %1387 = vmatprep.subr.mxu0 %v341
    %1388 = vmatpush2.msra.mxu0 %v340
    %1389 = vmatprep.subr.mxu0 %v334
    %1390 = vmatpush2.msra.mxu0 %v333
    %1391 = vmatprep.mubr.f32.mxu0 %v1182
    %1392 = vmatmul.mubr.f32.gmra.mxu0 %v1181
    %v1393 = vpop.f32.mrf.mxu0
    %v1394 = vadd.f32 %v484, %v1393
    %v1395 = vpop.f32.mrf.mxu0
    %v1396 = vadd.f32 %v488, %v1395
    %1397 = vdwg.mxu0
    %1398 = vmatprep.subr.mxu0 0.0
    %1399 = vmatpush1.msra.mxu0 %v328
    %1400 = vmatprep.subr.mxu0 0.0
    %1401 = vmatpush1.msra.mxu0 %v321
    %1402 = vmatprep.subr.mxu0 0.0
    %1403 = vmatpush1.msra.mxu0 %v314
    %1404 = vmatprep.subr.mxu0 0.0
    %1405 = vmatpush1.msra.mxu0 %v307
    %1406 = vmatprep.subr.mxu0 0.0
    %1407 = vmatpush1.msra.mxu0 %v300
    %1408 = vmatprep.subr.mxu0 0.0
    %1409 = vmatpush1.msra.mxu0 %v293
    %1410 = vmatprep.subr.mxu0 0.0
    %1411 = vmatpush1.msra.mxu0 %v286
    %1412 = vmatprep.subr.mxu0 0.0
    %1413 = vmatpush1.msra.mxu0 %v279
    %1414 = vmatprep.subr.mxu0 0.0
    %1415 = vmatpush1.msra.mxu0 %v272
    %1416 = vmatprep.subr.mxu0 0.0
    %1417 = vmatpush1.msra.mxu0 %v265
    %1418 = vmatprep.subr.mxu0 0.0
    %1419 = vmatpush1.msra.mxu0 %v258
    %1420 = vmatprep.subr.mxu0 0.0
    %1421 = vmatpush1.msra.mxu0 %v251
    %1422 = vmatprep.subr.mxu0 0.0
    %1423 = vmatpush1.msra.mxu0 %v244
    %1424 = vmatprep.subr.mxu0 0.0
    %1425 = vmatpush1.msra.mxu0 %v237
    %1426 = vmatprep.subr.mxu0 0.0
    %1427 = vmatpush1.msra.mxu0 %v230
    %1428 = vmatprep.subr.mxu0 0.0
    %1429 = vmatpush1.msra.mxu0 %v223
    %1430 = vmatprep.subr.mxu0 0.0
    %1431 = vmatpush2.msra.mxu0 %v440
    %1432 = vmatprep.subr.mxu0 0.0
    %1433 = vmatpush2.msra.mxu0 %v433
    %1434 = vmatprep.subr.mxu0 0.0
    %1435 = vmatpush2.msra.mxu0 %v426
    %1436 = vmatprep.subr.mxu0 0.0
    %1437 = vmatpush2.msra.mxu0 %v419
    %1438 = vmatprep.subr.mxu0 0.0
    %1439 = vmatpush2.msra.mxu0 %v412
    %1440 = vmatprep.subr.mxu0 0.0
    %1441 = vmatpush2.msra.mxu0 %v405
    %1442 = vmatprep.subr.mxu0 0.0
    %1443 = vmatpush2.msra.mxu0 %v398
    %1444 = vmatprep.subr.mxu0 0.0
    %1445 = vmatpush2.msra.mxu0 %v391
    %1446 = vmatprep.subr.mxu0 0.0
    %1447 = vmatpush2.msra.mxu0 %v384
    %1448 = vmatprep.subr.mxu0 0.0
    %1449 = vmatpush2.msra.mxu0 %v377
    %1450 = vmatprep.subr.mxu0 0.0
    %1451 = vmatpush2.msra.mxu0 %v370
    %1452 = vmatprep.subr.mxu0 0.0
    %1453 = vmatpush2.msra.mxu0 %v363
    %1454 = vmatprep.subr.mxu0 0.0
    %1455 = vmatpush2.msra.mxu0 %v356
    %1456 = vmatprep.subr.mxu0 0.0
    %1457 = vmatpush2.msra.mxu0 %v349
    %1458 = vmatprep.subr.mxu0 0.0
    %1459 = vmatpush2.msra.mxu0 %v342
    %1460 = vmatprep.subr.mxu0 0.0
    %1461 = vmatpush2.msra.mxu0 %v335
    %1462 = vmatprep.mubr.f32.mxu0 %v1182
    %1463 = vmatmul.mubr.f32.gmra.mxu0 %v1181
    %v1464 = vpop.f32.mrf.mxu0
    %v1465 = vadd.f32 %v492, %v1464
    %v1466 = vpop.f32.mrf.mxu0
    %1467 = vdwg.mxu0
    %v1468 = vxor.u32 %v1252, 2147483648
    %v1469 = vmul.f32 %v1468, 1.442695
    %v1470 = vpow.pop %v1469
    %v1471 = vadd.f32 %v1470, 1.0
    %v1472 = vrcp.pop %v1471
    %v1473 = vmul.f32 1.0, %v1472
    %v1474 = vxor.u32 %v1254, 2147483648
    %v1475 = vmul.f32 %v1474, 1.442695
    %v1476 = vpow.pop %v1475
    %v1477 = vadd.f32 %v1476, 1.0
    %v1478 = vrcp.pop %v1477
    %v1479 = vmul.f32 1.0, %v1478
    %v1480 = vmul.f32 %v1473, %v1325
    %v1481 = vadd.f32 %v1323, %v1480
    %v1482 = vtanh.pop %v1481
    %v1483 = vsub.f32 1.0, %v1479
    %v1484 = vmul.f32 %v1483, %v1482
    %v1485 = vmul.f32 %v1479, %v1144
    %v1486 = vadd.f32 %v1484, %v1485
    %v1488 = vrot.slane %v1394, 5
    %v1490 = vadd.f32 %v142, %v1488
    %v1491 = vxor.u32 %v1490, 2147483648
    %v1492 = vmul.f32 %v1491, 1.442695
    %v1493 = vpow.pop %v1492
    %v1494 = vadd.f32 %v1493, 1.0
    %v1495 = vrcp.pop %v1494
    %v1496 = vmul.f32 1.0, %v1495
    %v1498 = vrot.slane %v1396, 5
    %v1500 = vadd.f32 %v144, %v1498
    %v1501 = vxor.u32 %v1500, 2147483648
    %v1502 = vmul.f32 %v1501, 1.442695
    %v1503 = vpow.pop %v1502
    %v1504 = vadd.f32 %v1503, 1.0
    %v1505 = vrcp.pop %v1504
    %v1506 = vmul.f32 1.0, %v1505
    %v1507 = vadd.f32 %v1465, %v216
    %v1509 = vrot.slane %v1507, 5
    %v1511 = vmul.f32 %v1496, %v1509
    %v1512 = vadd.f32 %v213, %v1511
    %v1513 = vtanh.pop %v1512
    %v1514 = vsub.f32 1.0, %v1506
    %v1515 = vmul.f32 %v1514, %v1513
    %v1516 = vrot.slane %v1177, 7
    %v1518 = vmul.f32 %v1506, %v1516
    %v1519 = vadd.f32 %v1515, %v1518
    %v1521 = vrot.slane %v1486, 5
    %v1523 = vrot.slane %v1519, 3
    %v1524 = vrot.slane %v1521, 3
    %1527 = vmatprep.subr.mxu0 %v323
    %1528 = vmatpush1.msra.mxu0 %v322
    %1529 = vmatprep.subr.mxu0 %v316
    %1530 = vmatpush1.msra.mxu0 %v315
    %1531 = vmatprep.subr.mxu0 %v309
    %1532 = vmatpush1.msra.mxu0 %v308
    %1533 = vmatprep.subr.mxu0 %v302
    %1534 = vmatpush1.msra.mxu0 %v301
    %1535 = vmatprep.subr.mxu0 %v295
    %1536 = vmatpush1.msra.mxu0 %v294
    %1537 = vmatprep.subr.mxu0 %v288
    %1538 = vmatpush1.msra.mxu0 %v287
    %1539 = vmatprep.subr.mxu0 %v281
    %1540 = vmatpush1.msra.mxu0 %v280
    %1541 = vmatprep.subr.mxu0 %v274
    %1542 = vmatpush1.msra.mxu0 %v273
    %1543 = vmatprep.subr.mxu0 %v267
    %1544 = vmatpush1.msra.mxu0 %v266
    %1545 = vmatprep.subr.mxu0 %v260
    %1546 = vmatpush1.msra.mxu0 %v259
    %1547 = vmatprep.subr.mxu0 %v253
    %1548 = vmatpush1.msra.mxu0 %v252
    %1549 = vmatprep.subr.mxu0 %v246
    %1550 = vmatpush1.msra.mxu0 %v245
    %1551 = vmatprep.subr.mxu0 %v239
    %1552 = vmatpush1.msra.mxu0 %v238
    %1553 = vmatprep.subr.mxu0 %v232
    %1554 = vmatpush1.msra.mxu0 %v231
    %1555 = vmatprep.subr.mxu0 %v225
    %1556 = vmatpush1.msra.mxu0 %v224
    %1557 = vmatprep.subr.mxu0 %v218
    %1558 = vmatpush1.msra.mxu0 %v217
    %1559 = vmatprep.subr.mxu0 %v435
    %1560 = vmatpush2.msra.mxu0 %v434
    %1561 = vmatprep.subr.mxu0 %v428
    %1562 = vmatpush2.msra.mxu0 %v427
    %1563 = vmatprep.subr.mxu0 %v421
    %1564 = vmatpush2.msra.mxu0 %v420
    %1565 = vmatprep.subr.mxu0 %v414
    %1566 = vmatpush2.msra.mxu0 %v413
    %1567 = vmatprep.subr.mxu0 %v407
    %1568 = vmatpush2.msra.mxu0 %v406
    %1569 = vmatprep.subr.mxu0 %v400
    %1570 = vmatpush2.msra.mxu0 %v399
    %1571 = vmatprep.subr.mxu0 %v393
    %1572 = vmatpush2.msra.mxu0 %v392
    %1573 = vmatprep.subr.mxu0 %v386
    %1574 = vmatpush2.msra.mxu0 %v385
    %1575 = vmatprep.subr.mxu0 %v379
    %1576 = vmatpush2.msra.mxu0 %v378
    %1577 = vmatprep.subr.mxu0 %v372
    %1578 = vmatpush2.msra.mxu0 %v371
    %1579 = vmatprep.subr.mxu0 %v365
    %1580 = vmatpush2.msra.mxu0 %v364
    %1581 = vmatprep.subr.mxu0 %v358
    %1582 = vmatpush2.msra.mxu0 %v357
    %1583 = vmatprep.subr.mxu0 %v351
    %1584 = vmatpush2.msra.mxu0 %v350
    %1585 = vmatprep.subr.mxu0 %v344
    %1586 = vmatpush2.msra.mxu0 %v343
    %1587 = vmatprep.subr.mxu0 %v337
    %1588 = vmatpush2.msra.mxu0 %v336
    %1589 = vmatprep.subr.mxu0 %v330
    %1590 = vmatpush2.msra.mxu0 %v329
    %1591 = vmatprep.mubr.f32.mxu0 %v1524
    %1592 = vmatmul.mubr.f32.gmra.mxu0 %v1523
    %v1593 = vpop.f32.mrf.mxu0
    %v1594 = vadd.f32 %v468, %v1593
    %v1595 = vpop.f32.mrf.mxu0
    %v1596 = vadd.f32 %v472, %v1595
    %1597 = vdwg.mxu0
    %1598 = vmatprep.subr.mxu0 %v325
    %1599 = vmatpush1.msra.mxu0 %v324
    %1600 = vmatprep.subr.mxu0 %v318
    %1601 = vmatpush1.msra.mxu0 %v317
    %1602 = vmatprep.subr.mxu0 %v311
    %1603 = vmatpush1.msra.mxu0 %v310
    %1604 = vmatprep.subr.mxu0 %v304
    %1605 = vmatpush1.msra.mxu0 %v303
    %1606 = vmatprep.subr.mxu0 %v297
    %1607 = vmatpush1.msra.mxu0 %v296
    %1608 = vmatprep.subr.mxu0 %v290
    %1609 = vmatpush1.msra.mxu0 %v289
    %1610 = vmatprep.subr.mxu0 %v283
    %1611 = vmatpush1.msra.mxu0 %v282
    %1612 = vmatprep.subr.mxu0 %v276
    %1613 = vmatpush1.msra.mxu0 %v275
    %1614 = vmatprep.subr.mxu0 %v269
    %1615 = vmatpush1.msra.mxu0 %v268
    %1616 = vmatprep.subr.mxu0 %v262
    %1617 = vmatpush1.msra.mxu0 %v261
    %1618 = vmatprep.subr.mxu0 %v255
    %1619 = vmatpush1.msra.mxu0 %v254
    %1620 = vmatprep.subr.mxu0 %v248
    %1621 = vmatpush1.msra.mxu0 %v247
    %1622 = vmatprep.subr.mxu0 %v241
    %1623 = vmatpush1.msra.mxu0 %v240
    %1624 = vmatprep.subr.mxu0 %v234
    %1625 = vmatpush1.msra.mxu0 %v233
    %1626 = vmatprep.subr.mxu0 %v227
    %1627 = vmatpush1.msra.mxu0 %v226
    %1628 = vmatprep.subr.mxu0 %v220
    %1629 = vmatpush1.msra.mxu0 %v219
    %1630 = vmatprep.subr.mxu0 %v437
    %1631 = vmatpush2.msra.mxu0 %v436
    %1632 = vmatprep.subr.mxu0 %v430
    %1633 = vmatpush2.msra.mxu0 %v429
    %1634 = vmatprep.subr.mxu0 %v423
    %1635 = vmatpush2.msra.mxu0 %v422
    %1636 = vmatprep.subr.mxu0 %v416
    %1637 = vmatpush2.msra.mxu0 %v415
    %1638 = vmatprep.subr.mxu0 %v409
    %1639 = vmatpush2.msra.mxu0 %v408
    %1640 = vmatprep.subr.mxu0 %v402
    %1641 = vmatpush2.msra.mxu0 %v401
    %1642 = vmatprep.subr.mxu0 %v395
    %1643 = vmatpush2.msra.mxu0 %v394
    %1644 = vmatprep.subr.mxu0 %v388
    %1645 = vmatpush2.msra.mxu0 %v387
    %1646 = vmatprep.subr.mxu0 %v381
    %1647 = vmatpush2.msra.mxu0 %v380
    %1648 = vmatprep.subr.mxu0 %v374
    %1649 = vmatpush2.msra.mxu0 %v373
    %1650 = vmatprep.subr.mxu0 %v367
    %1651 = vmatpush2.msra.mxu0 %v366
    %1652 = vmatprep.subr.mxu0 %v360
    %1653 = vmatpush2.msra.mxu0 %v359
    %1654 = vmatprep.subr.mxu0 %v353
    %1655 = vmatpush2.msra.mxu0 %v352
    %1656 = vmatprep.subr.mxu0 %v346
    %1657 = vmatpush2.msra.mxu0 %v345
    %1658 = vmatprep.subr.mxu0 %v339
    %1659 = vmatpush2.msra.mxu0 %v338
    %1660 = vmatprep.subr.mxu0 %v332
    %1661 = vmatpush2.msra.mxu0 %v331
    %1662 = vmatprep.mubr.f32.mxu0 %v1524
    %1663 = vmatmul.mubr.f32.gmra.mxu0 %v1523
    %v1664 = vpop.f32.mrf.mxu0
    %v1665 = vadd.f32 %v476, %v1664
    %v1666 = vpop.f32.mrf.mxu0
    %v1667 = vadd.f32 %v480, %v1666
    %1668 = vdwg.mxu0
    %1669 = vmatprep.subr.mxu0 %v327
    %1670 = vmatpush1.msra.mxu0 %v326
    %1671 = vmatprep.subr.mxu0 %v320
    %1672 = vmatpush1.msra.mxu0 %v319
    %1673 = vmatprep.subr.mxu0 %v313
    %1674 = vmatpush1.msra.mxu0 %v312
    %1675 = vmatprep.subr.mxu0 %v306
    %1676 = vmatpush1.msra.mxu0 %v305
    %1677 = vmatprep.subr.mxu0 %v299
    %1678 = vmatpush1.msra.mxu0 %v298
    %1679 = vmatprep.subr.mxu0 %v292
    %1680 = vmatpush1.msra.mxu0 %v291
    %1681 = vmatprep.subr.mxu0 %v285
    %1682 = vmatpush1.msra.mxu0 %v284
    %1683 = vmatprep.subr.mxu0 %v278
    %1684 = vmatpush1.msra.mxu0 %v277
    %1685 = vmatprep.subr.mxu0 %v271
    %1686 = vmatpush1.msra.mxu0 %v270
    %1687 = vmatprep.subr.mxu0 %v264
    %1688 = vmatpush1.msra.mxu0 %v263
    %1689 = vmatprep.subr.mxu0 %v257
    %1690 = vmatpush1.msra.mxu0 %v256
    %1691 = vmatprep.subr.mxu0 %v250
    %1692 = vmatpush1.msra.mxu0 %v249
    %1693 = vmatprep.subr.mxu0 %v243
    %1694 = vmatpush1.msra.mxu0 %v242
    %1695 = vmatprep.subr.mxu0 %v236
    %1696 = vmatpush1.msra.mxu0 %v235
    %1697 = vmatprep.subr.mxu0 %v229
    %1698 = vmatpush1.msra.mxu0 %v228
    %1699 = vmatprep.subr.mxu0 %v222
    %1700 = vmatpush1.msra.mxu0 %v221
    %1701 = vmatprep.subr.mxu0 %v439
    %1702 = vmatpush2.msra.mxu0 %v438
    %1703 = vmatprep.subr.mxu0 %v432
    %1704 = vmatpush2.msra.mxu0 %v431
    %1705 = vmatprep.subr.mxu0 %v425
    %1706 = vmatpush2.msra.mxu0 %v424
    %1707 = vmatprep.subr.mxu0 %v418
    %1708 = vmatpush2.msra.mxu0 %v417
    %1709 = vmatprep.subr.mxu0 %v411
    %1710 = vmatpush2.msra.mxu0 %v410
    %1711 = vmatprep.subr.mxu0 %v404
    %1712 = vmatpush2.msra.mxu0 %v403
    %1713 = vmatprep.subr.mxu0 %v397
    %1714 = vmatpush2.msra.mxu0 %v396
    %1715 = vmatprep.subr.mxu0 %v390
    %1716 = vmatpush2.msra.mxu0 %v389
    %1717 = vmatprep.subr.mxu0 %v383
    %1718 = vmatpush2.msra.mxu0 %v382
    %1719 = vmatprep.subr.mxu0 %v376
    %1720 = vmatpush2.msra.mxu0 %v375
    %1721 = vmatprep.subr.mxu0 %v369
    %1722 = vmatpush2.msra.mxu0 %v368
    %1723 = vmatprep.subr.mxu0 %v362
    %1724 = vmatpush2.msra.mxu0 %v361
    %1725 = vmatprep.subr.mxu0 %v355
    %1726 = vmatpush2.msra.mxu0 %v354
    %1727 = vmatprep.subr.mxu0 %v348
    %1728 = vmatpush2.msra.mxu0 %v347
    %1729 = vmatprep.subr.mxu0 %v341
    %1730 = vmatpush2.msra.mxu0 %v340
    %1731 = vmatprep.subr.mxu0 %v334
    %1732 = vmatpush2.msra.mxu0 %v333
    %1733 = vmatprep.mubr.f32.mxu0 %v1524
    %1734 = vmatmul.mubr.f32.gmra.mxu0 %v1523
    %v1735 = vpop.f32.mrf.mxu0
    %v1736 = vadd.f32 %v484, %v1735
    %v1737 = vpop.f32.mrf.mxu0
    %v1738 = vadd.f32 %v488, %v1737
    %1739 = vdwg.mxu0
    %1740 = vmatprep.subr.mxu0 0.0
    %1741 = vmatpush1.msra.mxu0 %v328
    %1742 = vmatprep.subr.mxu0 0.0
    %1743 = vmatpush1.msra.mxu0 %v321
    %1744 = vmatprep.subr.mxu0 0.0
    %1745 = vmatpush1.msra.mxu0 %v314
    %1746 = vmatprep.subr.mxu0 0.0
    %1747 = vmatpush1.msra.mxu0 %v307
    %1748 = vmatprep.subr.mxu0 0.0
    %1749 = vmatpush1.msra.mxu0 %v300
    %1750 = vmatprep.subr.mxu0 0.0
    %1751 = vmatpush1.msra.mxu0 %v293
    %1752 = vmatprep.subr.mxu0 0.0
    %1753 = vmatpush1.msra.mxu0 %v286
    %1754 = vmatprep.subr.mxu0 0.0
    %1755 = vmatpush1.msra.mxu0 %v279
    %1756 = vmatprep.subr.mxu0 0.0
    %1757 = vmatpush1.msra.mxu0 %v272
    %1758 = vmatprep.subr.mxu0 0.0
    %1759 = vmatpush1.msra.mxu0 %v265
    %1760 = vmatprep.subr.mxu0 0.0
    %1761 = vmatpush1.msra.mxu0 %v258
    %1762 = vmatprep.subr.mxu0 0.0
    %1763 = vmatpush1.msra.mxu0 %v251
    %1764 = vmatprep.subr.mxu0 0.0
    %1765 = vmatpush1.msra.mxu0 %v244
    %1766 = vmatprep.subr.mxu0 0.0
    %1767 = vmatpush1.msra.mxu0 %v237
    %1768 = vmatprep.subr.mxu0 0.0
    %1769 = vmatpush1.msra.mxu0 %v230
    %1770 = vmatprep.subr.mxu0 0.0
    %1771 = vmatpush1.msra.mxu0 %v223
    %1772 = vmatprep.subr.mxu0 0.0
    %1773 = vmatpush2.msra.mxu0 %v440
    %1774 = vmatprep.subr.mxu0 0.0
    %1775 = vmatpush2.msra.mxu0 %v433
    %1776 = vmatprep.subr.mxu0 0.0
    %1777 = vmatpush2.msra.mxu0 %v426
    %1778 = vmatprep.subr.mxu0 0.0
    %1779 = vmatpush2.msra.mxu0 %v419
    %1780 = vmatprep.subr.mxu0 0.0
    %1781 = vmatpush2.msra.mxu0 %v412
    %1782 = vmatprep.subr.mxu0 0.0
    %1783 = vmatpush2.msra.mxu0 %v405
    %1784 = vmatprep.subr.mxu0 0.0
    %1785 = vmatpush2.msra.mxu0 %v398
    %1786 = vmatprep.subr.mxu0 0.0
    %1787 = vmatpush2.msra.mxu0 %v391
    %1788 = vmatprep.subr.mxu0 0.0
    %1789 = vmatpush2.msra.mxu0 %v384
    %1790 = vmatprep.subr.mxu0 0.0
    %1791 = vmatpush2.msra.mxu0 %v377
    %1792 = vmatprep.subr.mxu0 0.0
    %1793 = vmatpush2.msra.mxu0 %v370
    %1794 = vmatprep.subr.mxu0 0.0
    %1795 = vmatpush2.msra.mxu0 %v363
    %1796 = vmatprep.subr.mxu0 0.0
    %1797 = vmatpush2.msra.mxu0 %v356
    %1798 = vmatprep.subr.mxu0 0.0
    %1799 = vmatpush2.msra.mxu0 %v349
    %1800 = vmatprep.subr.mxu0 0.0
    %1801 = vmatpush2.msra.mxu0 %v342
    %1802 = vmatprep.subr.mxu0 0.0
    %1803 = vmatpush2.msra.mxu0 %v335
    %1804 = vmatprep.mubr.f32.mxu0 %v1524
    %1805 = vmatmul.mubr.f32.gmra.mxu0 %v1523
    %v1806 = vpop.f32.mrf.mxu0
    %v1807 = vadd.f32 %v492, %v1806
    %v1808 = vpop.f32.mrf.mxu0
    %1809 = vdwg.mxu0
    %v1810 = vxor.u32 %v1594, 2147483648
    %v1811 = vmul.f32 %v1810, 1.442695
    %v1812 = vpow.pop %v1811
    %v1813 = vadd.f32 %v1812, 1.0
    %v1814 = vrcp.pop %v1813
    %v1815 = vmul.f32 1.0, %v1814
    %v1816 = vxor.u32 %v1596, 2147483648
    %v1817 = vmul.f32 %v1816, 1.442695
    %v1818 = vpow.pop %v1817
    %v1819 = vadd.f32 %v1818, 1.0
    %v1820 = vrcp.pop %v1819
    %v1821 = vmul.f32 1.0, %v1820
    %v1822 = vmul.f32 %v1815, %v1667
    %v1823 = vadd.f32 %v1665, %v1822
    %v1824 = vtanh.pop %v1823
    %v1825 = vsub.f32 1.0, %v1821
    %v1826 = vmul.f32 %v1825, %v1824
    %v1827 = vmul.f32 %v1821, %v1486
    %v1828 = vadd.f32 %v1826, %v1827
    %v1830 = vrot.slane %v1736, 4
    %v1832 = vadd.f32 %v142, %v1830
    %v1833 = vxor.u32 %v1832, 2147483648
    %v1834 = vmul.f32 %v1833, 1.442695
    %v1835 = vpow.pop %v1834
    %v1836 = vadd.f32 %v1835, 1.0
    %v1837 = vrcp.pop %v1836
    %v1838 = vmul.f32 1.0, %v1837
    %v1840 = vrot.slane %v1738, 4
    %v1842 = vadd.f32 %v144, %v1840
    %v1843 = vxor.u32 %v1842, 2147483648
    %v1844 = vmul.f32 %v1843, 1.442695
    %v1845 = vpow.pop %v1844
    %v1846 = vadd.f32 %v1845, 1.0
    %v1847 = vrcp.pop %v1846
    %v1848 = vmul.f32 1.0, %v1847
    %v1849 = vadd.f32 %v1807, %v216
    %v1851 = vrot.slane %v1849, 4
    %v1853 = vmul.f32 %v1838, %v1851
    %v1854 = vadd.f32 %v213, %v1853
    %v1855 = vtanh.pop %v1854
    %v1856 = vsub.f32 1.0, %v1848
    %v1857 = vmul.f32 %v1856, %v1855
    %v1858 = vrot.slane %v1519, 7
    %v1860 = vmul.f32 %v1848, %v1858
    %v1861 = vadd.f32 %v1857, %v1860
    %v1863 = vrot.slane %v1828, 4
    %v1865 = vrot.slane %v1861, 4
    %v1866 = vrot.slane %v1863, 4
    %1869 = vmatprep.subr.mxu0 %v323
    %1870 = vmatpush1.msra.mxu0 %v322
    %1871 = vmatprep.subr.mxu0 %v316
    %1872 = vmatpush1.msra.mxu0 %v315
    %1873 = vmatprep.subr.mxu0 %v309
    %1874 = vmatpush1.msra.mxu0 %v308
    %1875 = vmatprep.subr.mxu0 %v302
    %1876 = vmatpush1.msra.mxu0 %v301
    %1877 = vmatprep.subr.mxu0 %v295
    %1878 = vmatpush1.msra.mxu0 %v294
    %1879 = vmatprep.subr.mxu0 %v288
    %1880 = vmatpush1.msra.mxu0 %v287
    %1881 = vmatprep.subr.mxu0 %v281
    %1882 = vmatpush1.msra.mxu0 %v280
    %1883 = vmatprep.subr.mxu0 %v274
    %1884 = vmatpush1.msra.mxu0 %v273
    %1885 = vmatprep.subr.mxu0 %v267
    %1886 = vmatpush1.msra.mxu0 %v266
    %1887 = vmatprep.subr.mxu0 %v260
    %1888 = vmatpush1.msra.mxu0 %v259
    %1889 = vmatprep.subr.mxu0 %v253
    %1890 = vmatpush1.msra.mxu0 %v252
    %1891 = vmatprep.subr.mxu0 %v246
    %1892 = vmatpush1.msra.mxu0 %v245
    %1893 = vmatprep.subr.mxu0 %v239
    %1894 = vmatpush1.msra.mxu0 %v238
    %1895 = vmatprep.subr.mxu0 %v232
    %1896 = vmatpush1.msra.mxu0 %v231
    %1897 = vmatprep.subr.mxu0 %v225
    %1898 = vmatpush1.msra.mxu0 %v224
    %1899 = vmatprep.subr.mxu0 %v218
    %1900 = vmatpush1.msra.mxu0 %v217
    %1901 = vmatprep.subr.mxu0 %v435
    %1902 = vmatpush2.msra.mxu0 %v434
    %1903 = vmatprep.subr.mxu0 %v428
    %1904 = vmatpush2.msra.mxu0 %v427
    %1905 = vmatprep.subr.mxu0 %v421
    %1906 = vmatpush2.msra.mxu0 %v420
    %1907 = vmatprep.subr.mxu0 %v414
    %1908 = vmatpush2.msra.mxu0 %v413
    %1909 = vmatprep.subr.mxu0 %v407
    %1910 = vmatpush2.msra.mxu0 %v406
    %1911 = vmatprep.subr.mxu0 %v400
    %1912 = vmatpush2.msra.mxu0 %v399
    %1913 = vmatprep.subr.mxu0 %v393
    %1914 = vmatpush2.msra.mxu0 %v392
    %1915 = vmatprep.subr.mxu0 %v386
    %1916 = vmatpush2.msra.mxu0 %v385
    %1917 = vmatprep.subr.mxu0 %v379
    %1918 = vmatpush2.msra.mxu0 %v378
    %1919 = vmatprep.subr.mxu0 %v372
    %1920 = vmatpush2.msra.mxu0 %v371
    %1921 = vmatprep.subr.mxu0 %v365
    %1922 = vmatpush2.msra.mxu0 %v364
    %1923 = vmatprep.subr.mxu0 %v358
    %1924 = vmatpush2.msra.mxu0 %v357
    %1925 = vmatprep.subr.mxu0 %v351
    %1926 = vmatpush2.msra.mxu0 %v350
    %1927 = vmatprep.subr.mxu0 %v344
    %1928 = vmatpush2.msra.mxu0 %v343
    %1929 = vmatprep.subr.mxu0 %v337
    %1930 = vmatpush2.msra.mxu0 %v336
    %1931 = vmatprep.subr.mxu0 %v330
    %1932 = vmatpush2.msra.mxu0 %v329
    %1933 = vmatprep.mubr.f32.mxu0 %v1866
    %1934 = vmatmul.mubr.f32.gmra.mxu0 %v1865
    %v1935 = vpop.f32.mrf.mxu0
    %v1936 = vadd.f32 %v468, %v1935
    %v1937 = vpop.f32.mrf.mxu0
    %v1938 = vadd.f32 %v472, %v1937
    %1939 = vdwg.mxu0
    %1940 = vmatprep.subr.mxu0 %v325
    %1941 = vmatpush1.msra.mxu0 %v324
    %1942 = vmatprep.subr.mxu0 %v318
    %1943 = vmatpush1.msra.mxu0 %v317
    %1944 = vmatprep.subr.mxu0 %v311
    %1945 = vmatpush1.msra.mxu0 %v310
    %1946 = vmatprep.subr.mxu0 %v304
    %1947 = vmatpush1.msra.mxu0 %v303
    %1948 = vmatprep.subr.mxu0 %v297
    %1949 = vmatpush1.msra.mxu0 %v296
    %1950 = vmatprep.subr.mxu0 %v290
    %1951 = vmatpush1.msra.mxu0 %v289
    %1952 = vmatprep.subr.mxu0 %v283
    %1953 = vmatpush1.msra.mxu0 %v282
    %1954 = vmatprep.subr.mxu0 %v276
    %1955 = vmatpush1.msra.mxu0 %v275
    %1956 = vmatprep.subr.mxu0 %v269
    %1957 = vmatpush1.msra.mxu0 %v268
    %1958 = vmatprep.subr.mxu0 %v262
    %1959 = vmatpush1.msra.mxu0 %v261
    %1960 = vmatprep.subr.mxu0 %v255
    %1961 = vmatpush1.msra.mxu0 %v254
    %1962 = vmatprep.subr.mxu0 %v248
    %1963 = vmatpush1.msra.mxu0 %v247
    %1964 = vmatprep.subr.mxu0 %v241
    %1965 = vmatpush1.msra.mxu0 %v240
    %1966 = vmatprep.subr.mxu0 %v234
    %1967 = vmatpush1.msra.mxu0 %v233
    %1968 = vmatprep.subr.mxu0 %v227
    %1969 = vmatpush1.msra.mxu0 %v226
    %1970 = vmatprep.subr.mxu0 %v220
    %1971 = vmatpush1.msra.mxu0 %v219
    %1972 = vmatprep.subr.mxu0 %v437
    %1973 = vmatpush2.msra.mxu0 %v436
    %1974 = vmatprep.subr.mxu0 %v430
    %1975 = vmatpush2.msra.mxu0 %v429
    %1976 = vmatprep.subr.mxu0 %v423
    %1977 = vmatpush2.msra.mxu0 %v422
    %1978 = vmatprep.subr.mxu0 %v416
    %1979 = vmatpush2.msra.mxu0 %v415
    %1980 = vmatprep.subr.mxu0 %v409
    %1981 = vmatpush2.msra.mxu0 %v408
    %1982 = vmatprep.subr.mxu0 %v402
    %1983 = vmatpush2.msra.mxu0 %v401
    %1984 = vmatprep.subr.mxu0 %v395
    %1985 = vmatpush2.msra.mxu0 %v394
    %1986 = vmatprep.subr.mxu0 %v388
    %1987 = vmatpush2.msra.mxu0 %v387
    %1988 = vmatprep.subr.mxu0 %v381
    %1989 = vmatpush2.msra.mxu0 %v380
    %1990 = vmatprep.subr.mxu0 %v374
    %1991 = vmatpush2.msra.mxu0 %v373
    %1992 = vmatprep.subr.mxu0 %v367
    %1993 = vmatpush2.msra.mxu0 %v366
    %1994 = vmatprep.subr.mxu0 %v360
    %1995 = vmatpush2.msra.mxu0 %v359
    %1996 = vmatprep.subr.mxu0 %v353
    %1997 = vmatpush2.msra.mxu0 %v352
    %1998 = vmatprep.subr.mxu0 %v346
    %1999 = vmatpush2.msra.mxu0 %v345
    %2000 = vmatprep.subr.mxu0 %v339
    %2001 = vmatpush2.msra.mxu0 %v338
    %2002 = vmatprep.subr.mxu0 %v332
    %2003 = vmatpush2.msra.mxu0 %v331
    %2004 = vmatprep.mubr.f32.mxu0 %v1866
    %2005 = vmatmul.mubr.f32.gmra.mxu0 %v1865
    %v2006 = vpop.f32.mrf.mxu0
    %v2007 = vadd.f32 %v476, %v2006
    %v2008 = vpop.f32.mrf.mxu0
    %v2009 = vadd.f32 %v480, %v2008
    %2010 = vdwg.mxu0
    %2011 = vmatprep.subr.mxu0 %v327
    %2012 = vmatpush1.msra.mxu0 %v326
    %2013 = vmatprep.subr.mxu0 %v320
    %2014 = vmatpush1.msra.mxu0 %v319
    %2015 = vmatprep.subr.mxu0 %v313
    %2016 = vmatpush1.msra.mxu0 %v312
    %2017 = vmatprep.subr.mxu0 %v306
    %2018 = vmatpush1.msra.mxu0 %v305
    %2019 = vmatprep.subr.mxu0 %v299
    %2020 = vmatpush1.msra.mxu0 %v298
    %2021 = vmatprep.subr.mxu0 %v292
    %2022 = vmatpush1.msra.mxu0 %v291
    %2023 = vmatprep.subr.mxu0 %v285
    %2024 = vmatpush1.msra.mxu0 %v284
    %2025 = vmatprep.subr.mxu0 %v278
    %2026 = vmatpush1.msra.mxu0 %v277
    %2027 = vmatprep.subr.mxu0 %v271
    %2028 = vmatpush1.msra.mxu0 %v270
    %2029 = vmatprep.subr.mxu0 %v264
    %2030 = vmatpush1.msra.mxu0 %v263
    %2031 = vmatprep.subr.mxu0 %v257
    %2032 = vmatpush1.msra.mxu0 %v256
    %2033 = vmatprep.subr.mxu0 %v250
    %2034 = vmatpush1.msra.mxu0 %v249
    %2035 = vmatprep.subr.mxu0 %v243
    %2036 = vmatpush1.msra.mxu0 %v242
    %2037 = vmatprep.subr.mxu0 %v236
    %2038 = vmatpush1.msra.mxu0 %v235
    %2039 = vmatprep.subr.mxu0 %v229
    %2040 = vmatpush1.msra.mxu0 %v228
    %2041 = vmatprep.subr.mxu0 %v222
    %2042 = vmatpush1.msra.mxu0 %v221
    %2043 = vmatprep.subr.mxu0 %v439
    %2044 = vmatpush2.msra.mxu0 %v438
    %2045 = vmatprep.subr.mxu0 %v432
    %2046 = vmatpush2.msra.mxu0 %v431
    %2047 = vmatprep.subr.mxu0 %v425
    %2048 = vmatpush2.msra.mxu0 %v424
    %2049 = vmatprep.subr.mxu0 %v418
    %2050 = vmatpush2.msra.mxu0 %v417
    %2051 = vmatprep.subr.mxu0 %v411
    %2052 = vmatpush2.msra.mxu0 %v410
    %2053 = vmatprep.subr.mxu0 %v404
    %2054 = vmatpush2.msra.mxu0 %v403
    %2055 = vmatprep.subr.mxu0 %v397
    %2056 = vmatpush2.msra.mxu0 %v396
    %2057 = vmatprep.subr.mxu0 %v390
    %2058 = vmatpush2.msra.mxu0 %v389
    %2059 = vmatprep.subr.mxu0 %v383
    %2060 = vmatpush2.msra.mxu0 %v382
    %2061 = vmatprep.subr.mxu0 %v376
    %2062 = vmatpush2.msra.mxu0 %v375
    %2063 = vmatprep.subr.mxu0 %v369
    %2064 = vmatpush2.msra.mxu0 %v368
    %2065 = vmatprep.subr.mxu0 %v362
    %2066 = vmatpush2.msra.mxu0 %v361
    %2067 = vmatprep.subr.mxu0 %v355
    %2068 = vmatpush2.msra.mxu0 %v354
    %2069 = vmatprep.subr.mxu0 %v348
    %2070 = vmatpush2.msra.mxu0 %v347
    %2071 = vmatprep.subr.mxu0 %v341
    %2072 = vmatpush2.msra.mxu0 %v340
    %2073 = vmatprep.subr.mxu0 %v334
    %2074 = vmatpush2.msra.mxu0 %v333
    %2075 = vmatprep.mubr.f32.mxu0 %v1866
    %2076 = vmatmul.mubr.f32.gmra.mxu0 %v1865
    %v2077 = vpop.f32.mrf.mxu0
    %v2078 = vadd.f32 %v484, %v2077
    %v2079 = vpop.f32.mrf.mxu0
    %v2080 = vadd.f32 %v488, %v2079
    %2081 = vdwg.mxu0
    %2082 = vmatprep.subr.mxu0 0.0
    %2083 = vmatpush1.msra.mxu0 %v328
    %2084 = vmatprep.subr.mxu0 0.0
    %2085 = vmatpush1.msra.mxu0 %v321
    %2086 = vmatprep.subr.mxu0 0.0
    %2087 = vmatpush1.msra.mxu0 %v314
    %2088 = vmatprep.subr.mxu0 0.0
    %2089 = vmatpush1.msra.mxu0 %v307
    %2090 = vmatprep.subr.mxu0 0.0
    %2091 = vmatpush1.msra.mxu0 %v300
    %2092 = vmatprep.subr.mxu0 0.0
    %2093 = vmatpush1.msra.mxu0 %v293
    %2094 = vmatprep.subr.mxu0 0.0
    %2095 = vmatpush1.msra.mxu0 %v286
    %2096 = vmatprep.subr.mxu0 0.0
    %2097 = vmatpush1.msra.mxu0 %v279
    %2098 = vmatprep.subr.mxu0 0.0
    %2099 = vmatpush1.msra.mxu0 %v272
    %2100 = vmatprep.subr.mxu0 0.0
    %2101 = vmatpush1.msra.mxu0 %v265
    %2102 = vmatprep.subr.mxu0 0.0
    %2103 = vmatpush1.msra.mxu0 %v258
    %2104 = vmatprep.subr.mxu0 0.0
    %2105 = vmatpush1.msra.mxu0 %v251
    %2106 = vmatprep.subr.mxu0 0.0
    %2107 = vmatpush1.msra.mxu0 %v244
    %2108 = vmatprep.subr.mxu0 0.0
    %2109 = vmatpush1.msra.mxu0 %v237
    %2110 = vmatprep.subr.mxu0 0.0
    %2111 = vmatpush1.msra.mxu0 %v230
    %2112 = vmatprep.subr.mxu0 0.0
    %2113 = vmatpush1.msra.mxu0 %v223
    %2114 = vmatprep.subr.mxu0 0.0
    %2115 = vmatpush2.msra.mxu0 %v440
    %2116 = vmatprep.subr.mxu0 0.0
    %2117 = vmatpush2.msra.mxu0 %v433
    %2118 = vmatprep.subr.mxu0 0.0
    %2119 = vmatpush2.msra.mxu0 %v426
    %2120 = vmatprep.subr.mxu0 0.0
    %2121 = vmatpush2.msra.mxu0 %v419
    %2122 = vmatprep.subr.mxu0 0.0
    %2123 = vmatpush2.msra.mxu0 %v412
    %2124 = vmatprep.subr.mxu0 0.0
    %2125 = vmatpush2.msra.mxu0 %v405
    %2126 = vmatprep.subr.mxu0 0.0
    %2127 = vmatpush2.msra.mxu0 %v398
    %2128 = vmatprep.subr.mxu0 0.0
    %2129 = vmatpush2.msra.mxu0 %v391
    %2130 = vmatprep.subr.mxu0 0.0
    %2131 = vmatpush2.msra.mxu0 %v384
    %2132 = vmatprep.subr.mxu0 0.0
    %2133 = vmatpush2.msra.mxu0 %v377
    %2134 = vmatprep.subr.mxu0 0.0
    %2135 = vmatpush2.msra.mxu0 %v370
    %2136 = vmatprep.subr.mxu0 0.0
    %2137 = vmatpush2.msra.mxu0 %v363
    %2138 = vmatprep.subr.mxu0 0.0
    %2139 = vmatpush2.msra.mxu0 %v356
    %2140 = vmatprep.subr.mxu0 0.0
    %2141 = vmatpush2.msra.mxu0 %v349
    %2142 = vmatprep.subr.mxu0 0.0
    %2143 = vmatpush2.msra.mxu0 %v342
    %2144 = vmatprep.subr.mxu0 0.0
    %2145 = vmatpush2.msra.mxu0 %v335
    %2146 = vmatprep.mubr.f32.mxu0 %v1866
    %2147 = vmatmul.mubr.f32.gmra.mxu0 %v1865
    %v2148 = vpop.f32.mrf.mxu0
    %v2149 = vadd.f32 %v492, %v2148
    %v2150 = vpop.f32.mrf.mxu0
    %2151 = vdwg.mxu0
    %v2152 = vxor.u32 %v1936, 2147483648
    %v2153 = vmul.f32 %v2152, 1.442695
    %v2154 = vpow.pop %v2153
    %v2155 = vadd.f32 %v2154, 1.0
    %v2156 = vrcp.pop %v2155
    %v2157 = vmul.f32 1.0, %v2156
    %v2158 = vxor.u32 %v1938, 2147483648
    %v2159 = vmul.f32 %v2158, 1.442695
    %v2160 = vpow.pop %v2159
    %v2161 = vadd.f32 %v2160, 1.0
    %v2162 = vrcp.pop %v2161
    %v2163 = vmul.f32 1.0, %v2162
    %v2164 = vmul.f32 %v2157, %v2009
    %v2165 = vadd.f32 %v2007, %v2164
    %v2166 = vtanh.pop %v2165
    %v2167 = vsub.f32 1.0, %v2163
    %v2168 = vmul.f32 %v2167, %v2166
    %v2169 = vmul.f32 %v2163, %v1828
    %v2170 = vadd.f32 %v2168, %v2169
    %v2172 = vrot.slane %v2078, 3
    %v2174 = vadd.f32 %v142, %v2172
    %v2175 = vxor.u32 %v2174, 2147483648
    %v2176 = vmul.f32 %v2175, 1.442695
    %v2177 = vpow.pop %v2176
    %v2178 = vadd.f32 %v2177, 1.0
    %v2179 = vrcp.pop %v2178
    %v2180 = vmul.f32 1.0, %v2179
    %v2182 = vrot.slane %v2080, 3
    %v2184 = vadd.f32 %v144, %v2182
    %v2185 = vxor.u32 %v2184, 2147483648
    %v2186 = vmul.f32 %v2185, 1.442695
    %v2187 = vpow.pop %v2186
    %v2188 = vadd.f32 %v2187, 1.0
    %v2189 = vrcp.pop %v2188
    %v2190 = vmul.f32 1.0, %v2189
    %v2191 = vadd.f32 %v2149, %v216
    %v2193 = vrot.slane %v2191, 3
    %v2195 = vmul.f32 %v2180, %v2193
    %v2196 = vadd.f32 %v213, %v2195
    %v2197 = vtanh.pop %v2196
    %v2198 = vsub.f32 1.0, %v2190
    %v2199 = vmul.f32 %v2198, %v2197
    %v2200 = vrot.slane %v1861, 7
    %v2202 = vmul.f32 %v2190, %v2200
    %v2203 = vadd.f32 %v2199, %v2202
    %v2205 = vrot.slane %v2170, 3
    %v2207 = vrot.slane %v2203, 5
    %v2208 = vrot.slane %v2205, 5
    %2211 = vmatprep.subr.mxu0 %v323
    %2212 = vmatpush1.msra.mxu0 %v322
    %2213 = vmatprep.subr.mxu0 %v316
    %2214 = vmatpush1.msra.mxu0 %v315
    %2215 = vmatprep.subr.mxu0 %v309
    %2216 = vmatpush1.msra.mxu0 %v308
    %2217 = vmatprep.subr.mxu0 %v302
    %2218 = vmatpush1.msra.mxu0 %v301
    %2219 = vmatprep.subr.mxu0 %v295
    %2220 = vmatpush1.msra.mxu0 %v294
    %2221 = vmatprep.subr.mxu0 %v288
    %2222 = vmatpush1.msra.mxu0 %v287
    %2223 = vmatprep.subr.mxu0 %v281
    %2224 = vmatpush1.msra.mxu0 %v280
    %2225 = vmatprep.subr.mxu0 %v274
    %2226 = vmatpush1.msra.mxu0 %v273
    %2227 = vmatprep.subr.mxu0 %v267
    %2228 = vmatpush1.msra.mxu0 %v266
    %2229 = vmatprep.subr.mxu0 %v260
    %2230 = vmatpush1.msra.mxu0 %v259
    %2231 = vmatprep.subr.mxu0 %v253
    %2232 = vmatpush1.msra.mxu0 %v252
    %2233 = vmatprep.subr.mxu0 %v246
    %2234 = vmatpush1.msra.mxu0 %v245
    %2235 = vmatprep.subr.mxu0 %v239
    %2236 = vmatpush1.msra.mxu0 %v238
    %2237 = vmatprep.subr.mxu0 %v232
    %2238 = vmatpush1.msra.mxu0 %v231
    %2239 = vmatprep.subr.mxu0 %v225
    %2240 = vmatpush1.msra.mxu0 %v224
    %2241 = vmatprep.subr.mxu0 %v218
    %2242 = vmatpush1.msra.mxu0 %v217
    %2243 = vmatprep.subr.mxu0 %v435
    %2244 = vmatpush2.msra.mxu0 %v434
    %2245 = vmatprep.subr.mxu0 %v428
    %2246 = vmatpush2.msra.mxu0 %v427
    %2247 = vmatprep.subr.mxu0 %v421
    %2248 = vmatpush2.msra.mxu0 %v420
    %2249 = vmatprep.subr.mxu0 %v414
    %2250 = vmatpush2.msra.mxu0 %v413
    %2251 = vmatprep.subr.mxu0 %v407
    %2252 = vmatpush2.msra.mxu0 %v406
    %2253 = vmatprep.subr.mxu0 %v400
    %2254 = vmatpush2.msra.mxu0 %v399
    %2255 = vmatprep.subr.mxu0 %v393
    %2256 = vmatpush2.msra.mxu0 %v392
    %2257 = vmatprep.subr.mxu0 %v386
    %2258 = vmatpush2.msra.mxu0 %v385
    %2259 = vmatprep.subr.mxu0 %v379
    %2260 = vmatpush2.msra.mxu0 %v378
    %2261 = vmatprep.subr.mxu0 %v372
    %2262 = vmatpush2.msra.mxu0 %v371
    %2263 = vmatprep.subr.mxu0 %v365
    %2264 = vmatpush2.msra.mxu0 %v364
    %2265 = vmatprep.subr.mxu0 %v358
    %2266 = vmatpush2.msra.mxu0 %v357
    %2267 = vmatprep.subr.mxu0 %v351
    %2268 = vmatpush2.msra.mxu0 %v350
    %2269 = vmatprep.subr.mxu0 %v344
    %2270 = vmatpush2.msra.mxu0 %v343
    %2271 = vmatprep.subr.mxu0 %v337
    %2272 = vmatpush2.msra.mxu0 %v336
    %2273 = vmatprep.subr.mxu0 %v330
    %2274 = vmatpush2.msra.mxu0 %v329
    %2275 = vmatprep.mubr.f32.mxu0 %v2208
    %2276 = vmatmul.mubr.f32.gmra.mxu0 %v2207
    %v2277 = vpop.f32.mrf.mxu0
    %v2278 = vadd.f32 %v468, %v2277
    %v2279 = vpop.f32.mrf.mxu0
    %v2280 = vadd.f32 %v472, %v2279
    %2281 = vdwg.mxu0
    %2282 = vmatprep.subr.mxu0 %v325
    %2283 = vmatpush1.msra.mxu0 %v324
    %2284 = vmatprep.subr.mxu0 %v318
    %2285 = vmatpush1.msra.mxu0 %v317
    %2286 = vmatprep.subr.mxu0 %v311
    %2287 = vmatpush1.msra.mxu0 %v310
    %2288 = vmatprep.subr.mxu0 %v304
    %2289 = vmatpush1.msra.mxu0 %v303
    %2290 = vmatprep.subr.mxu0 %v297
    %2291 = vmatpush1.msra.mxu0 %v296
    %2292 = vmatprep.subr.mxu0 %v290
    %2293 = vmatpush1.msra.mxu0 %v289
    %2294 = vmatprep.subr.mxu0 %v283
    %2295 = vmatpush1.msra.mxu0 %v282
    %2296 = vmatprep.subr.mxu0 %v276
    %2297 = vmatpush1.msra.mxu0 %v275
    %2298 = vmatprep.subr.mxu0 %v269
    %2299 = vmatpush1.msra.mxu0 %v268
    %2300 = vmatprep.subr.mxu0 %v262
    %2301 = vmatpush1.msra.mxu0 %v261
    %2302 = vmatprep.subr.mxu0 %v255
    %2303 = vmatpush1.msra.mxu0 %v254
    %2304 = vmatprep.subr.mxu0 %v248
    %2305 = vmatpush1.msra.mxu0 %v247
    %2306 = vmatprep.subr.mxu0 %v241
    %2307 = vmatpush1.msra.mxu0 %v240
    %2308 = vmatprep.subr.mxu0 %v234
    %2309 = vmatpush1.msra.mxu0 %v233
    %2310 = vmatprep.subr.mxu0 %v227
    %2311 = vmatpush1.msra.mxu0 %v226
    %2312 = vmatprep.subr.mxu0 %v220
    %2313 = vmatpush1.msra.mxu0 %v219
    %2314 = vmatprep.subr.mxu0 %v437
    %2315 = vmatpush2.msra.mxu0 %v436
    %2316 = vmatprep.subr.mxu0 %v430
    %2317 = vmatpush2.msra.mxu0 %v429
    %2318 = vmatprep.subr.mxu0 %v423
    %2319 = vmatpush2.msra.mxu0 %v422
    %2320 = vmatprep.subr.mxu0 %v416
    %2321 = vmatpush2.msra.mxu0 %v415
    %2322 = vmatprep.subr.mxu0 %v409
    %2323 = vmatpush2.msra.mxu0 %v408
    %2324 = vmatprep.subr.mxu0 %v402
    %2325 = vmatpush2.msra.mxu0 %v401
    %2326 = vmatprep.subr.mxu0 %v395
    %2327 = vmatpush2.msra.mxu0 %v394
    %2328 = vmatprep.subr.mxu0 %v388
    %2329 = vmatpush2.msra.mxu0 %v387
    %2330 = vmatprep.subr.mxu0 %v381
    %2331 = vmatpush2.msra.mxu0 %v380
    %2332 = vmatprep.subr.mxu0 %v374
    %2333 = vmatpush2.msra.mxu0 %v373
    %2334 = vmatprep.subr.mxu0 %v367
    %2335 = vmatpush2.msra.mxu0 %v366
    %2336 = vmatprep.subr.mxu0 %v360
    %2337 = vmatpush2.msra.mxu0 %v359
    %2338 = vmatprep.subr.mxu0 %v353
    %2339 = vmatpush2.msra.mxu0 %v352
    %2340 = vmatprep.subr.mxu0 %v346
    %2341 = vmatpush2.msra.mxu0 %v345
    %2342 = vmatprep.subr.mxu0 %v339
    %2343 = vmatpush2.msra.mxu0 %v338
    %2344 = vmatprep.subr.mxu0 %v332
    %2345 = vmatpush2.msra.mxu0 %v331
    %2346 = vmatprep.mubr.f32.mxu0 %v2208
    %2347 = vmatmul.mubr.f32.gmra.mxu0 %v2207
    %v2348 = vpop.f32.mrf.mxu0
    %v2349 = vadd.f32 %v476, %v2348
    %v2350 = vpop.f32.mrf.mxu0
    %v2351 = vadd.f32 %v480, %v2350
    %2352 = vdwg.mxu0
    %2353 = vmatprep.subr.mxu0 %v327
    %2354 = vmatpush1.msra.mxu0 %v326
    %2355 = vmatprep.subr.mxu0 %v320
    %2356 = vmatpush1.msra.mxu0 %v319
    %2357 = vmatprep.subr.mxu0 %v313
    %2358 = vmatpush1.msra.mxu0 %v312
    %2359 = vmatprep.subr.mxu0 %v306
    %2360 = vmatpush1.msra.mxu0 %v305
    %2361 = vmatprep.subr.mxu0 %v299
    %2362 = vmatpush1.msra.mxu0 %v298
    %2363 = vmatprep.subr.mxu0 %v292
    %2364 = vmatpush1.msra.mxu0 %v291
    %2365 = vmatprep.subr.mxu0 %v285
    %2366 = vmatpush1.msra.mxu0 %v284
    %2367 = vmatprep.subr.mxu0 %v278
    %2368 = vmatpush1.msra.mxu0 %v277
    %2369 = vmatprep.subr.mxu0 %v271
    %2370 = vmatpush1.msra.mxu0 %v270
    %2371 = vmatprep.subr.mxu0 %v264
    %2372 = vmatpush1.msra.mxu0 %v263
    %2373 = vmatprep.subr.mxu0 %v257
    %2374 = vmatpush1.msra.mxu0 %v256
    %2375 = vmatprep.subr.mxu0 %v250
    %2376 = vmatpush1.msra.mxu0 %v249
    %2377 = vmatprep.subr.mxu0 %v243
    %2378 = vmatpush1.msra.mxu0 %v242
    %2379 = vmatprep.subr.mxu0 %v236
    %2380 = vmatpush1.msra.mxu0 %v235
    %2381 = vmatprep.subr.mxu0 %v229
    %2382 = vmatpush1.msra.mxu0 %v228
    %2383 = vmatprep.subr.mxu0 %v222
    %2384 = vmatpush1.msra.mxu0 %v221
    %2385 = vmatprep.subr.mxu0 %v439
    %2386 = vmatpush2.msra.mxu0 %v438
    %2387 = vmatprep.subr.mxu0 %v432
    %2388 = vmatpush2.msra.mxu0 %v431
    %2389 = vmatprep.subr.mxu0 %v425
    %2390 = vmatpush2.msra.mxu0 %v424
    %2391 = vmatprep.subr.mxu0 %v418
    %2392 = vmatpush2.msra.mxu0 %v417
    %2393 = vmatprep.subr.mxu0 %v411
    %2394 = vmatpush2.msra.mxu0 %v410
    %2395 = vmatprep.subr.mxu0 %v404
    %2396 = vmatpush2.msra.mxu0 %v403
    %2397 = vmatprep.subr.mxu0 %v397
    %2398 = vmatpush2.msra.mxu0 %v396
    %2399 = vmatprep.subr.mxu0 %v390
    %2400 = vmatpush2.msra.mxu0 %v389
    %2401 = vmatprep.subr.mxu0 %v383
    %2402 = vmatpush2.msra.mxu0 %v382
    %2403 = vmatprep.subr.mxu0 %v376
    %2404 = vmatpush2.msra.mxu0 %v375
    %2405 = vmatprep.subr.mxu0 %v369
    %2406 = vmatpush2.msra.mxu0 %v368
    %2407 = vmatprep.subr.mxu0 %v362
    %2408 = vmatpush2.msra.mxu0 %v361
    %2409 = vmatprep.subr.mxu0 %v355
    %2410 = vmatpush2.msra.mxu0 %v354
    %2411 = vmatprep.subr.mxu0 %v348
    %2412 = vmatpush2.msra.mxu0 %v347
    %2413 = vmatprep.subr.mxu0 %v341
    %2414 = vmatpush2.msra.mxu0 %v340
    %2415 = vmatprep.subr.mxu0 %v334
    %2416 = vmatpush2.msra.mxu0 %v333
    %2417 = vmatprep.mubr.f32.mxu0 %v2208
    %2418 = vmatmul.mubr.f32.gmra.mxu0 %v2207
    %v2419 = vpop.f32.mrf.mxu0
    %v2420 = vadd.f32 %v484, %v2419
    %v2421 = vpop.f32.mrf.mxu0
    %v2422 = vadd.f32 %v488, %v2421
    %2423 = vdwg.mxu0
    %2424 = vmatprep.subr.mxu0 0.0
    %2425 = vmatpush1.msra.mxu0 %v328
    %2426 = vmatprep.subr.mxu0 0.0
    %2427 = vmatpush1.msra.mxu0 %v321
    %2428 = vmatprep.subr.mxu0 0.0
    %2429 = vmatpush1.msra.mxu0 %v314
    %2430 = vmatprep.subr.mxu0 0.0
    %2431 = vmatpush1.msra.mxu0 %v307
    %2432 = vmatprep.subr.mxu0 0.0
    %2433 = vmatpush1.msra.mxu0 %v300
    %2434 = vmatprep.subr.mxu0 0.0
    %2435 = vmatpush1.msra.mxu0 %v293
    %2436 = vmatprep.subr.mxu0 0.0
    %2437 = vmatpush1.msra.mxu0 %v286
    %2438 = vmatprep.subr.mxu0 0.0
    %2439 = vmatpush1.msra.mxu0 %v279
    %2440 = vmatprep.subr.mxu0 0.0
    %2441 = vmatpush1.msra.mxu0 %v272
    %2442 = vmatprep.subr.mxu0 0.0
    %2443 = vmatpush1.msra.mxu0 %v265
    %2444 = vmatprep.subr.mxu0 0.0
    %2445 = vmatpush1.msra.mxu0 %v258
    %2446 = vmatprep.subr.mxu0 0.0
    %2447 = vmatpush1.msra.mxu0 %v251
    %2448 = vmatprep.subr.mxu0 0.0
    %2449 = vmatpush1.msra.mxu0 %v244
    %2450 = vmatprep.subr.mxu0 0.0
    %2451 = vmatpush1.msra.mxu0 %v237
    %2452 = vmatprep.subr.mxu0 0.0
    %2453 = vmatpush1.msra.mxu0 %v230
    %2454 = vmatprep.subr.mxu0 0.0
    %2455 = vmatpush1.msra.mxu0 %v223
    %2456 = vmatprep.subr.mxu0 0.0
    %2457 = vmatpush2.msra.mxu0 %v440
    %2458 = vmatprep.subr.mxu0 0.0
    %2459 = vmatpush2.msra.mxu0 %v433
    %2460 = vmatprep.subr.mxu0 0.0
    %2461 = vmatpush2.msra.mxu0 %v426
    %2462 = vmatprep.subr.mxu0 0.0
    %2463 = vmatpush2.msra.mxu0 %v419
    %2464 = vmatprep.subr.mxu0 0.0
    %2465 = vmatpush2.msra.mxu0 %v412
    %2466 = vmatprep.subr.mxu0 0.0
    %2467 = vmatpush2.msra.mxu0 %v405
    %2468 = vmatprep.subr.mxu0 0.0
    %2469 = vmatpush2.msra.mxu0 %v398
    %2470 = vmatprep.subr.mxu0 0.0
    %2471 = vmatpush2.msra.mxu0 %v391
    %2472 = vmatprep.subr.mxu0 0.0
    %2473 = vmatpush2.msra.mxu0 %v384
    %2474 = vmatprep.subr.mxu0 0.0
    %2475 = vmatpush2.msra.mxu0 %v377
    %2476 = vmatprep.subr.mxu0 0.0
    %2477 = vmatpush2.msra.mxu0 %v370
    %2478 = vmatprep.subr.mxu0 0.0
    %2479 = vmatpush2.msra.mxu0 %v363
    %2480 = vmatprep.subr.mxu0 0.0
    %2481 = vmatpush2.msra.mxu0 %v356
    %2482 = vmatprep.subr.mxu0 0.0
    %2483 = vmatpush2.msra.mxu0 %v349
    %2484 = vmatprep.subr.mxu0 0.0
    %2485 = vmatpush2.msra.mxu0 %v342
    %2486 = vmatprep.subr.mxu0 0.0
    %2487 = vmatpush2.msra.mxu0 %v335
    %2488 = vmatprep.mubr.f32.mxu0 %v2208
    %2489 = vmatmul.mubr.f32.gmra.mxu0 %v2207
    %v2490 = vpop.f32.mrf.mxu0
    %v2491 = vadd.f32 %v492, %v2490
    %v2492 = vpop.f32.mrf.mxu0
    %2493 = vdwg.mxu0
    %v2494 = vxor.u32 %v2278, 2147483648
    %v2495 = vmul.f32 %v2494, 1.442695
    %v2496 = vpow.pop %v2495
    %v2497 = vadd.f32 %v2496, 1.0
    %v2498 = vrcp.pop %v2497
    %v2499 = vmul.f32 1.0, %v2498
    %v2500 = vxor.u32 %v2280, 2147483648
    %v2501 = vmul.f32 %v2500, 1.442695
    %v2502 = vpow.pop %v2501
    %v2503 = vadd.f32 %v2502, 1.0
    %v2504 = vrcp.pop %v2503
    %v2505 = vmul.f32 1.0, %v2504
    %v2506 = vmul.f32 %v2499, %v2351
    %v2507 = vadd.f32 %v2349, %v2506
    %v2508 = vtanh.pop %v2507
    %v2509 = vsub.f32 1.0, %v2505
    %v2510 = vmul.f32 %v2509, %v2508
    %v2511 = vmul.f32 %v2505, %v2170
    %v2512 = vadd.f32 %v2510, %v2511
    %v2514 = vrot.slane %v2420, 2
    %v2516 = vadd.f32 %v142, %v2514
    %v2517 = vxor.u32 %v2516, 2147483648
    %v2518 = vmul.f32 %v2517, 1.442695
    %v2519 = vpow.pop %v2518
    %v2520 = vadd.f32 %v2519, 1.0
    %v2521 = vrcp.pop %v2520
    %v2522 = vmul.f32 1.0, %v2521
    %v2524 = vrot.slane %v2422, 2
    %v2526 = vadd.f32 %v144, %v2524
    %v2527 = vxor.u32 %v2526, 2147483648
    %v2528 = vmul.f32 %v2527, 1.442695
    %v2529 = vpow.pop %v2528
    %v2530 = vadd.f32 %v2529, 1.0
    %v2531 = vrcp.pop %v2530
    %v2532 = vmul.f32 1.0, %v2531
    %v2533 = vadd.f32 %v2491, %v216
    %v2535 = vrot.slane %v2533, 2
    %v2537 = vmul.f32 %v2522, %v2535
    %v2538 = vadd.f32 %v213, %v2537
    %v2539 = vtanh.pop %v2538
    %v2540 = vsub.f32 1.0, %v2532
    %v2541 = vmul.f32 %v2540, %v2539
    %v2542 = vrot.slane %v2203, 7
    %v2544 = vmul.f32 %v2532, %v2542
    %v2545 = vadd.f32 %v2541, %v2544
    %v2547 = vrot.slane %v2512, 2
    %v2549 = vrot.slane %v2545, 6
    %v2550 = vrot.slane %v2547, 6
    %2553 = vmatprep.subr.mxu0 %v323
    %2554 = vmatpush1.msra.mxu0 %v322
    %2555 = vmatprep.subr.mxu0 %v316
    %2556 = vmatpush1.msra.mxu0 %v315
    %2557 = vmatprep.subr.mxu0 %v309
    %2558 = vmatpush1.msra.mxu0 %v308
    %2559 = vmatprep.subr.mxu0 %v302
    %2560 = vmatpush1.msra.mxu0 %v301
    %2561 = vmatprep.subr.mxu0 %v295
    %2562 = vmatpush1.msra.mxu0 %v294
    %2563 = vmatprep.subr.mxu0 %v288
    %2564 = vmatpush1.msra.mxu0 %v287
    %2565 = vmatprep.subr.mxu0 %v281
    %2566 = vmatpush1.msra.mxu0 %v280
    %2567 = vmatprep.subr.mxu0 %v274
    %2568 = vmatpush1.msra.mxu0 %v273
    %2569 = vmatprep.subr.mxu0 %v267
    %2570 = vmatpush1.msra.mxu0 %v266
    %2571 = vmatprep.subr.mxu0 %v260
    %2572 = vmatpush1.msra.mxu0 %v259
    %2573 = vmatprep.subr.mxu0 %v253
    %2574 = vmatpush1.msra.mxu0 %v252
    %2575 = vmatprep.subr.mxu0 %v246
    %2576 = vmatpush1.msra.mxu0 %v245
    %2577 = vmatprep.subr.mxu0 %v239
    %2578 = vmatpush1.msra.mxu0 %v238
    %2579 = vmatprep.subr.mxu0 %v232
    %2580 = vmatpush1.msra.mxu0 %v231
    %2581 = vmatprep.subr.mxu0 %v225
    %2582 = vmatpush1.msra.mxu0 %v224
    %2583 = vmatprep.subr.mxu0 %v218
    %2584 = vmatpush1.msra.mxu0 %v217
    %2585 = vmatprep.subr.mxu0 %v435
    %2586 = vmatpush2.msra.mxu0 %v434
    %2587 = vmatprep.subr.mxu0 %v428
    %2588 = vmatpush2.msra.mxu0 %v427
    %2589 = vmatprep.subr.mxu0 %v421
    %2590 = vmatpush2.msra.mxu0 %v420
    %2591 = vmatprep.subr.mxu0 %v414
    %2592 = vmatpush2.msra.mxu0 %v413
    %2593 = vmatprep.subr.mxu0 %v407
    %2594 = vmatpush2.msra.mxu0 %v406
    %2595 = vmatprep.subr.mxu0 %v400
    %2596 = vmatpush2.msra.mxu0 %v399
    %2597 = vmatprep.subr.mxu0 %v393
    %2598 = vmatpush2.msra.mxu0 %v392
    %2599 = vmatprep.subr.mxu0 %v386
    %2600 = vmatpush2.msra.mxu0 %v385
    %2601 = vmatprep.subr.mxu0 %v379
    %2602 = vmatpush2.msra.mxu0 %v378
    %2603 = vmatprep.subr.mxu0 %v372
    %2604 = vmatpush2.msra.mxu0 %v371
    %2605 = vmatprep.subr.mxu0 %v365
    %2606 = vmatpush2.msra.mxu0 %v364
    %2607 = vmatprep.subr.mxu0 %v358
    %2608 = vmatpush2.msra.mxu0 %v357
    %2609 = vmatprep.subr.mxu0 %v351
    %2610 = vmatpush2.msra.mxu0 %v350
    %2611 = vmatprep.subr.mxu0 %v344
    %2612 = vmatpush2.msra.mxu0 %v343
    %2613 = vmatprep.subr.mxu0 %v337
    %2614 = vmatpush2.msra.mxu0 %v336
    %2615 = vmatprep.subr.mxu0 %v330
    %2616 = vmatpush2.msra.mxu0 %v329
    %2617 = vmatprep.mubr.f32.mxu0 %v2550
    %2618 = vmatmul.mubr.f32.gmra.mxu0 %v2549
    %v2619 = vpop.f32.mrf.mxu0
    %v2620 = vadd.f32 %v468, %v2619
    %v2621 = vpop.f32.mrf.mxu0
    %v2622 = vadd.f32 %v472, %v2621
    %2623 = vdwg.mxu0
    %2624 = vmatprep.subr.mxu0 %v325
    %2625 = vmatpush1.msra.mxu0 %v324
    %2626 = vmatprep.subr.mxu0 %v318
    %2627 = vmatpush1.msra.mxu0 %v317
    %2628 = vmatprep.subr.mxu0 %v311
    %2629 = vmatpush1.msra.mxu0 %v310
    %2630 = vmatprep.subr.mxu0 %v304
    %2631 = vmatpush1.msra.mxu0 %v303
    %2632 = vmatprep.subr.mxu0 %v297
    %2633 = vmatpush1.msra.mxu0 %v296
    %2634 = vmatprep.subr.mxu0 %v290
    %2635 = vmatpush1.msra.mxu0 %v289
    %2636 = vmatprep.subr.mxu0 %v283
    %2637 = vmatpush1.msra.mxu0 %v282
    %2638 = vmatprep.subr.mxu0 %v276
    %2639 = vmatpush1.msra.mxu0 %v275
    %2640 = vmatprep.subr.mxu0 %v269
    %2641 = vmatpush1.msra.mxu0 %v268
    %2642 = vmatprep.subr.mxu0 %v262
    %2643 = vmatpush1.msra.mxu0 %v261
    %2644 = vmatprep.subr.mxu0 %v255
    %2645 = vmatpush1.msra.mxu0 %v254
    %2646 = vmatprep.subr.mxu0 %v248
    %2647 = vmatpush1.msra.mxu0 %v247
    %2648 = vmatprep.subr.mxu0 %v241
    %2649 = vmatpush1.msra.mxu0 %v240
    %2650 = vmatprep.subr.mxu0 %v234
    %2651 = vmatpush1.msra.mxu0 %v233
    %2652 = vmatprep.subr.mxu0 %v227
    %2653 = vmatpush1.msra.mxu0 %v226
    %2654 = vmatprep.subr.mxu0 %v220
    %2655 = vmatpush1.msra.mxu0 %v219
    %2656 = vmatprep.subr.mxu0 %v437
    %2657 = vmatpush2.msra.mxu0 %v436
    %2658 = vmatprep.subr.mxu0 %v430
    %2659 = vmatpush2.msra.mxu0 %v429
    %2660 = vmatprep.subr.mxu0 %v423
    %2661 = vmatpush2.msra.mxu0 %v422
    %2662 = vmatprep.subr.mxu0 %v416
    %2663 = vmatpush2.msra.mxu0 %v415
    %2664 = vmatprep.subr.mxu0 %v409
    %2665 = vmatpush2.msra.mxu0 %v408
    %2666 = vmatprep.subr.mxu0 %v402
    %2667 = vmatpush2.msra.mxu0 %v401
    %2668 = vmatprep.subr.mxu0 %v395
    %2669 = vmatpush2.msra.mxu0 %v394
    %2670 = vmatprep.subr.mxu0 %v388
    %2671 = vmatpush2.msra.mxu0 %v387
    %2672 = vmatprep.subr.mxu0 %v381
    %2673 = vmatpush2.msra.mxu0 %v380
    %2674 = vmatprep.subr.mxu0 %v374
    %2675 = vmatpush2.msra.mxu0 %v373
    %2676 = vmatprep.subr.mxu0 %v367
    %2677 = vmatpush2.msra.mxu0 %v366
    %2678 = vmatprep.subr.mxu0 %v360
    %2679 = vmatpush2.msra.mxu0 %v359
    %2680 = vmatprep.subr.mxu0 %v353
    %2681 = vmatpush2.msra.mxu0 %v352
    %2682 = vmatprep.subr.mxu0 %v346
    %2683 = vmatpush2.msra.mxu0 %v345
    %2684 = vmatprep.subr.mxu0 %v339
    %2685 = vmatpush2.msra.mxu0 %v338
    %2686 = vmatprep.subr.mxu0 %v332
    %2687 = vmatpush2.msra.mxu0 %v331
    %2688 = vmatprep.mubr.f32.mxu0 %v2550
    %2689 = vmatmul.mubr.f32.gmra.mxu0 %v2549
    %v2690 = vpop.f32.mrf.mxu0
    %v2691 = vadd.f32 %v476, %v2690
    %v2692 = vpop.f32.mrf.mxu0
    %v2693 = vadd.f32 %v480, %v2692
    %2694 = vdwg.mxu0
    %2695 = vmatprep.subr.mxu0 %v327
    %2696 = vmatpush1.msra.mxu0 %v326
    %2697 = vmatprep.subr.mxu0 %v320
    %2698 = vmatpush1.msra.mxu0 %v319
    %2699 = vmatprep.subr.mxu0 %v313
    %2700 = vmatpush1.msra.mxu0 %v312
    %2701 = vmatprep.subr.mxu0 %v306
    %2702 = vmatpush1.msra.mxu0 %v305
    %2703 = vmatprep.subr.mxu0 %v299
    %2704 = vmatpush1.msra.mxu0 %v298
    %2705 = vmatprep.subr.mxu0 %v292
    %2706 = vmatpush1.msra.mxu0 %v291
    %2707 = vmatprep.subr.mxu0 %v285
    %2708 = vmatpush1.msra.mxu0 %v284
    %2709 = vmatprep.subr.mxu0 %v278
    %2710 = vmatpush1.msra.mxu0 %v277
    %2711 = vmatprep.subr.mxu0 %v271
    %2712 = vmatpush1.msra.mxu0 %v270
    %2713 = vmatprep.subr.mxu0 %v264
    %2714 = vmatpush1.msra.mxu0 %v263
    %2715 = vmatprep.subr.mxu0 %v257
    %2716 = vmatpush1.msra.mxu0 %v256
    %2717 = vmatprep.subr.mxu0 %v250
    %2718 = vmatpush1.msra.mxu0 %v249
    %2719 = vmatprep.subr.mxu0 %v243
    %2720 = vmatpush1.msra.mxu0 %v242
    %2721 = vmatprep.subr.mxu0 %v236
    %2722 = vmatpush1.msra.mxu0 %v235
    %2723 = vmatprep.subr.mxu0 %v229
    %2724 = vmatpush1.msra.mxu0 %v228
    %2725 = vmatprep.subr.mxu0 %v222
    %2726 = vmatpush1.msra.mxu0 %v221
    %2727 = vmatprep.subr.mxu0 %v439
    %2728 = vmatpush2.msra.mxu0 %v438
    %2729 = vmatprep.subr.mxu0 %v432
    %2730 = vmatpush2.msra.mxu0 %v431
    %2731 = vmatprep.subr.mxu0 %v425
    %2732 = vmatpush2.msra.mxu0 %v424
    %2733 = vmatprep.subr.mxu0 %v418
    %2734 = vmatpush2.msra.mxu0 %v417
    %2735 = vmatprep.subr.mxu0 %v411
    %2736 = vmatpush2.msra.mxu0 %v410
    %2737 = vmatprep.subr.mxu0 %v404
    %2738 = vmatpush2.msra.mxu0 %v403
    %2739 = vmatprep.subr.mxu0 %v397
    %2740 = vmatpush2.msra.mxu0 %v396
    %2741 = vmatprep.subr.mxu0 %v390
    %2742 = vmatpush2.msra.mxu0 %v389
    %2743 = vmatprep.subr.mxu0 %v383
    %2744 = vmatpush2.msra.mxu0 %v382
    %2745 = vmatprep.subr.mxu0 %v376
    %2746 = vmatpush2.msra.mxu0 %v375
    %2747 = vmatprep.subr.mxu0 %v369
    %2748 = vmatpush2.msra.mxu0 %v368
    %2749 = vmatprep.subr.mxu0 %v362
    %2750 = vmatpush2.msra.mxu0 %v361
    %2751 = vmatprep.subr.mxu0 %v355
    %2752 = vmatpush2.msra.mxu0 %v354
    %2753 = vmatprep.subr.mxu0 %v348
    %2754 = vmatpush2.msra.mxu0 %v347
    %2755 = vmatprep.subr.mxu0 %v341
    %2756 = vmatpush2.msra.mxu0 %v340
    %2757 = vmatprep.subr.mxu0 %v334
    %2758 = vmatpush2.msra.mxu0 %v333
    %2759 = vmatprep.mubr.f32.mxu0 %v2550
    %2760 = vmatmul.mubr.f32.gmra.mxu0 %v2549
    %v2761 = vpop.f32.mrf.mxu0
    %v2762 = vadd.f32 %v484, %v2761
    %v2763 = vpop.f32.mrf.mxu0
    %v2764 = vadd.f32 %v488, %v2763
    %2765 = vdwg.mxu0
    %2766 = vmatprep.subr.mxu0 0.0
    %2767 = vmatpush1.msra.mxu0 %v328
    %2768 = vmatprep.subr.mxu0 0.0
    %2769 = vmatpush1.msra.mxu0 %v321
    %2770 = vmatprep.subr.mxu0 0.0
    %2771 = vmatpush1.msra.mxu0 %v314
    %2772 = vmatprep.subr.mxu0 0.0
    %2773 = vmatpush1.msra.mxu0 %v307
    %2774 = vmatprep.subr.mxu0 0.0
    %2775 = vmatpush1.msra.mxu0 %v300
    %2776 = vmatprep.subr.mxu0 0.0
    %2777 = vmatpush1.msra.mxu0 %v293
    %2778 = vmatprep.subr.mxu0 0.0
    %2779 = vmatpush1.msra.mxu0 %v286
    %2780 = vmatprep.subr.mxu0 0.0
    %2781 = vmatpush1.msra.mxu0 %v279
    %2782 = vmatprep.subr.mxu0 0.0
    %2783 = vmatpush1.msra.mxu0 %v272
    %2784 = vmatprep.subr.mxu0 0.0
    %2785 = vmatpush1.msra.mxu0 %v265
    %2786 = vmatprep.subr.mxu0 0.0
    %2787 = vmatpush1.msra.mxu0 %v258
    %2788 = vmatprep.subr.mxu0 0.0
    %2789 = vmatpush1.msra.mxu0 %v251
    %2790 = vmatprep.subr.mxu0 0.0
    %2791 = vmatpush1.msra.mxu0 %v244
    %2792 = vmatprep.subr.mxu0 0.0
    %2793 = vmatpush1.msra.mxu0 %v237
    %2794 = vmatprep.subr.mxu0 0.0
    %2795 = vmatpush1.msra.mxu0 %v230
    %2796 = vmatprep.subr.mxu0 0.0
    %2797 = vmatpush1.msra.mxu0 %v223
    %2798 = vmatprep.subr.mxu0 0.0
    %2799 = vmatpush2.msra.mxu0 %v440
    %2800 = vmatprep.subr.mxu0 0.0
    %2801 = vmatpush2.msra.mxu0 %v433
    %2802 = vmatprep.subr.mxu0 0.0
    %2803 = vmatpush2.msra.mxu0 %v426
    %2804 = vmatprep.subr.mxu0 0.0
    %2805 = vmatpush2.msra.mxu0 %v419
    %2806 = vmatprep.subr.mxu0 0.0
    %2807 = vmatpush2.msra.mxu0 %v412
    %2808 = vmatprep.subr.mxu0 0.0
    %2809 = vmatpush2.msra.mxu0 %v405
    %2810 = vmatprep.subr.mxu0 0.0
    %2811 = vmatpush2.msra.mxu0 %v398
    %2812 = vmatprep.subr.mxu0 0.0
    %2813 = vmatpush2.msra.mxu0 %v391
    %2814 = vmatprep.subr.mxu0 0.0
    %2815 = vmatpush2.msra.mxu0 %v384
    %2816 = vmatprep.subr.mxu0 0.0
    %2817 = vmatpush2.msra.mxu0 %v377
    %2818 = vmatprep.subr.mxu0 0.0
    %2819 = vmatpush2.msra.mxu0 %v370
    %2820 = vmatprep.subr.mxu0 0.0
    %2821 = vmatpush2.msra.mxu0 %v363
    %2822 = vmatprep.subr.mxu0 0.0
    %2823 = vmatpush2.msra.mxu0 %v356
    %2824 = vmatprep.subr.mxu0 0.0
    %2825 = vmatpush2.msra.mxu0 %v349
    %2826 = vmatprep.subr.mxu0 0.0
    %2827 = vmatpush2.msra.mxu0 %v342
    %2828 = vmatprep.subr.mxu0 0.0
    %2829 = vmatpush2.msra.mxu0 %v335
    %2830 = vmatprep.mubr.f32.mxu0 %v2550
    %2831 = vmatmul.mubr.f32.gmra.mxu0 %v2549
    %v2832 = vpop.f32.mrf.mxu0
    %v2833 = vadd.f32 %v492, %v2832
    %v2834 = vpop.f32.mrf.mxu0
    %2835 = vdwg.mxu0
    %v2836 = vxor.u32 %v2620, 2147483648
    %v2837 = vmul.f32 %v2836, 1.442695
    %v2838 = vpow.pop %v2837
    %v2839 = vadd.f32 %v2838, 1.0
    %v2840 = vrcp.pop %v2839
    %v2841 = vmul.f32 1.0, %v2840
    %v2842 = vxor.u32 %v2622, 2147483648
    %v2843 = vmul.f32 %v2842, 1.442695
    %v2844 = vpow.pop %v2843
    %v2845 = vadd.f32 %v2844, 1.0
    %v2846 = vrcp.pop %v2845
    %v2847 = vmul.f32 1.0, %v2846
    %v2848 = vmul.f32 %v2841, %v2693
    %v2849 = vadd.f32 %v2691, %v2848
    %v2850 = vtanh.pop %v2849
    %v2851 = vsub.f32 1.0, %v2847
    %v2852 = vmul.f32 %v2851, %v2850
    %v2853 = vmul.f32 %v2847, %v2512
    %v2854 = vadd.f32 %v2852, %v2853
    %v2856 = vrot.slane %v2762, 1
    %v2858 = vadd.f32 %v142, %v2856
    %v2859 = vxor.u32 %v2858, 2147483648
    %v2860 = vmul.f32 %v2859, 1.442695
    %v2861 = vpow.pop %v2860
    %v2862 = vadd.f32 %v2861, 1.0
    %v2863 = vrcp.pop %v2862
    %v2864 = vmul.f32 1.0, %v2863
    %v2866 = vrot.slane %v2764, 1
    %v2868 = vadd.f32 %v144, %v2866
    %v2869 = vxor.u32 %v2868, 2147483648
    %v2870 = vmul.f32 %v2869, 1.442695
    %v2871 = vpow.pop %v2870
    %v2872 = vadd.f32 %v2871, 1.0
    %v2873 = vrcp.pop %v2872
    %v2874 = vmul.f32 1.0, %v2873
    %v2875 = vadd.f32 %v2833, %v216
    %v2877 = vrot.slane %v2875, 1
    %v2879 = vmul.f32 %v2864, %v2877
    %v2880 = vadd.f32 %v213, %v2879
    %v2881 = vtanh.pop %v2880
    %v2882 = vsub.f32 1.0, %v2874
    %v2883 = vmul.f32 %v2882, %v2881
    %v2884 = vrot.slane %v2545, 7
    %v2886 = vmul.f32 %v2874, %v2884
    %v2887 = vadd.f32 %v2883, %v2886
    %v2889 = vrot.slane %v2854, 1
    %v2891 = vrot.slane %v2887, 7
    %v2892 = vrot.slane %v2889, 7
    %2895 = vmatprep.subr.mxu0 %v323
    %2896 = vmatpush1.msra.mxu0 %v322
    %2897 = vmatprep.subr.mxu0 %v316
    %2898 = vmatpush1.msra.mxu0 %v315
    %2899 = vmatprep.subr.mxu0 %v309
    %2900 = vmatpush1.msra.mxu0 %v308
    %2901 = vmatprep.subr.mxu0 %v302
    %2902 = vmatpush1.msra.mxu0 %v301
    %2903 = vmatprep.subr.mxu0 %v295
    %2904 = vmatpush1.msra.mxu0 %v294
    %2905 = vmatprep.subr.mxu0 %v288
    %2906 = vmatpush1.msra.mxu0 %v287
    %2907 = vmatprep.subr.mxu0 %v281
    %2908 = vmatpush1.msra.mxu0 %v280
    %2909 = vmatprep.subr.mxu0 %v274
    %2910 = vmatpush1.msra.mxu0 %v273
    %2911 = vmatprep.subr.mxu0 %v267
    %2912 = vmatpush1.msra.mxu0 %v266
    %2913 = vmatprep.subr.mxu0 %v260
    %2914 = vmatpush1.msra.mxu0 %v259
    %2915 = vmatprep.subr.mxu0 %v253
    %2916 = vmatpush1.msra.mxu0 %v252
    %2917 = vmatprep.subr.mxu0 %v246
    %2918 = vmatpush1.msra.mxu0 %v245
    %2919 = vmatprep.subr.mxu0 %v239
    %2920 = vmatpush1.msra.mxu0 %v238
    %2921 = vmatprep.subr.mxu0 %v232
    %2922 = vmatpush1.msra.mxu0 %v231
    %2923 = vmatprep.subr.mxu0 %v225
    %2924 = vmatpush1.msra.mxu0 %v224
    %2925 = vmatprep.subr.mxu0 %v218
    %2926 = vmatpush1.msra.mxu0 %v217
    %2927 = vmatprep.subr.mxu0 %v435
    %2928 = vmatpush2.msra.mxu0 %v434
    %2929 = vmatprep.subr.mxu0 %v428
    %2930 = vmatpush2.msra.mxu0 %v427
    %2931 = vmatprep.subr.mxu0 %v421
    %2932 = vmatpush2.msra.mxu0 %v420
    %2933 = vmatprep.subr.mxu0 %v414
    %2934 = vmatpush2.msra.mxu0 %v413
    %2935 = vmatprep.subr.mxu0 %v407
    %2936 = vmatpush2.msra.mxu0 %v406
    %2937 = vmatprep.subr.mxu0 %v400
    %2938 = vmatpush2.msra.mxu0 %v399
    %2939 = vmatprep.subr.mxu0 %v393
    %2940 = vmatpush2.msra.mxu0 %v392
    %2941 = vmatprep.subr.mxu0 %v386
    %2942 = vmatpush2.msra.mxu0 %v385
    %2943 = vmatprep.subr.mxu0 %v379
    %2944 = vmatpush2.msra.mxu0 %v378
    %2945 = vmatprep.subr.mxu0 %v372
    %2946 = vmatpush2.msra.mxu0 %v371
    %2947 = vmatprep.subr.mxu0 %v365
    %2948 = vmatpush2.msra.mxu0 %v364
    %2949 = vmatprep.subr.mxu0 %v358
    %2950 = vmatpush2.msra.mxu0 %v357
    %2951 = vmatprep.subr.mxu0 %v351
    %2952 = vmatpush2.msra.mxu0 %v350
    %2953 = vmatprep.subr.mxu0 %v344
    %2954 = vmatpush2.msra.mxu0 %v343
    %2955 = vmatprep.subr.mxu0 %v337
    %2956 = vmatpush2.msra.mxu0 %v336
    %2957 = vmatprep.subr.mxu0 %v330
    %2958 = vmatpush2.msra.mxu0 %v329
    %2959 = vmatprep.mubr.f32.mxu0 %v2892
    %2960 = vmatmul.mubr.f32.gmra.mxu0 %v2891
    %v2961 = vpop.f32.mrf.mxu0
    %v2962 = vadd.f32 %v468, %v2961
    %v2963 = vpop.f32.mrf.mxu0
    %v2964 = vadd.f32 %v472, %v2963
    %2965 = vdwg.mxu0
    %2966 = vmatprep.subr.mxu0 %v325
    %2967 = vmatpush1.msra.mxu0 %v324
    %2968 = vmatprep.subr.mxu0 %v318
    %2969 = vmatpush1.msra.mxu0 %v317
    %2970 = vmatprep.subr.mxu0 %v311
    %2971 = vmatpush1.msra.mxu0 %v310
    %2972 = vmatprep.subr.mxu0 %v304
    %2973 = vmatpush1.msra.mxu0 %v303
    %2974 = vmatprep.subr.mxu0 %v297
    %2975 = vmatpush1.msra.mxu0 %v296
    %2976 = vmatprep.subr.mxu0 %v290
    %2977 = vmatpush1.msra.mxu0 %v289
    %2978 = vmatprep.subr.mxu0 %v283
    %2979 = vmatpush1.msra.mxu0 %v282
    %2980 = vmatprep.subr.mxu0 %v276
    %2981 = vmatpush1.msra.mxu0 %v275
    %2982 = vmatprep.subr.mxu0 %v269
    %2983 = vmatpush1.msra.mxu0 %v268
    %2984 = vmatprep.subr.mxu0 %v262
    %2985 = vmatpush1.msra.mxu0 %v261
    %2986 = vmatprep.subr.mxu0 %v255
    %2987 = vmatpush1.msra.mxu0 %v254
    %2988 = vmatprep.subr.mxu0 %v248
    %2989 = vmatpush1.msra.mxu0 %v247
    %2990 = vmatprep.subr.mxu0 %v241
    %2991 = vmatpush1.msra.mxu0 %v240
    %2992 = vmatprep.subr.mxu0 %v234
    %2993 = vmatpush1.msra.mxu0 %v233
    %2994 = vmatprep.subr.mxu0 %v227
    %2995 = vmatpush1.msra.mxu0 %v226
    %2996 = vmatprep.subr.mxu0 %v220
    %2997 = vmatpush1.msra.mxu0 %v219
    %2998 = vmatprep.subr.mxu0 %v437
    %2999 = vmatpush2.msra.mxu0 %v436
    %3000 = vmatprep.subr.mxu0 %v430
    %3001 = vmatpush2.msra.mxu0 %v429
    %3002 = vmatprep.subr.mxu0 %v423
    %3003 = vmatpush2.msra.mxu0 %v422
    %3004 = vmatprep.subr.mxu0 %v416
    %3005 = vmatpush2.msra.mxu0 %v415
    %3006 = vmatprep.subr.mxu0 %v409
    %3007 = vmatpush2.msra.mxu0 %v408
    %3008 = vmatprep.subr.mxu0 %v402
    %3009 = vmatpush2.msra.mxu0 %v401
    %3010 = vmatprep.subr.mxu0 %v395
    %3011 = vmatpush2.msra.mxu0 %v394
    %3012 = vmatprep.subr.mxu0 %v388
    %3013 = vmatpush2.msra.mxu0 %v387
    %3014 = vmatprep.subr.mxu0 %v381
    %3015 = vmatpush2.msra.mxu0 %v380
    %3016 = vmatprep.subr.mxu0 %v374
    %3017 = vmatpush2.msra.mxu0 %v373
    %3018 = vmatprep.subr.mxu0 %v367
    %3019 = vmatpush2.msra.mxu0 %v366
    %3020 = vmatprep.subr.mxu0 %v360
    %3021 = vmatpush2.msra.mxu0 %v359
    %3022 = vmatprep.subr.mxu0 %v353
    %3023 = vmatpush2.msra.mxu0 %v352
    %3024 = vmatprep.subr.mxu0 %v346
    %3025 = vmatpush2.msra.mxu0 %v345
    %3026 = vmatprep.subr.mxu0 %v339
    %3027 = vmatpush2.msra.mxu0 %v338
    %3028 = vmatprep.subr.mxu0 %v332
    %3029 = vmatpush2.msra.mxu0 %v331
    %3030 = vmatprep.mubr.f32.mxu0 %v2892
    %3031 = vmatmul.mubr.f32.gmra.mxu0 %v2891
    %v3032 = vpop.f32.mrf.mxu0
    %v3033 = vadd.f32 %v476, %v3032
    %v3034 = vpop.f32.mrf.mxu0
    %v3035 = vadd.f32 %v480, %v3034
    %3036 = vdwg.mxu0
    %v3037 = vxor.u32 %v2962, 2147483648
    %v3038 = vmul.f32 %v3037, 1.442695
    %v3039 = vpow.pop %v3038
    %v3040 = vadd.f32 %v3039, 1.0
    %v3041 = vrcp.pop %v3040
    %v3042 = vmul.f32 1.0, %v3041
    %v3043 = vxor.u32 %v2964, 2147483648
    %v3044 = vmul.f32 %v3043, 1.442695
    %v3045 = vpow.pop %v3044
    %v3046 = vadd.f32 %v3045, 1.0
    %v3047 = vrcp.pop %v3046
    %v3048 = vmul.f32 1.0, %v3047
    %v3049 = vmul.f32 %v3042, %v3035
    %v3050 = vadd.f32 %v3033, %v3049
    %v3051 = vtanh.pop %v3050
    %v3052 = vsub.f32 1.0, %v3048
    %v3053 = vmul.f32 %v3052, %v3051
    %v3054 = vmul.f32 %v3048, %v2854
    %v3055 = vadd.f32 %v3053, %v3054
    %v3056 = vld [vmem:[%s6] sm:$0xff]
    %v3057 = vld [vmem:[%s6 + $0x8] sm:$0xff]
    %v3058 = vld [vmem:[%s6 + $0x10] sm:$0xff]
    %v3059 = vld [vmem:[%s6 + $0x18] sm:$0xff]
    %v3060 = vld [vmem:[%s6 + $0x20] sm:$0xff]
    %v3061 = vld [vmem:[%s6 + $0x28] sm:$0xff]
    %v3062 = vld [vmem:[%s6 + $0x30] sm:$0xff]
    %v3063 = vld [vmem:[%s6 + $0x38] sm:$0xff]
    %v3064 = vld [vmem:[%s6 + $0x40] sm:$0xff]
    %v3065 = vld [vmem:[%s6 + $0x48] sm:$0xff]
    %v3066 = vld [vmem:[%s6 + $0x50] sm:$0xff]
    %v3067 = vld [vmem:[%s6 + $0x58] sm:$0xff]
    %v3068 = vld [vmem:[%s6 + $0x60] sm:$0xff]
    %v3069 = vld [vmem:[%s6 + $0x68] sm:$0xff]
    %v3070 = vld [vmem:[%s6 + $0x70] sm:$0xff]
    %v3071 = vld [vmem:[%s6 + $0x78] sm:$0xff]
    %v3072 = vld [vmem:[#allocation2] sm:$0x1]
    %3073 = vmatprep.subr.mxu0 0.0
    %3074 = vmatpush1.msra.mxu0 %v3071
    %3075 = vmatprep.subr.mxu0 0.0
    %3076 = vmatpush1.msra.mxu0 %v3070
    %3077 = vmatprep.subr.mxu0 0.0
    %3078 = vmatpush1.msra.mxu0 %v3069
    %3079 = vmatprep.subr.mxu0 0.0
    %3080 = vmatpush1.msra.mxu0 %v3068
    %3081 = vmatprep.subr.mxu0 0.0
    %3082 = vmatpush1.msra.mxu0 %v3067
    %3083 = vmatprep.subr.mxu0 0.0
    %3084 = vmatpush1.msra.mxu0 %v3066
    %3085 = vmatprep.subr.mxu0 0.0
    %3086 = vmatpush1.msra.mxu0 %v3065
    %3087 = vmatprep.subr.mxu0 0.0
    %3088 = vmatpush1.msra.mxu0 %v3064
    %3089 = vmatprep.subr.mxu0 0.0
    %3090 = vmatpush1.msra.mxu0 %v3063
    %3091 = vmatprep.subr.mxu0 0.0
    %3092 = vmatpush1.msra.mxu0 %v3062
    %3093 = vmatprep.subr.mxu0 0.0
    %3094 = vmatpush1.msra.mxu0 %v3061
    %3095 = vmatprep.subr.mxu0 0.0
    %3096 = vmatpush1.msra.mxu0 %v3060
    %3097 = vmatprep.subr.mxu0 0.0
    %3098 = vmatpush1.msra.mxu0 %v3059
    %3099 = vmatprep.subr.mxu0 0.0
    %3100 = vmatpush1.msra.mxu0 %v3058
    %3101 = vmatprep.subr.mxu0 0.0
    %3102 = vmatpush1.msra.mxu0 %v3057
    %3103 = vmatprep.subr.mxu0 0.0
    %3104 = vmatpush1.msra.mxu0 %v3056
    %3105 = vmatprep.subr.mxu0 0.0
    %3106 = vmatpush2.msra.mxu0 0.0
    %3107 = vmatprep.subr.mxu0 0.0
    %3108 = vmatpush2.msra.mxu0 0.0
    %3109 = vmatprep.subr.mxu0 0.0
    %3110 = vmatpush2.msra.mxu0 0.0
    %3111 = vmatprep.subr.mxu0 0.0
    %3112 = vmatpush2.msra.mxu0 0.0
    %3113 = vmatprep.subr.mxu0 0.0
    %3114 = vmatpush2.msra.mxu0 0.0
    %3115 = vmatprep.subr.mxu0 0.0
    %3116 = vmatpush2.msra.mxu0 0.0
    %3117 = vmatprep.subr.mxu0 0.0
    %3118 = vmatpush2.msra.mxu0 0.0
    %3119 = vmatprep.subr.mxu0 0.0
    %3120 = vmatpush2.msra.mxu0 0.0
    %3121 = vmatprep.subr.mxu0 0.0
    %3122 = vmatpush2.msra.mxu0 0.0
    %3123 = vmatprep.subr.mxu0 0.0
    %3124 = vmatpush2.msra.mxu0 0.0
    %3125 = vmatprep.subr.mxu0 0.0
    %3126 = vmatpush2.msra.mxu0 0.0
    %3127 = vmatprep.subr.mxu0 0.0
    %3128 = vmatpush2.msra.mxu0 0.0
    %3129 = vmatprep.subr.mxu0 0.0
    %3130 = vmatpush2.msra.mxu0 0.0
    %3131 = vmatprep.subr.mxu0 0.0
    %3132 = vmatpush2.msra.mxu0 0.0
    %3133 = vmatprep.subr.mxu0 0.0
    %3134 = vmatpush2.msra.mxu0 0.0
    %3135 = vmatprep.subr.mxu0 0.0
    %3136 = vmatpush2.msra.mxu0 0.0
    %3137 = vmatprep.mubr.f32.mxu0 0.0
    %3138 = vmatmul.mubr.f32.gmra.mxu0 %v3055
    %v3139 = vpop.f32.mrf.mxu0
    %v3140 = vadd.f32 %v3072, %v3139
    %v3141 = vpop.f32.mrf.mxu0
    %3142 = vdwg.mxu0
    %vm3143 = vcmask 0
    %3144 = vst.msk [vmem:[#allocation3] sm:$0x1] %vm3143, %v3140
    // Predicated region
    $region34: #{gru_forward.1} parent=1 // pred_check
      _
    $region35: #{gru_forward.1} parent=1 // pred_check_branch
      %3146 = sbr.rel (0) target = $region37
    $region36: #{gru_forward.1} parent=1 // pred_region
      %s3148 = ssub.s32 16, 16
      %3149 = vsyncadd [#allocation4], %s3148
      %s3151 = sshll.u32 [#allocation3], 4
      %s3152 = int_to_ptr.vmem [resolvable:$true] %s3151
      %3154 = dma.vmem_to_hbm [thread:$0]  %s3152, 16, %s8, [#allocation4]
    $region37: #{gru_forward.1} parent=1 // pred_fallthru
      _
    // Predicated region
    $region38: #{gru_forward.1} parent=1 // pred_check
      _
    $region39: #{gru_forward.1} parent=1 // pred_check_branch
      %3156 = sbr.rel (0) target = $region41
    $region40: #{gru_forward.1} parent=1 // pred_region
      %3157 = dma.done [#allocation4], 16
    $region41: #{gru_forward.1} parent=1 // pred_fallthru
      _
    %3158 = vsyncpa [#allocation4], 1

</llo_original>
